<compile_context>
chip_gen: v5e
topology: v5e:2x2
jax: 0.10.0
libtpu: 0.0.40
codegen_flags: <defaults>
</compile_context>

<pallas_src>
import jax
import jax.numpy as jnp
from jax.experimental import pallas as pl
from jax.experimental.pallas import tpu as pltpu

L0 = 72          # only supported indim (matches the torch module)


# ----------------------------------------------------------------------------
# Fused kernel: conv1 -> pool -> conv2 -> pool -> conv3 -> pool -> fc1/2/3
# ----------------------------------------------------------------------------
def fused_net_kernel(x_ref, w1_ref, b1_ref, w2_ref, b2_ref, w3_ref, b3_ref,
                     fw1_hbm, fb1_ref, fw2_ref, fb2_ref, fw3_ref, fb3_ref,
                     o_ref, fw1_vmem, dma_sem):
    f32 = jnp.float32
    Bp = x_ref.shape[0] // L0     # padded batch rows per position (multiple of 8)
    B = o_ref.shape[0]            # true batch size

    # Kick off the fc1-weight DMA (HBM -> VMEM) immediately; it overlaps with
    # the entire conv stack and is only waited on right before the fc1 dot.
    fc1_copy = pltpu.make_async_copy(fw1_hbm, fw1_vmem, dma_sem)
    fc1_copy.start()

    def shift_prev(v):
        # position l-1 (zeros at l == 0).  Rows are position-major, so this is
        # a sublane-tile-aligned Bp-row block shift; no per-example masking.
        zero = jnp.zeros((Bp, v.shape[1]), v.dtype)
        return jnp.concatenate([zero, v[:-Bp, :]], axis=0)

    def shift_next(v):
        # position l+1 (zeros at l == L-1)
        zero = jnp.zeros((Bp, v.shape[1]), v.dtype)
        return jnp.concatenate([v[Bp:, :], zero], axis=0)

    def maxpool2(v, n_pos):
        # maxpool(k=2, s=2) over positions: max of two aligned Bp-row blocks.
        c = v.shape[1]
        v3 = v.reshape(n_pos // 2, 2 * Bp, c)
        return jnp.maximum(v3[:, :Bp, :], v3[:, Bp:, :]).reshape((n_pos // 2) * Bp, c)

    # ---- conv1 (1->32, k=3, p=1) + ReLU : three broadcast FMAs (VPU, f32) ----
    x = x_ref[...]                                   # (72*Bp, 1), row = l*Bp + b
    w1 = w1_ref[...]                                 # (3, 32): taps [prev, center, next]
    y1 = (shift_prev(x) * w1[0:1, :] + x * w1[1:2, :]
          + shift_next(x) * w1[2:3, :] + b1_ref[...])
    y1 = jnp.maximum(y1, 0.0)                        # (72*Bp, 32)

    # ---- pool1 -> conv2 (32->64) + ReLU : one merged im2col MXU dot ----
    p1 = maxpool2(y1, L0)                                                 # (36*Bp, 32)
    im2 = jnp.concatenate([shift_prev(p1), p1, shift_next(p1)], axis=1)   # (36*Bp, 96)
    y2 = jnp.dot(im2, w2_ref[...], preferred_element_type=f32) + b2_ref[...]
    y2 = jnp.maximum(y2, 0.0)                                             # (36*Bp, 64)

    # ---- pool2 -> conv3 (64->128) + ReLU ----
    p2 = maxpool2(y2, 36)                                                 # (18*Bp, 64)
    im3 = jnp.concatenate([shift_prev(p2), p2, shift_next(p2)], axis=1)   # (18*Bp, 192)
    y3 = jnp.dot(im3, w3_ref[...], preferred_element_type=f32) + b3_ref[...]
    y3 = jnp.maximum(y3, 0.0)                                             # (18*Bp, 128)

    # ---- pool3 fused with the flatten (fc1 weight rows pre-permuted) ----
    p3 = maxpool2(y3, 18)                            # (9*Bp, 128)
    # Each pooled position is a vreg-aligned (Bp, 128) block; concatenating at
    # 128-lane offsets is pure vreg relabeling (no shuffles, no scratch).
    xf = jnp.concatenate([p3[p * Bp:(p + 1) * Bp, :] for p in range(9)], axis=1)
    # xf: (Bp, 1152), (pos, chan)-major

    # ---- MLP head: fc1 -> ReLU -> fc2 -> ReLU -> fc3 ----
    fc1_copy.wait()                                  # fc1 weights now in VMEM
    h = jnp.dot(xf.astype(jnp.bfloat16), fw1_vmem[...],
                preferred_element_type=f32) + fb1_ref[...]
    h = jnp.maximum(h, 0.0)
    h = jnp.dot(h.astype(jnp.bfloat16), fw2_ref[...],
                preferred_element_type=f32) + fb2_ref[...]
    h = jnp.maximum(h, 0.0)
    out = jnp.dot(h, fw3_ref[...], preferred_element_type=f32) + fb3_ref[...]
    o_ref[...] = out[:B, :]                          # drop batch-padding rows


# ----------------------------------------------------------------------------
# Wrapper: single fused pallas_call, everything VMEM-resident
# ----------------------------------------------------------------------------
@jax.jit
def net_forward(x, params):
    """x: (B, 72) float32 — same input as the PyTorch module (pre-unsqueeze)."""
    (w1, b1, w2, b2, w3, b3, fw1, fb1, fw2, fb2, fw3, fb3) = params
    B, indim = x.shape
    if indim != L0:
        raise ValueError("Unsupported input dimension. Supported dimensions are 72.")

    # Host-side glue (tiny): torch's unsqueeze(1) as position-major,
    # batch-padded channels-last:  row l*Bp + b  holds  x[b, l].
    Bp = ((B + 7) // 8) * 8
    x2 = jnp.pad(x, ((0, Bp - B), (0, 0))).T.reshape(L0 * Bp, 1)

    vmem = pltpu.MemorySpace.VMEM
    flops = 2 * B * (L0 * 3 * 32 + 36 * 96 * 64 + 18 * 192 * 128
                     + 1152 * 256 + 256 * 64 + 64 * 2)
    bytes_accessed = (sum(int(p.size) * p.dtype.itemsize for p in params)
                      + int(x2.size) * x2.dtype.itemsize + B * 2 * 4)

    return pl.pallas_call(
        fused_net_kernel,
        out_shape=jax.ShapeDtypeStruct((B, 2), jnp.float32),
        in_specs=([pl.BlockSpec(memory_space=vmem)] * 7
                  + [pl.BlockSpec(memory_space=pl.ANY)]     # fc1 weight stays in HBM
                  + [pl.BlockSpec(memory_space=vmem)] * 5),
        out_specs=pl.BlockSpec(memory_space=vmem),
        scratch_shapes=[
            pltpu.VMEM((9 * 128, 256), jnp.bfloat16),        # fc1 weight landing buffer
            pltpu.SemaphoreType.DMA,                         # its completion semaphore
        ],
        cost_estimate=pl.CostEstimate(flops=flops, transcendentals=0,
                                      bytes_accessed=bytes_accessed),
    )(x2, w1, b1, w2, b2, w3, b3, fw1, fb1, fw2, fb2, fw3, fb3)


# ----------------------------------------------------------------------------
# Parameters: torch-layout init + one-time repack into kernel layout
# ----------------------------------------------------------------------------
def init_torch_params(key):
    ks = jax.random.split(key, 12)

    def w(k, shape, scale):
        return scale * jax.random.normal(k, shape, jnp.float32)

    cw1 = w(ks[0], (32, 1, 3), 0.1);      cb1 = w(ks[1], (32,), 0.05)
    cw2 = w(ks[2], (64, 32, 3), 0.1);     cb2 = w(ks[3], (64,), 0.05)
    cw3 = w(ks[4], (128, 64, 3), 0.05);   cb3 = w(ks[5], (128,), 0.05)
    fw1 = w(ks[6], (256, 128 * 9), 0.03); fb1 = w(ks[7], (256,), 0.05)
    fw2 = w(ks[8], (64, 256), 0.05);      fb2 = w(ks[9], (64,), 0.05)
    fw3 = w(ks[10], (2, 64), 0.05);       fb3 = w(ks[11], (2,), 0.05)
    return (cw1, cb1, cw2, cb2, cw3, cb3, fw1, fb1, fw2, fb2, fw3, fb3)


def torch_to_kernel_params(tp):
    (cw1, cb1, cw2, cb2, cw3, cb3, fw1, fb1, fw2, fb2, fw3, fb3) = tp

    def conv_w(wt):      # torch (Cout, Cin, 3) -> kernel (3*Cin, Cout), tap-major rows
        cout, cin, k = wt.shape
        return jnp.transpose(wt, (2, 1, 0)).reshape(k * cin, cout)

    def row(b):          # (n,) -> (1, n)
        return b.reshape(1, -1)

    # fc1: torch flatten is channel-major (j = c*9 + p); the kernel flattens
    # (pos, chan)-major, so permute fw1's rows once here.  fc1/fc2 weights are
    # stored bf16 (MXU-native); convs/biases stay f32 (v5e VPU has no bf16).
    fw1_k = jnp.transpose(fw1.reshape(256, 128, 9), (2, 1, 0)).reshape(9 * 128, 256)

    return (conv_w(cw1), row(cb1), conv_w(cw2), row(cb2), conv_w(cw3), row(cb3),
            fw1_k.astype(jnp.bfloat16), row(fb1),
            jnp.transpose(fw2).astype(jnp.bfloat16), row(fb2),
            jnp.transpose(fw3), row(fb3))


# ----------------------------------------------------------------------------
# Pure-JAX reference (mirrors the torch module exactly, torch weight layout)
# ----------------------------------------------------------------------------
def reference_forward(x, tp):
    (cw1, cb1, cw2, cb2, cw3, cb3, fw1, fb1, fw2, fb2, fw3, fb3) = tp

    def block(h, wt, bt):
        Bn, cin, L = h.shape
        hp = jnp.pad(h, ((0, 0), (0, 0), (1, 1)))
        cols = jnp.stack([hp[:, :, k:k + L] for k in range(3)], axis=-1)  # (B,Cin,L,3)
        y = jnp.einsum("bclk,ock->bol", cols, wt,
                       precision="highest") + bt[None, :, None]
        y = jnp.maximum(y, 0.0)
        return y.reshape(Bn, -1, L // 2, 2).max(axis=-1)

    h = x[:, None, :]                          # (B, 1, 72) NCL
    h = block(h, cw1, cb1)
    h = block(h, cw2, cb2)
    h = block(h, cw3, cb3)
    h = h.reshape(h.shape[0], -1)              # channel-major flatten == torch .view
    h = jnp.maximum(jnp.dot(h, fw1.T, precision="highest") + fb1, 0.0)
    h = jnp.maximum(jnp.dot(h, fw2.T, precision="highest") + fb2, 0.0)
    return jnp.dot(h, fw3.T, precision="highest") + fb3


# ----------------------------------------------------------------------------
if __name__ == "__main__":
    key = jax.random.PRNGKey(0)
    k_params, k_x = jax.random.split(key)

    torch_params = init_torch_params(k_params)
    kernel_params = torch_to_kernel_params(torch_params)

    B, INDIM = 4, 72
    x = jax.random.normal(k_x, (B, INDIM), jnp.float32)

    out = jax.block_until_ready(net_forward(x, kernel_params))
    assert out.shape == (B, 2) and out.dtype == jnp.float32

    ref = jax.block_until_ready(reference_forward(x, torch_params))
    # fc1/fc2 weights are fed to the MXU in bf16 (f32 accumulate), so allow a
    # slightly looser tolerance than a pure-f32 path.
    assert jnp.allclose(out, ref, atol=5e-3, rtol=5e-3), \
        f"Pallas kernel mismatch vs reference (max abs err {jnp.max(jnp.abs(out - ref))})"

    print("KERNEL_OK")
</pallas_src>

<mosaic_0001>
module attributes {stable_mosaic.version = 11 : i64} {
  func.func @fused_net_kernel(%arg0: memref<576x1xf32, #tpu.memory_space<vmem>>, %arg1: memref<3x32xf32, #tpu.memory_space<vmem>>, %arg2: memref<1x32xf32, #tpu.memory_space<vmem>>, %arg3: memref<96x64xf32, #tpu.memory_space<vmem>>, %arg4: memref<1x64xf32, #tpu.memory_space<vmem>>, %arg5: memref<192x128xf32, #tpu.memory_space<vmem>>, %arg6: memref<1x128xf32, #tpu.memory_space<vmem>>, %arg7: memref<1152x256xbf16, #tpu.memory_space<any>>, %arg8: memref<1x256xf32, #tpu.memory_space<vmem>>, %arg9: memref<256x64xbf16, #tpu.memory_space<vmem>>, %arg10: memref<1x64xf32, #tpu.memory_space<vmem>>, %arg11: memref<64x2xf32, #tpu.memory_space<vmem>>, %arg12: memref<1x2xf32, #tpu.memory_space<vmem>>, %arg13: memref<4x2xf32, #tpu.memory_space<vmem>>, %arg14: memref<1152x256xbf16, #tpu.memory_space<vmem>>, %arg15: memref<!tpu.dma_semaphore, #tpu.memory_space<semaphore_mem>>) attributes {dimension_semantics = [], scalar_prefetch = 0 : i64, scratch_operands = 2 : i64, tpu.core_type = #tpu.core_type<tc>} {
    tpu.enqueue_dma source(%arg7 : memref<1152x256xbf16, #tpu.memory_space<any>>) target(%arg14 : memref<1152x256xbf16, #tpu.memory_space<vmem>>) target_semaphore(%arg15 : memref<!tpu.dma_semaphore, #tpu.memory_space<semaphore_mem>>)
    %c0 = arith.constant 0 : index
    %c0_0 = arith.constant 0 : index
    %0 = vector.load %arg0[%c0, %c0_0] : memref<576x1xf32, #tpu.memory_space<vmem>>, vector<576x1xf32>
    %c0_1 = arith.constant 0 : index
    %c0_2 = arith.constant 0 : index
    %1 = vector.load %arg1[%c0_1, %c0_2] : memref<3x32xf32, #tpu.memory_space<vmem>>, vector<3x32xf32>
    %cst = arith.constant 0.000000e+00 : f32
    %2 = vector.broadcast %cst : f32 to vector<8x1xf32>
    %3 = vector.extract_strided_slice %0 {offsets = [0, 0], sizes = [568, 1], strides = [1, 1]} : vector<576x1xf32> to vector<568x1xf32>
    %4 = tpu.concatenate %2, %3 in 0 : vector<8x1xf32>, vector<568x1xf32> -> vector<576x1xf32>
    %5 = vector.extract_strided_slice %1 {offsets = [0, 0], sizes = [1, 32], strides = [1, 1]} : vector<3x32xf32> to vector<1x32xf32>
    %6 = vector.broadcast %4 : vector<576x1xf32> to vector<576x32xf32>
    %7 = vector.broadcast %5 : vector<1x32xf32> to vector<576x32xf32>
    %8 = arith.mulf %6, %7 : vector<576x32xf32>
    %9 = vector.extract_strided_slice %1 {offsets = [1, 0], sizes = [1, 32], strides = [1, 1]} : vector<3x32xf32> to vector<1x32xf32>
    %10 = vector.broadcast %0 : vector<576x1xf32> to vector<576x32xf32>
    %11 = vector.broadcast %9 : vector<1x32xf32> to vector<576x32xf32>
    %12 = arith.mulf %10, %11 : vector<576x32xf32>
    %13 = arith.addf %8, %12 : vector<576x32xf32>
    %cst_3 = arith.constant 0.000000e+00 : f32
    %14 = vector.broadcast %cst_3 : f32 to vector<8x1xf32>
    %15 = vector.extract_strided_slice %0 {offsets = [8, 0], sizes = [568, 1], strides = [1, 1]} : vector<576x1xf32> to vector<568x1xf32>
    %16 = tpu.concatenate %15, %14 in 0 : vector<568x1xf32>, vector<8x1xf32> -> vector<576x1xf32>
    %17 = vector.extract_strided_slice %1 {offsets = [2, 0], sizes = [1, 32], strides = [1, 1]} : vector<3x32xf32> to vector<1x32xf32>
    %18 = vector.broadcast %16 : vector<576x1xf32> to vector<576x32xf32>
    %19 = vector.broadcast %17 : vector<1x32xf32> to vector<576x32xf32>
    %20 = arith.mulf %18, %19 : vector<576x32xf32>
    %21 = arith.addf %13, %20 : vector<576x32xf32>
    %c0_4 = arith.constant 0 : index
    %c0_5 = arith.constant 0 : index
    %22 = vector.load %arg2[%c0_4, %c0_5] : memref<1x32xf32, #tpu.memory_space<vmem>>, vector<1x32xf32>
    %23 = vector.broadcast %22 : vector<1x32xf32> to vector<576x32xf32>
    %24 = arith.addf %21, %23 : vector<576x32xf32>
    %cst_6 = arith.constant 0.000000e+00 : f32
    %25 = vector.broadcast %cst_6 : f32 to vector<576x32xf32>
    %26 = arith.maximumf %24, %25 : vector<576x32xf32>
    %27 = vector.shape_cast %26 : vector<576x32xf32> to vector<36x16x32xf32>
    %28 = vector.extract_strided_slice %27 {offsets = [0, 0, 0], sizes = [36, 8, 32], strides = [1, 1, 1]} : vector<36x16x32xf32> to vector<36x8x32xf32>
    %29 = vector.extract_strided_slice %27 {offsets = [0, 8, 0], sizes = [36, 8, 32], strides = [1, 1, 1]} : vector<36x16x32xf32> to vector<36x8x32xf32>
    %30 = arith.maximumf %28, %29 : vector<36x8x32xf32>
    %31 = vector.shape_cast %30 : vector<36x8x32xf32> to vector<288x32xf32>
    %cst_7 = arith.constant 0.000000e+00 : f32
    %32 = vector.broadcast %cst_7 : f32 to vector<8x32xf32>
    %33 = vector.extract_strided_slice %31 {offsets = [0, 0], sizes = [280, 32], strides = [1, 1]} : vector<288x32xf32> to vector<280x32xf32>
    %34 = tpu.concatenate %32, %33 in 0 : vector<8x32xf32>, vector<280x32xf32> -> vector<288x32xf32>
    %cst_8 = arith.constant 0.000000e+00 : f32
    %35 = vector.broadcast %cst_8 : f32 to vector<8x32xf32>
    %36 = vector.extract_strided_slice %31 {offsets = [8, 0], sizes = [280, 32], strides = [1, 1]} : vector<288x32xf32> to vector<280x32xf32>
    %37 = tpu.concatenate %36, %35 in 0 : vector<280x32xf32>, vector<8x32xf32> -> vector<288x32xf32>
    %38 = tpu.concatenate %34, %31, %37 in 1 : vector<288x32xf32>, vector<288x32xf32>, vector<288x32xf32> -> vector<288x96xf32>
    %c0_9 = arith.constant 0 : index
    %c0_10 = arith.constant 0 : index
    %39 = vector.load %arg3[%c0_9, %c0_10] : memref<96x64xf32, #tpu.memory_space<vmem>>, vector<96x64xf32>
    %cst_11 = arith.constant dense<0.000000e+00> : vector<288x64xf32>
    %40 = tpu.matmul %38, %39, %cst_11 {dimension_numbers = #tpu.dot_dimension_numbers<[1], [0], [0], [1], [0, 0, 1, 1], [], []>} : vector<288x96xf32>, vector<96x64xf32>, vector<288x64xf32> -> vector<288x64xf32>
    %c0_12 = arith.constant 0 : index
    %c0_13 = arith.constant 0 : index
    %41 = vector.load %arg4[%c0_12, %c0_13] : memref<1x64xf32, #tpu.memory_space<vmem>>, vector<1x64xf32>
    %42 = vector.broadcast %41 : vector<1x64xf32> to vector<288x64xf32>
    %43 = arith.addf %40, %42 : vector<288x64xf32>
    %cst_14 = arith.constant 0.000000e+00 : f32
    %44 = vector.broadcast %cst_14 : f32 to vector<288x64xf32>
    %45 = arith.maximumf %43, %44 : vector<288x64xf32>
    %46 = vector.shape_cast %45 : vector<288x64xf32> to vector<18x16x64xf32>
    %47 = vector.extract_strided_slice %46 {offsets = [0, 0, 0], sizes = [18, 8, 64], strides = [1, 1, 1]} : vector<18x16x64xf32> to vector<18x8x64xf32>
    %48 = vector.extract_strided_slice %46 {offsets = [0, 8, 0], sizes = [18, 8, 64], strides = [1, 1, 1]} : vector<18x16x64xf32> to vector<18x8x64xf32>
    %49 = arith.maximumf %47, %48 : vector<18x8x64xf32>
    %50 = vector.shape_cast %49 : vector<18x8x64xf32> to vector<144x64xf32>
    %cst_15 = arith.constant 0.000000e+00 : f32
    %51 = vector.broadcast %cst_15 : f32 to vector<8x64xf32>
    %52 = vector.extract_strided_slice %50 {offsets = [0, 0], sizes = [136, 64], strides = [1, 1]} : vector<144x64xf32> to vector<136x64xf32>
    %53 = tpu.concatenate %51, %52 in 0 : vector<8x64xf32>, vector<136x64xf32> -> vector<144x64xf32>
    %cst_16 = arith.constant 0.000000e+00 : f32
    %54 = vector.broadcast %cst_16 : f32 to vector<8x64xf32>
    %55 = vector.extract_strided_slice %50 {offsets = [8, 0], sizes = [136, 64], strides = [1, 1]} : vector<144x64xf32> to vector<136x64xf32>
    %56 = tpu.concatenate %55, %54 in 0 : vector<136x64xf32>, vector<8x64xf32> -> vector<144x64xf32>
    %57 = tpu.concatenate %53, %50, %56 in 1 : vector<144x64xf32>, vector<144x64xf32>, vector<144x64xf32> -> vector<144x192xf32>
    %c0_17 = arith.constant 0 : index
    %c0_18 = arith.constant 0 : index
    %58 = vector.load %arg5[%c0_17, %c0_18] : memref<192x128xf32, #tpu.memory_space<vmem>>, vector<192x128xf32>
    %cst_19 = arith.constant dense<0.000000e+00> : vector<144x128xf32>
    %59 = tpu.matmul %57, %58, %cst_19 {dimension_numbers = #tpu.dot_dimension_numbers<[1], [0], [0], [1], [0, 0, 1, 1], [], []>} : vector<144x192xf32>, vector<192x128xf32>, vector<144x128xf32> -> vector<144x128xf32>
    %c0_20 = arith.constant 0 : index
    %c0_21 = arith.constant 0 : index
    %60 = vector.load %arg6[%c0_20, %c0_21] : memref<1x128xf32, #tpu.memory_space<vmem>>, vector<1x128xf32>
    %61 = vector.broadcast %60 : vector<1x128xf32> to vector<144x128xf32>
    %62 = arith.addf %59, %61 : vector<144x128xf32>
    %cst_22 = arith.constant 0.000000e+00 : f32
    %63 = vector.broadcast %cst_22 : f32 to vector<144x128xf32>
    %64 = arith.maximumf %62, %63 : vector<144x128xf32>
    %65 = vector.shape_cast %64 : vector<144x128xf32> to vector<9x16x128xf32>
    %66 = vector.extract_strided_slice %65 {offsets = [0, 0, 0], sizes = [9, 8, 128], strides = [1, 1, 1]} : vector<9x16x128xf32> to vector<9x8x128xf32>
    %67 = vector.extract_strided_slice %65 {offsets = [0, 8, 0], sizes = [9, 8, 128], strides = [1, 1, 1]} : vector<9x16x128xf32> to vector<9x8x128xf32>
    %68 = arith.maximumf %66, %67 : vector<9x8x128xf32>
    %69 = vector.shape_cast %68 : vector<9x8x128xf32> to vector<72x128xf32>
    %70 = vector.extract_strided_slice %69 {offsets = [0, 0], sizes = [8, 128], strides = [1, 1]} : vector<72x128xf32> to vector<8x128xf32>
    %71 = vector.extract_strided_slice %69 {offsets = [8, 0], sizes = [8, 128], strides = [1, 1]} : vector<72x128xf32> to vector<8x128xf32>
    %72 = vector.extract_strided_slice %69 {offsets = [16, 0], sizes = [8, 128], strides = [1, 1]} : vector<72x128xf32> to vector<8x128xf32>
    %73 = vector.extract_strided_slice %69 {offsets = [24, 0], sizes = [8, 128], strides = [1, 1]} : vector<72x128xf32> to vector<8x128xf32>
    %74 = vector.extract_strided_slice %69 {offsets = [32, 0], sizes = [8, 128], strides = [1, 1]} : vector<72x128xf32> to vector<8x128xf32>
    %75 = vector.extract_strided_slice %69 {offsets = [40, 0], sizes = [8, 128], strides = [1, 1]} : vector<72x128xf32> to vector<8x128xf32>
    %76 = vector.extract_strided_slice %69 {offsets = [48, 0], sizes = [8, 128], strides = [1, 1]} : vector<72x128xf32> to vector<8x128xf32>
    %77 = vector.extract_strided_slice %69 {offsets = [56, 0], sizes = [8, 128], strides = [1, 1]} : vector<72x128xf32> to vector<8x128xf32>
    %78 = vector.extract_strided_slice %69 {offsets = [64, 0], sizes = [8, 128], strides = [1, 1]} : vector<72x128xf32> to vector<8x128xf32>
    %79 = tpu.concatenate %70, %71, %72, %73, %74, %75, %76, %77, %78 in 1 : vector<8x128xf32>, vector<8x128xf32>, vector<8x128xf32>, vector<8x128xf32>, vector<8x128xf32>, vector<8x128xf32>, vector<8x128xf32>, vector<8x128xf32>, vector<8x128xf32> -> vector<8x1152xf32>
    tpu.wait_dma2 semaphore(%arg15 : memref<!tpu.dma_semaphore, #tpu.memory_space<semaphore_mem>>) src(%arg7 : memref<1152x256xbf16, #tpu.memory_space<any>>) dst(%arg14 : memref<1152x256xbf16, #tpu.memory_space<vmem>>)
    %80 = arith.truncf %79 : vector<8x1152xf32> to vector<8x1152xbf16>
    %c0_23 = arith.constant 0 : index
    %c0_24 = arith.constant 0 : index
    %81 = vector.load %arg14[%c0_23, %c0_24] : memref<1152x256xbf16, #tpu.memory_space<vmem>>, vector<1152x256xbf16>
    %cst_25 = arith.constant dense<0.000000e+00> : vector<8x256xf32>
    %82 = tpu.matmul %80, %81, %cst_25 {dimension_numbers = #tpu.dot_dimension_numbers<[1], [0], [0], [1], [0, 0, 1, 1], [], []>} : vector<8x1152xbf16>, vector<1152x256xbf16>, vector<8x256xf32> -> vector<8x256xf32>
    %c0_26 = arith.constant 0 : index
    %c0_27 = arith.constant 0 : index
    %83 = vector.load %arg8[%c0_26, %c0_27] : memref<1x256xf32, #tpu.memory_space<vmem>>, vector<1x256xf32>
    %84 = vector.broadcast %83 : vector<1x256xf32> to vector<8x256xf32>
    %85 = arith.addf %82, %84 : vector<8x256xf32>
    %cst_28 = arith.constant 0.000000e+00 : f32
    %86 = vector.broadcast %cst_28 : f32 to vector<8x256xf32>
    %87 = arith.maximumf %85, %86 : vector<8x256xf32>
    %88 = arith.truncf %87 : vector<8x256xf32> to vector<8x256xbf16>
    %c0_29 = arith.constant 0 : index
    %c0_30 = arith.constant 0 : index
    %89 = vector.load %arg9[%c0_29, %c0_30] : memref<256x64xbf16, #tpu.memory_space<vmem>>, vector<256x64xbf16>
    %cst_31 = arith.constant dense<0.000000e+00> : vector<8x64xf32>
    %90 = tpu.matmul %88, %89, %cst_31 {dimension_numbers = #tpu.dot_dimension_numbers<[1], [0], [0], [1], [0, 0, 1, 1], [], []>} : vector<8x256xbf16>, vector<256x64xbf16>, vector<8x64xf32> -> vector<8x64xf32>
    %c0_32 = arith.constant 0 : index
    %c0_33 = arith.constant 0 : index
    %91 = vector.load %arg10[%c0_32, %c0_33] : memref<1x64xf32, #tpu.memory_space<vmem>>, vector<1x64xf32>
    %92 = vector.broadcast %91 : vector<1x64xf32> to vector<8x64xf32>
    %93 = arith.addf %90, %92 : vector<8x64xf32>
    %cst_34 = arith.constant 0.000000e+00 : f32
    %94 = vector.broadcast %cst_34 : f32 to vector<8x64xf32>
    %95 = arith.maximumf %93, %94 : vector<8x64xf32>
    %c0_35 = arith.constant 0 : index
    %c0_36 = arith.constant 0 : index
    %96 = vector.load %arg11[%c0_35, %c0_36] : memref<64x2xf32, #tpu.memory_space<vmem>>, vector<64x2xf32>
    %cst_37 = arith.constant dense<0.000000e+00> : vector<8x2xf32>
    %97 = tpu.matmul %95, %96, %cst_37 {dimension_numbers = #tpu.dot_dimension_numbers<[1], [0], [0], [1], [0, 0, 1, 1], [], []>} : vector<8x64xf32>, vector<64x2xf32>, vector<8x2xf32> -> vector<8x2xf32>
    %c0_38 = arith.constant 0 : index
    %c0_39 = arith.constant 0 : index
    %98 = vector.load %arg12[%c0_38, %c0_39] : memref<1x2xf32, #tpu.memory_space<vmem>>, vector<1x2xf32>
    %99 = vector.broadcast %98 : vector<1x2xf32> to vector<8x2xf32>
    %100 = arith.addf %97, %99 : vector<8x2xf32>
    %101 = vector.extract_strided_slice %100 {offsets = [0, 0], sizes = [4, 2], strides = [1, 1]} : vector<8x2xf32> to vector<4x2xf32>
    %c0_40 = arith.constant 0 : index
    %c0_41 = arith.constant 0 : index
    %102 = vector.load %arg13[%c0_40, %c0_41] : memref<4x2xf32, #tpu.memory_space<vmem>>, vector<4x2xf32>
    tpu.vector_store %arg13[%c0_40, %c0_41], %101 {strides = array<i32>} : memref<4x2xf32, #tpu.memory_space<vmem>>, vector<4x2xf32>,
    return
  }
}

</mosaic_0001>

<llo_original>
// kernel: net_forward.1
$region0: #{net_forward.1}
  #allocation0 [shape = 'u32[]', space=smem, size = 0x4, offset = 0x4, fixed_abs, tag = 'smem constant byte address 0x4 - core index']
  #allocation1 [shape = 'u32[72,128]{1,0:T(1,128)}', space=vmem, size = 0x9000, scoped, tag = 'internal scratch']
  #allocation2 [shape = 'bf16[1152,256]{1,0:T(8,128)(2,1)}', space=vmem, size = 0x90000, scoped, tag = 'scratch operand']
  #allocation3 [shape = 's32[1]{0}', space=sflag, size = 0x4, scoped, tag = 'scratch operand']
  #allocation12 [shape = 's32[]', space=sflag, size = 0x4, offset = 0, fixed_abs, tag = 'sflag constant byte address 0x0 - dummy sync flag']
  %s0 = inlined_call_operand.vmem [shape: f32[576,1], index: 0, kind: input, shape index: {}]
  %s1 = inlined_call_operand.vmem [shape: f32[3,32], index: 1, kind: input, shape index: {}]
  %s2 = inlined_call_operand.vmem [shape: f32[1,32], index: 2, kind: input, shape index: {}]
  %s3 = inlined_call_operand.vmem [shape: f32[96,64], index: 3, kind: input, shape index: {}]
  %s4 = inlined_call_operand.hbm [shape: f32[1,64], index: 4, kind: input, shape index: {}]
  %s5 = inlined_call_operand.hbm [shape: f32[192,128], index: 5, kind: input, shape index: {}]
  %s6 = inlined_call_operand.hbm [shape: f32[1,128], index: 6, kind: input, shape index: {}]
  %s7 = inlined_call_operand.vmem [shape: bf16[1152,256], index: 7, kind: input, shape index: {}]
  %s8 = inlined_call_operand.vmem [shape: f32[1,256], index: 8, kind: input, shape index: {}]
  %s9 = inlined_call_operand.vmem [shape: bf16[256,64], index: 9, kind: input, shape index: {}]
  %s10 = inlined_call_operand.hbm [shape: f32[1,64], index: 10, kind: input, shape index: {}]
  %s11 = inlined_call_operand.vmem [shape: f32[64,2], index: 11, kind: input, shape index: {}]
  %s12 = inlined_call_operand.hbm [shape: f32[1,2], index: 12, kind: input, shape index: {}]
  %s13 = inlined_call_operand.vmem [shape: f32[4,2], index: 13, kind: output, shape index: {}]
  %s14 = sld [smem:[#allocation0]]
  $region97: #{net_forward.1} parent=0
    _
  %s16 = ssub.s32 1, %s14
  %s17 = scalar_select 0, %s16, %s14
  $region1: #{net_forward.1} parent=0
    #allocation4 [shape = 'u8[512]{0}', space=vmem, size = 0x400, scoped, tag = 'input window, operand 4, single buffered']
    #allocation5 [shape = 's32[1]{0}', space=sflag, size = 0x4, scoped, tag = 'scoped memory for net_forward.1']
    #allocation6 [shape = 'u8[98304]{0}', space=vmem, size = 0x18000, scoped, tag = 'input window, operand 5, single buffered']
    #allocation7 [shape = 's32[1]{0}', space=sflag, size = 0x4, scoped, tag = 'scoped memory for net_forward.1']
    #allocation8 [shape = 'u8[512]{0}', space=vmem, size = 0x400, scoped, tag = 'input window, operand 6, single buffered']
    #allocation9 [shape = 'u8[512]{0}', space=vmem, size = 0x400, scoped, tag = 'input window, operand 10, single buffered']
    #allocation10 [shape = 's32[1]{0}', space=sflag, size = 0x4, scoped, tag = 'scoped memory for net_forward.1']
    #allocation11 [shape = 'u8[512]{0}', space=vmem, size = 0x400, scoped, tag = 'input window, operand 12, single buffered']
    %18 = vsyncpa [#allocation5], 0
    %19 = vsyncpa [#allocation7], 0
    %20 = vsyncpa [#allocation10], 0
    // Predicated region
    $region2: #{net_forward.1} parent=1 // pred_check
      _
    $region3: #{net_forward.1} parent=1 // pred_check_branch
      %22 = sbr.rel (0) target = $region5
    $region4: #{net_forward.1} parent=1 // pred_region
      _
    $region5: #{net_forward.1} parent=1 // pred_fallthru
      _
    // Predicated region
    $region6: #{net_forward.1} parent=1 // pred_check
      _
    $region7: #{net_forward.1} parent=1 // pred_check_branch
      %24 = sbr.rel (0) target = $region9
    $region8: #{net_forward.1} parent=1 // pred_region
      _
    $region9: #{net_forward.1} parent=1 // pred_fallthru
      _
    // Predicated region
    $region10: #{net_forward.1} parent=1 // pred_check
      _
    $region11: #{net_forward.1} parent=1 // pred_check_branch
      %26 = sbr.rel (0) target = $region13
    $region12: #{net_forward.1} parent=1 // pred_region
      _
    $region13: #{net_forward.1} parent=1 // pred_fallthru
      _
    // Predicated region
    $region14: #{net_forward.1} parent=1 // pred_check
      _
    $region15: #{net_forward.1} parent=1 // pred_check_branch
      %28 = sbr.rel (0) target = $region17
    $region16: #{net_forward.1} parent=1 // pred_region
      _
    $region17: #{net_forward.1} parent=1 // pred_fallthru
      _
    // Predicated region
    $region18: #{net_forward.1} parent=1 // pred_check
      _
    $region19: #{net_forward.1} parent=1 // pred_check_branch
      %30 = sbr.rel (0) target = $region21
    $region20: #{net_forward.1} parent=1 // pred_region
      %32 = vsyncadd [#allocation5], 0
      %s34 = sshll.u32 %s4, 4
      %s35 = int_to_ptr.hbm [resolvable:$true] %s34
      %s36 = sshll.u32 [#allocation4], 4
      %s37 = int_to_ptr.vmem [resolvable:$true] %s36
      %39 = dma.hbm_to_vmem [thread:$0]  %s35, 16, %s37, [#allocation5]
    $region21: #{net_forward.1} parent=1 // pred_fallthru
      _
    // Predicated region
    $region22: #{net_forward.1} parent=1 // pred_check
      _
    $region23: #{net_forward.1} parent=1 // pred_check_branch
      %41 = sbr.rel (0) target = $region25
    $region24: #{net_forward.1} parent=1 // pred_region
      %43 = vsyncadd [#allocation7], 0
      %s44 = sshll.u32 %s5, 4
      %s45 = int_to_ptr.hbm [resolvable:$true] %s44
      %s46 = sshll.u32 [#allocation6], 4
      %s47 = int_to_ptr.vmem [resolvable:$true] %s46
      %52 = dma.hbm_to_vmem [thread:$0]  %s45, 3072, %s47, [#allocation7], 128, 128, 8
    $region25: #{net_forward.1} parent=1 // pred_fallthru
      _
    // Predicated region
    $region26: #{net_forward.1} parent=1 // pred_check
      _
    $region27: #{net_forward.1} parent=1 // pred_check_branch
      %54 = sbr.rel (0) target = $region29
    $region28: #{net_forward.1} parent=1 // pred_region
      %56 = vsyncadd [#allocation7], 0
      %s58 = sshll.u32 %s6, 4
      %s59 = int_to_ptr.hbm [resolvable:$true] %s58
      %s60 = sshll.u32 [#allocation8], 4
      %s61 = int_to_ptr.vmem [resolvable:$true] %s60
      %63 = dma.hbm_to_vmem [thread:$0]  %s59, 16, %s61, [#allocation7]
    $region29: #{net_forward.1} parent=1 // pred_fallthru
      _
    // Predicated region
    $region30: #{net_forward.1} parent=1 // pred_check
      _
    $region31: #{net_forward.1} parent=1 // pred_check_branch
      %65 = sbr.rel (0) target = $region33
    $region32: #{net_forward.1} parent=1 // pred_region
      _
    $region33: #{net_forward.1} parent=1 // pred_fallthru
      _
    // Predicated region
    $region34: #{net_forward.1} parent=1 // pred_check
      _
    $region35: #{net_forward.1} parent=1 // pred_check_branch
      %67 = sbr.rel (0) target = $region37
    $region36: #{net_forward.1} parent=1 // pred_region
      _
    $region37: #{net_forward.1} parent=1 // pred_fallthru
      _
    // Predicated region
    $region38: #{net_forward.1} parent=1 // pred_check
      _
    $region39: #{net_forward.1} parent=1 // pred_check_branch
      %69 = sbr.rel (0) target = $region41
    $region40: #{net_forward.1} parent=1 // pred_region
      %71 = vsyncadd [#allocation10], 0
      %s73 = sshll.u32 %s10, 4
      %s74 = int_to_ptr.hbm [resolvable:$true] %s73
      %s75 = sshll.u32 [#allocation9], 4
      %s76 = int_to_ptr.vmem [resolvable:$true] %s75
      %78 = dma.hbm_to_vmem [thread:$0]  %s74, 16, %s76, [#allocation10]
    $region41: #{net_forward.1} parent=1 // pred_fallthru
      _
    // Predicated region
    $region42: #{net_forward.1} parent=1 // pred_check
      _
    $region43: #{net_forward.1} parent=1 // pred_check_branch
      %80 = sbr.rel (0) target = $region45
    $region44: #{net_forward.1} parent=1 // pred_region
      _
    $region45: #{net_forward.1} parent=1 // pred_fallthru
      _
    // Predicated region
    $region46: #{net_forward.1} parent=1 // pred_check
      _
    $region47: #{net_forward.1} parent=1 // pred_check_branch
      %82 = sbr.rel (0) target = $region49
    $region48: #{net_forward.1} parent=1 // pred_region
      %84 = vsyncadd [#allocation10], 0
      %s86 = sshll.u32 %s12, 4
      %s87 = int_to_ptr.hbm [resolvable:$true] %s86
      %s88 = sshll.u32 [#allocation11], 4
      %s89 = int_to_ptr.vmem [resolvable:$true] %s88
      %91 = dma.hbm_to_vmem [thread:$0]  %s87, 16, %s89, [#allocation10]
    $region49: #{net_forward.1} parent=1 // pred_fallthru
      _
    // Predicated region
    $region50: #{net_forward.1} parent=1 // pred_check
      _
    $region51: #{net_forward.1} parent=1 // pred_check_branch
      %93 = sbr.rel (0) target = $region53
    $region52: #{net_forward.1} parent=1 // pred_region
      %95 = dma.done [#allocation5], 16
    $region53: #{net_forward.1} parent=1 // pred_fallthru
      _
    // Predicated region
    $region54: #{net_forward.1} parent=1 // pred_check
      _
    $region55: #{net_forward.1} parent=1 // pred_check_branch
      %97 = sbr.rel (0) target = $region57
    $region56: #{net_forward.1} parent=1 // pred_region
      %99 = dma.done [#allocation7], 3072
    $region57: #{net_forward.1} parent=1 // pred_fallthru
      _
    // Predicated region
    $region58: #{net_forward.1} parent=1 // pred_check
      _
    $region59: #{net_forward.1} parent=1 // pred_check_branch
      %101 = sbr.rel (0) target = $region61
    $region60: #{net_forward.1} parent=1 // pred_region
      %103 = dma.done [#allocation7], 16
    $region61: #{net_forward.1} parent=1 // pred_fallthru
      _
    // Predicated region
    $region62: #{net_forward.1} parent=1 // pred_check
      _
    $region63: #{net_forward.1} parent=1 // pred_check_branch
      %105 = sbr.rel (0) target = $region65
    $region64: #{net_forward.1} parent=1 // pred_region
      %107 = dma.done [#allocation10], 16
    $region65: #{net_forward.1} parent=1 // pred_fallthru
      _
    // Predicated region
    $region66: #{net_forward.1} parent=1 // pred_check
      _
    $region67: #{net_forward.1} parent=1 // pred_check_branch
      %109 = sbr.rel (0) target = $region69
    $region68: #{net_forward.1} parent=1 // pred_region
      %111 = dma.done [#allocation10], 16
    $region69: #{net_forward.1} parent=1 // pred_fallthru
      _
    // Predicated region
    $region70: #{net_forward.1} parent=1 // pred_check
      _
    $region71: #{net_forward.1} parent=1 // pred_check_branch
      %113 = sbr.rel (0) target = $region73
    $region72: #{net_forward.1} parent=1 // pred_region
      loop: start=0, step=1, limit=1
      $region74: #{net_forward.1} parent=72 // loop_pre_header
        _
      $region75: #{net_forward.1} parent=72 // loop_header
        %s115 = sphi 0, %s119
        %p116 = scmp.ge.s32.totalorder %s115, 1
        %s120 = sphi %s7, %s7
        %s121 = sphi [#allocation2], [#allocation2]
      $region76: #{net_forward.1} parent=72 // loop_header_branch
        %118 = sbr.rel (%p116) target = $region80
      $region77: #{net_forward.1} parent=72 // loop_body
        %v122 = vld [vmem:[%s120] sm:$0xff]
        %123 = vst [vmem:[%s121] sm:$0xff] %v122
        %v124 = vld [vmem:[%s120 + $0x8] sm:$0xff]
        %125 = vst [vmem:[%s121 + $0x8] sm:$0xff] %v124
        %v126 = vld [vmem:[%s120 + $0x10] sm:$0xff]
        %127 = vst [vmem:[%s121 + $0x10] sm:$0xff] %v126
        %v128 = vld [vmem:[%s120 + $0x18] sm:$0xff]
        %129 = vst [vmem:[%s121 + $0x18] sm:$0xff] %v128
        %v130 = vld [vmem:[%s120 + $0x20] sm:$0xff]
        %131 = vst [vmem:[%s121 + $0x20] sm:$0xff] %v130
        %v132 = vld [vmem:[%s120 + $0x28] sm:$0xff]
        %133 = vst [vmem:[%s121 + $0x28] sm:$0xff] %v132
        %v134 = vld [vmem:[%s120 + $0x30] sm:$0xff]
        %135 = vst [vmem:[%s121 + $0x30] sm:$0xff] %v134
        %v136 = vld [vmem:[%s120 + $0x38] sm:$0xff]
        %137 = vst [vmem:[%s121 + $0x38] sm:$0xff] %v136
        %v138 = vld [vmem:[%s120 + $0x40] sm:$0xff]
        %139 = vst [vmem:[%s121 + $0x40] sm:$0xff] %v138
        %v140 = vld [vmem:[%s120 + $0x48] sm:$0xff]
        %141 = vst [vmem:[%s121 + $0x48] sm:$0xff] %v140
        %v142 = vld [vmem:[%s120 + $0x50] sm:$0xff]
        %143 = vst [vmem:[%s121 + $0x50] sm:$0xff] %v142
        %v144 = vld [vmem:[%s120 + $0x58] sm:$0xff]
        %145 = vst [vmem:[%s121 + $0x58] sm:$0xff] %v144
        %v146 = vld [vmem:[%s120 + $0x60] sm:$0xff]
        %147 = vst [vmem:[%s121 + $0x60] sm:$0xff] %v146
        %v148 = vld [vmem:[%s120 + $0x68] sm:$0xff]
        %149 = vst [vmem:[%s121 + $0x68] sm:$0xff] %v148
        %v150 = vld [vmem:[%s120 + $0x70] sm:$0xff]
        %151 = vst [vmem:[%s121 + $0x70] sm:$0xff] %v150
        %v152 = vld [vmem:[%s120 + $0x78] sm:$0xff]
        %153 = vst [vmem:[%s121 + $0x78] sm:$0xff] %v152
        %v154 = vld [vmem:[%s120 + $0x80] sm:$0xff]
        %155 = vst [vmem:[%s121 + $0x80] sm:$0xff] %v154
        %v156 = vld [vmem:[%s120 + $0x88] sm:$0xff]
        %157 = vst [vmem:[%s121 + $0x88] sm:$0xff] %v156
        %v158 = vld [vmem:[%s120 + $0x90] sm:$0xff]
        %159 = vst [vmem:[%s121 + $0x90] sm:$0xff] %v158
        %v160 = vld [vmem:[%s120 + $0x98] sm:$0xff]
        %161 = vst [vmem:[%s121 + $0x98] sm:$0xff] %v160
        %v162 = vld [vmem:[%s120 + $0xa0] sm:$0xff]
        %163 = vst [vmem:[%s121 + $0xa0] sm:$0xff] %v162
        %v164 = vld [vmem:[%s120 + $0xa8] sm:$0xff]
        %165 = vst [vmem:[%s121 + $0xa8] sm:$0xff] %v164
        %v166 = vld [vmem:[%s120 + $0xb0] sm:$0xff]
        %167 = vst [vmem:[%s121 + $0xb0] sm:$0xff] %v166
        %v168 = vld [vmem:[%s120 + $0xb8] sm:$0xff]
        %169 = vst [vmem:[%s121 + $0xb8] sm:$0xff] %v168
        %v170 = vld [vmem:[%s120 + $0xc0] sm:$0xff]
        %171 = vst [vmem:[%s121 + $0xc0] sm:$0xff] %v170
        %v172 = vld [vmem:[%s120 + $0xc8] sm:$0xff]
        %173 = vst [vmem:[%s121 + $0xc8] sm:$0xff] %v172
        %v174 = vld [vmem:[%s120 + $0xd0] sm:$0xff]
        %175 = vst [vmem:[%s121 + $0xd0] sm:$0xff] %v174
        %v176 = vld [vmem:[%s120 + $0xd8] sm:$0xff]
        %177 = vst [vmem:[%s121 + $0xd8] sm:$0xff] %v176
        %v178 = vld [vmem:[%s120 + $0xe0] sm:$0xff]
        %179 = vst [vmem:[%s121 + $0xe0] sm:$0xff] %v178
        %v180 = vld [vmem:[%s120 + $0xe8] sm:$0xff]
        %181 = vst [vmem:[%s121 + $0xe8] sm:$0xff] %v180
        %v182 = vld [vmem:[%s120 + $0xf0] sm:$0xff]
        %183 = vst [vmem:[%s121 + $0xf0] sm:$0xff] %v182
        %v184 = vld [vmem:[%s120 + $0xf8] sm:$0xff]
        %185 = vst [vmem:[%s121 + $0xf8] sm:$0xff] %v184
        %v186 = vld [vmem:[%s120 + $0x100] sm:$0xff]
        %187 = vst [vmem:[%s121 + $0x100] sm:$0xff] %v186
        %v188 = vld [vmem:[%s120 + $0x108] sm:$0xff]
        %189 = vst [vmem:[%s121 + $0x108] sm:$0xff] %v188
        %v190 = vld [vmem:[%s120 + $0x110] sm:$0xff]
        %191 = vst [vmem:[%s121 + $0x110] sm:$0xff] %v190
        %v192 = vld [vmem:[%s120 + $0x118] sm:$0xff]
        %193 = vst [vmem:[%s121 + $0x118] sm:$0xff] %v192
        %v194 = vld [vmem:[%s120 + $0x120] sm:$0xff]
        %195 = vst [vmem:[%s121 + $0x120] sm:$0xff] %v194
        %v196 = vld [vmem:[%s120 + $0x128] sm:$0xff]
        %197 = vst [vmem:[%s121 + $0x128] sm:$0xff] %v196
        %v198 = vld [vmem:[%s120 + $0x130] sm:$0xff]
        %199 = vst [vmem:[%s121 + $0x130] sm:$0xff] %v198
        %v200 = vld [vmem:[%s120 + $0x138] sm:$0xff]
        %201 = vst [vmem:[%s121 + $0x138] sm:$0xff] %v200
        %v202 = vld [vmem:[%s120 + $0x140] sm:$0xff]
        %203 = vst [vmem:[%s121 + $0x140] sm:$0xff] %v202
        %v204 = vld [vmem:[%s120 + $0x148] sm:$0xff]
        %205 = vst [vmem:[%s121 + $0x148] sm:$0xff] %v204
        %v206 = vld [vmem:[%s120 + $0x150] sm:$0xff]
        %207 = vst [vmem:[%s121 + $0x150] sm:$0xff] %v206
        %v208 = vld [vmem:[%s120 + $0x158] sm:$0xff]
        %209 = vst [vmem:[%s121 + $0x158] sm:$0xff] %v208
        %v210 = vld [vmem:[%s120 + $0x160] sm:$0xff]
        %211 = vst [vmem:[%s121 + $0x160] sm:$0xff] %v210
        %v212 = vld [vmem:[%s120 + $0x168] sm:$0xff]
        %213 = vst [vmem:[%s121 + $0x168] sm:$0xff] %v212
        %v214 = vld [vmem:[%s120 + $0x170] sm:$0xff]
        %215 = vst [vmem:[%s121 + $0x170] sm:$0xff] %v214
        %v216 = vld [vmem:[%s120 + $0x178] sm:$0xff]
        %217 = vst [vmem:[%s121 + $0x178] sm:$0xff] %v216
        %v218 = vld [vmem:[%s120 + $0x180] sm:$0xff]
        %219 = vst [vmem:[%s121 + $0x180] sm:$0xff] %v218
        %v220 = vld [vmem:[%s120 + $0x188] sm:$0xff]
        %221 = vst [vmem:[%s121 + $0x188] sm:$0xff] %v220
        %v222 = vld [vmem:[%s120 + $0x190] sm:$0xff]
        %223 = vst [vmem:[%s121 + $0x190] sm:$0xff] %v222
        %v224 = vld [vmem:[%s120 + $0x198] sm:$0xff]
        %225 = vst [vmem:[%s121 + $0x198] sm:$0xff] %v224
        %v226 = vld [vmem:[%s120 + $0x1a0] sm:$0xff]
        %227 = vst [vmem:[%s121 + $0x1a0] sm:$0xff] %v226
        %v228 = vld [vmem:[%s120 + $0x1a8] sm:$0xff]
        %229 = vst [vmem:[%s121 + $0x1a8] sm:$0xff] %v228
        %v230 = vld [vmem:[%s120 + $0x1b0] sm:$0xff]
        %231 = vst [vmem:[%s121 + $0x1b0] sm:$0xff] %v230
        %v232 = vld [vmem:[%s120 + $0x1b8] sm:$0xff]
        %233 = vst [vmem:[%s121 + $0x1b8] sm:$0xff] %v232
        %v234 = vld [vmem:[%s120 + $0x1c0] sm:$0xff]
        %235 = vst [vmem:[%s121 + $0x1c0] sm:$0xff] %v234
        %v236 = vld [vmem:[%s120 + $0x1c8] sm:$0xff]
        %237 = vst [vmem:[%s121 + $0x1c8] sm:$0xff] %v236
        %v238 = vld [vmem:[%s120 + $0x1d0] sm:$0xff]
        %239 = vst [vmem:[%s121 + $0x1d0] sm:$0xff] %v238
        %v240 = vld [vmem:[%s120 + $0x1d8] sm:$0xff]
        %241 = vst [vmem:[%s121 + $0x1d8] sm:$0xff] %v240
        %v242 = vld [vmem:[%s120 + $0x1e0] sm:$0xff]
        %243 = vst [vmem:[%s121 + $0x1e0] sm:$0xff] %v242
        %v244 = vld [vmem:[%s120 + $0x1e8] sm:$0xff]
        %245 = vst [vmem:[%s121 + $0x1e8] sm:$0xff] %v244
        %v246 = vld [vmem:[%s120 + $0x1f0] sm:$0xff]
        %247 = vst [vmem:[%s121 + $0x1f0] sm:$0xff] %v246
        %v248 = vld [vmem:[%s120 + $0x1f8] sm:$0xff]
        %249 = vst [vmem:[%s121 + $0x1f8] sm:$0xff] %v248
        %v250 = vld [vmem:[%s120 + $0x200] sm:$0xff]
        %251 = vst [vmem:[%s121 + $0x200] sm:$0xff] %v250
        %v252 = vld [vmem:[%s120 + $0x208] sm:$0xff]
        %253 = vst [vmem:[%s121 + $0x208] sm:$0xff] %v252
        %v254 = vld [vmem:[%s120 + $0x210] sm:$0xff]
        %255 = vst [vmem:[%s121 + $0x210] sm:$0xff] %v254
        %v256 = vld [vmem:[%s120 + $0x218] sm:$0xff]
        %257 = vst [vmem:[%s121 + $0x218] sm:$0xff] %v256
        %v258 = vld [vmem:[%s120 + $0x220] sm:$0xff]
        %259 = vst [vmem:[%s121 + $0x220] sm:$0xff] %v258
        %v260 = vld [vmem:[%s120 + $0x228] sm:$0xff]
        %261 = vst [vmem:[%s121 + $0x228] sm:$0xff] %v260
        %v262 = vld [vmem:[%s120 + $0x230] sm:$0xff]
        %263 = vst [vmem:[%s121 + $0x230] sm:$0xff] %v262
        %v264 = vld [vmem:[%s120 + $0x238] sm:$0xff]
        %265 = vst [vmem:[%s121 + $0x238] sm:$0xff] %v264
        %v266 = vld [vmem:[%s120 + $0x240] sm:$0xff]
        %267 = vst [vmem:[%s121 + $0x240] sm:$0xff] %v266
        %v268 = vld [vmem:[%s120 + $0x248] sm:$0xff]
        %269 = vst [vmem:[%s121 + $0x248] sm:$0xff] %v268
        %v270 = vld [vmem:[%s120 + $0x250] sm:$0xff]
        %271 = vst [vmem:[%s121 + $0x250] sm:$0xff] %v270
        %v272 = vld [vmem:[%s120 + $0x258] sm:$0xff]
        %273 = vst [vmem:[%s121 + $0x258] sm:$0xff] %v272
        %v274 = vld [vmem:[%s120 + $0x260] sm:$0xff]
        %275 = vst [vmem:[%s121 + $0x260] sm:$0xff] %v274
        %v276 = vld [vmem:[%s120 + $0x268] sm:$0xff]
        %277 = vst [vmem:[%s121 + $0x268] sm:$0xff] %v276
        %v278 = vld [vmem:[%s120 + $0x270] sm:$0xff]
        %279 = vst [vmem:[%s121 + $0x270] sm:$0xff] %v278
        %v280 = vld [vmem:[%s120 + $0x278] sm:$0xff]
        %281 = vst [vmem:[%s121 + $0x278] sm:$0xff] %v280
        %v282 = vld [vmem:[%s120 + $0x280] sm:$0xff]
        %283 = vst [vmem:[%s121 + $0x280] sm:$0xff] %v282
        %v284 = vld [vmem:[%s120 + $0x288] sm:$0xff]
        %285 = vst [vmem:[%s121 + $0x288] sm:$0xff] %v284
        %v286 = vld [vmem:[%s120 + $0x290] sm:$0xff]
        %287 = vst [vmem:[%s121 + $0x290] sm:$0xff] %v286
        %v288 = vld [vmem:[%s120 + $0x298] sm:$0xff]
        %289 = vst [vmem:[%s121 + $0x298] sm:$0xff] %v288
        %v290 = vld [vmem:[%s120 + $0x2a0] sm:$0xff]
        %291 = vst [vmem:[%s121 + $0x2a0] sm:$0xff] %v290
        %v292 = vld [vmem:[%s120 + $0x2a8] sm:$0xff]
        %293 = vst [vmem:[%s121 + $0x2a8] sm:$0xff] %v292
        %v294 = vld [vmem:[%s120 + $0x2b0] sm:$0xff]
        %295 = vst [vmem:[%s121 + $0x2b0] sm:$0xff] %v294
        %v296 = vld [vmem:[%s120 + $0x2b8] sm:$0xff]
        %297 = vst [vmem:[%s121 + $0x2b8] sm:$0xff] %v296
        %v298 = vld [vmem:[%s120 + $0x2c0] sm:$0xff]
        %299 = vst [vmem:[%s121 + $0x2c0] sm:$0xff] %v298
        %v300 = vld [vmem:[%s120 + $0x2c8] sm:$0xff]
        %301 = vst [vmem:[%s121 + $0x2c8] sm:$0xff] %v300
        %v302 = vld [vmem:[%s120 + $0x2d0] sm:$0xff]
        %303 = vst [vmem:[%s121 + $0x2d0] sm:$0xff] %v302
        %v304 = vld [vmem:[%s120 + $0x2d8] sm:$0xff]
        %305 = vst [vmem:[%s121 + $0x2d8] sm:$0xff] %v304
        %v306 = vld [vmem:[%s120 + $0x2e0] sm:$0xff]
        %307 = vst [vmem:[%s121 + $0x2e0] sm:$0xff] %v306
        %v308 = vld [vmem:[%s120 + $0x2e8] sm:$0xff]
        %309 = vst [vmem:[%s121 + $0x2e8] sm:$0xff] %v308
        %v310 = vld [vmem:[%s120 + $0x2f0] sm:$0xff]
        %311 = vst [vmem:[%s121 + $0x2f0] sm:$0xff] %v310
        %v312 = vld [vmem:[%s120 + $0x2f8] sm:$0xff]
        %313 = vst [vmem:[%s121 + $0x2f8] sm:$0xff] %v312
        %v314 = vld [vmem:[%s120 + $0x300] sm:$0xff]
        %315 = vst [vmem:[%s121 + $0x300] sm:$0xff] %v314
        %v316 = vld [vmem:[%s120 + $0x308] sm:$0xff]
        %317 = vst [vmem:[%s121 + $0x308] sm:$0xff] %v316
        %v318 = vld [vmem:[%s120 + $0x310] sm:$0xff]
        %319 = vst [vmem:[%s121 + $0x310] sm:$0xff] %v318
        %v320 = vld [vmem:[%s120 + $0x318] sm:$0xff]
        %321 = vst [vmem:[%s121 + $0x318] sm:$0xff] %v320
        %v322 = vld [vmem:[%s120 + $0x320] sm:$0xff]
        %323 = vst [vmem:[%s121 + $0x320] sm:$0xff] %v322
        %v324 = vld [vmem:[%s120 + $0x328] sm:$0xff]
        %325 = vst [vmem:[%s121 + $0x328] sm:$0xff] %v324
        %v326 = vld [vmem:[%s120 + $0x330] sm:$0xff]
        %327 = vst [vmem:[%s121 + $0x330] sm:$0xff] %v326
        %v328 = vld [vmem:[%s120 + $0x338] sm:$0xff]
        %329 = vst [vmem:[%s121 + $0x338] sm:$0xff] %v328
        %v330 = vld [vmem:[%s120 + $0x340] sm:$0xff]
        %331 = vst [vmem:[%s121 + $0x340] sm:$0xff] %v330
        %v332 = vld [vmem:[%s120 + $0x348] sm:$0xff]
        %333 = vst [vmem:[%s121 + $0x348] sm:$0xff] %v332
        %v334 = vld [vmem:[%s120 + $0x350] sm:$0xff]
        %335 = vst [vmem:[%s121 + $0x350] sm:$0xff] %v334
        %v336 = vld [vmem:[%s120 + $0x358] sm:$0xff]
        %337 = vst [vmem:[%s121 + $0x358] sm:$0xff] %v336
        %v338 = vld [vmem:[%s120 + $0x360] sm:$0xff]
        %339 = vst [vmem:[%s121 + $0x360] sm:$0xff] %v338
        %v340 = vld [vmem:[%s120 + $0x368] sm:$0xff]
        %341 = vst [vmem:[%s121 + $0x368] sm:$0xff] %v340
        %v342 = vld [vmem:[%s120 + $0x370] sm:$0xff]
        %343 = vst [vmem:[%s121 + $0x370] sm:$0xff] %v342
        %v344 = vld [vmem:[%s120 + $0x378] sm:$0xff]
        %345 = vst [vmem:[%s121 + $0x378] sm:$0xff] %v344
        %v346 = vld [vmem:[%s120 + $0x380] sm:$0xff]
        %347 = vst [vmem:[%s121 + $0x380] sm:$0xff] %v346
        %v348 = vld [vmem:[%s120 + $0x388] sm:$0xff]
        %349 = vst [vmem:[%s121 + $0x388] sm:$0xff] %v348
        %v350 = vld [vmem:[%s120 + $0x390] sm:$0xff]
        %351 = vst [vmem:[%s121 + $0x390] sm:$0xff] %v350
        %v352 = vld [vmem:[%s120 + $0x398] sm:$0xff]
        %353 = vst [vmem:[%s121 + $0x398] sm:$0xff] %v352
        %v354 = vld [vmem:[%s120 + $0x3a0] sm:$0xff]
        %355 = vst [vmem:[%s121 + $0x3a0] sm:$0xff] %v354
        %v356 = vld [vmem:[%s120 + $0x3a8] sm:$0xff]
        %357 = vst [vmem:[%s121 + $0x3a8] sm:$0xff] %v356
        %v358 = vld [vmem:[%s120 + $0x3b0] sm:$0xff]
        %359 = vst [vmem:[%s121 + $0x3b0] sm:$0xff] %v358
        %v360 = vld [vmem:[%s120 + $0x3b8] sm:$0xff]
        %361 = vst [vmem:[%s121 + $0x3b8] sm:$0xff] %v360
        %v362 = vld [vmem:[%s120 + $0x3c0] sm:$0xff]
        %363 = vst [vmem:[%s121 + $0x3c0] sm:$0xff] %v362
        %v364 = vld [vmem:[%s120 + $0x3c8] sm:$0xff]
        %365 = vst [vmem:[%s121 + $0x3c8] sm:$0xff] %v364
        %v366 = vld [vmem:[%s120 + $0x3d0] sm:$0xff]
        %367 = vst [vmem:[%s121 + $0x3d0] sm:$0xff] %v366
        %v368 = vld [vmem:[%s120 + $0x3d8] sm:$0xff]
        %369 = vst [vmem:[%s121 + $0x3d8] sm:$0xff] %v368
        %v370 = vld [vmem:[%s120 + $0x3e0] sm:$0xff]
        %371 = vst [vmem:[%s121 + $0x3e0] sm:$0xff] %v370
        %v372 = vld [vmem:[%s120 + $0x3e8] sm:$0xff]
        %373 = vst [vmem:[%s121 + $0x3e8] sm:$0xff] %v372
        %v374 = vld [vmem:[%s120 + $0x3f0] sm:$0xff]
        %375 = vst [vmem:[%s121 + $0x3f0] sm:$0xff] %v374
        %v376 = vld [vmem:[%s120 + $0x3f8] sm:$0xff]
        %377 = vst [vmem:[%s121 + $0x3f8] sm:$0xff] %v376
        %v378 = vld [vmem:[%s120 + $0x400] sm:$0xff]
        %379 = vst [vmem:[%s121 + $0x400] sm:$0xff] %v378
        %v380 = vld [vmem:[%s120 + $0x408] sm:$0xff]
        %381 = vst [vmem:[%s121 + $0x408] sm:$0xff] %v380
        %v382 = vld [vmem:[%s120 + $0x410] sm:$0xff]
        %383 = vst [vmem:[%s121 + $0x410] sm:$0xff] %v382
        %v384 = vld [vmem:[%s120 + $0x418] sm:$0xff]
        %385 = vst [vmem:[%s121 + $0x418] sm:$0xff] %v384
        %v386 = vld [vmem:[%s120 + $0x420] sm:$0xff]
        %387 = vst [vmem:[%s121 + $0x420] sm:$0xff] %v386
        %v388 = vld [vmem:[%s120 + $0x428] sm:$0xff]
        %389 = vst [vmem:[%s121 + $0x428] sm:$0xff] %v388
        %v390 = vld [vmem:[%s120 + $0x430] sm:$0xff]
        %391 = vst [vmem:[%s121 + $0x430] sm:$0xff] %v390
        %v392 = vld [vmem:[%s120 + $0x438] sm:$0xff]
        %393 = vst [vmem:[%s121 + $0x438] sm:$0xff] %v392
        %v394 = vld [vmem:[%s120 + $0x440] sm:$0xff]
        %395 = vst [vmem:[%s121 + $0x440] sm:$0xff] %v394
        %v396 = vld [vmem:[%s120 + $0x448] sm:$0xff]
        %397 = vst [vmem:[%s121 + $0x448] sm:$0xff] %v396
        %v398 = vld [vmem:[%s120 + $0x450] sm:$0xff]
        %399 = vst [vmem:[%s121 + $0x450] sm:$0xff] %v398
        %v400 = vld [vmem:[%s120 + $0x458] sm:$0xff]
        %401 = vst [vmem:[%s121 + $0x458] sm:$0xff] %v400
        %v402 = vld [vmem:[%s120 + $0x460] sm:$0xff]
        %403 = vst [vmem:[%s121 + $0x460] sm:$0xff] %v402
        %v404 = vld [vmem:[%s120 + $0x468] sm:$0xff]
        %405 = vst [vmem:[%s121 + $0x468] sm:$0xff] %v404
        %v406 = vld [vmem:[%s120 + $0x470] sm:$0xff]
        %407 = vst [vmem:[%s121 + $0x470] sm:$0xff] %v406
        %v408 = vld [vmem:[%s120 + $0x478] sm:$0xff]
        %409 = vst [vmem:[%s121 + $0x478] sm:$0xff] %v408
      $region78: #{net_forward.1} parent=72 // loop_footer
        %s119 = sadd.s32 1, %s115
      $region79: #{net_forward.1} parent=72 // loop_footer_branch
        %114 = sbr.rel target = $region75
      $region80: #{net_forward.1} parent=72 // loop_exit
        _
    $region73: #{net_forward.1} parent=1 // pred_fallthru
      _
    // Predicated region
    $region81: #{net_forward.1} parent=1 // pred_check
      _
    $region82: #{net_forward.1} parent=1 // pred_check_branch
      %411 = sbr.rel target = $region84
    $region83: #{net_forward.1} parent=1 // pred_region
      _
    $region84: #{net_forward.1} parent=1 // pred_fallthru
      _
    // Predicated region
    $region85: #{net_forward.1} parent=1 // pred_check
      _
    $region86: #{net_forward.1} parent=1 // pred_check_branch
      %414 = sbr.rel (0) target = $region88
    $region87: #{net_forward.1} parent=1 // pred_region
      %415 = vsyncadd [#allocation3], 18432
    $region88: #{net_forward.1} parent=1 // pred_fallthru
      _
    %v416 = vld [vmem:[%s0] sm:$0xff]
    %v417 = vld [vmem:[%s0 + $0x8] sm:$0xff]
    %v418 = vld [vmem:[%s0 + $0x10] sm:$0xff]
    %v419 = vld [vmem:[%s0 + $0x18] sm:$0xff]
    %v420 = vld [vmem:[%s0 + $0x20] sm:$0xff]
    %v421 = vld [vmem:[%s0 + $0x28] sm:$0xff]
    %v422 = vld [vmem:[%s0 + $0x30] sm:$0xff]
    %v423 = vld [vmem:[%s0 + $0x38] sm:$0xff]
    %v424 = vld [vmem:[%s0 + $0x40] sm:$0xff]
    %v425 = vld [vmem:[%s0 + $0x48] sm:$0xff]
    %v426 = vld [vmem:[%s0 + $0x50] sm:$0xff]
    %v427 = vld [vmem:[%s0 + $0x58] sm:$0xff]
    %v428 = vld [vmem:[%s0 + $0x60] sm:$0xff]
    %v429 = vld [vmem:[%s0 + $0x68] sm:$0xff]
    %v430 = vld [vmem:[%s0 + $0x70] sm:$0xff]
    %v431 = vld [vmem:[%s0 + $0x78] sm:$0xff]
    %v432 = vld [vmem:[%s0 + $0x80] sm:$0xff]
    %v433 = vld [vmem:[%s0 + $0x88] sm:$0xff]
    %v434 = vld [vmem:[%s0 + $0x90] sm:$0xff]
    %v435 = vld [vmem:[%s0 + $0x98] sm:$0xff]
    %v436 = vld [vmem:[%s0 + $0xa0] sm:$0xff]
    %v437 = vld [vmem:[%s0 + $0xa8] sm:$0xff]
    %v438 = vld [vmem:[%s0 + $0xb0] sm:$0xff]
    %v439 = vld [vmem:[%s0 + $0xb8] sm:$0xff]
    %v440 = vld [vmem:[%s0 + $0xc0] sm:$0xff]
    %v441 = vld [vmem:[%s0 + $0xc8] sm:$0xff]
    %v442 = vld [vmem:[%s0 + $0xd0] sm:$0xff]
    %v443 = vld [vmem:[%s0 + $0xd8] sm:$0xff]
    %v444 = vld [vmem:[%s0 + $0xe0] sm:$0xff]
    %v445 = vld [vmem:[%s0 + $0xe8] sm:$0xff]
    %v446 = vld [vmem:[%s0 + $0xf0] sm:$0xff]
    %v447 = vld [vmem:[%s0 + $0xf8] sm:$0xff]
    %v448 = vld [vmem:[%s0 + $0x100] sm:$0xff]
    %v449 = vld [vmem:[%s0 + $0x108] sm:$0xff]
    %v450 = vld [vmem:[%s0 + $0x110] sm:$0xff]
    %v451 = vld [vmem:[%s0 + $0x118] sm:$0xff]
    %v452 = vld [vmem:[%s0 + $0x120] sm:$0xff]
    %v453 = vld [vmem:[%s0 + $0x128] sm:$0xff]
    %v454 = vld [vmem:[%s0 + $0x130] sm:$0xff]
    %v455 = vld [vmem:[%s0 + $0x138] sm:$0xff]
    %v456 = vld [vmem:[%s0 + $0x140] sm:$0xff]
    %v457 = vld [vmem:[%s0 + $0x148] sm:$0xff]
    %v458 = vld [vmem:[%s0 + $0x150] sm:$0xff]
    %v459 = vld [vmem:[%s0 + $0x158] sm:$0xff]
    %v460 = vld [vmem:[%s0 + $0x160] sm:$0xff]
    %v461 = vld [vmem:[%s0 + $0x168] sm:$0xff]
    %v462 = vld [vmem:[%s0 + $0x170] sm:$0xff]
    %v463 = vld [vmem:[%s0 + $0x178] sm:$0xff]
    %v464 = vld [vmem:[%s0 + $0x180] sm:$0xff]
    %v465 = vld [vmem:[%s0 + $0x188] sm:$0xff]
    %v466 = vld [vmem:[%s0 + $0x190] sm:$0xff]
    %v467 = vld [vmem:[%s0 + $0x198] sm:$0xff]
    %v468 = vld [vmem:[%s0 + $0x1a0] sm:$0xff]
    %v469 = vld [vmem:[%s0 + $0x1a8] sm:$0xff]
    %v470 = vld [vmem:[%s0 + $0x1b0] sm:$0xff]
    %v471 = vld [vmem:[%s0 + $0x1b8] sm:$0xff]
    %v472 = vld [vmem:[%s0 + $0x1c0] sm:$0xff]
    %v473 = vld [vmem:[%s0 + $0x1c8] sm:$0xff]
    %v474 = vld [vmem:[%s0 + $0x1d0] sm:$0xff]
    %v475 = vld [vmem:[%s0 + $0x1d8] sm:$0xff]
    %v476 = vld [vmem:[%s0 + $0x1e0] sm:$0xff]
    %v477 = vld [vmem:[%s0 + $0x1e8] sm:$0xff]
    %v478 = vld [vmem:[%s0 + $0x1f0] sm:$0xff]
    %v479 = vld [vmem:[%s0 + $0x1f8] sm:$0xff]
    %v480 = vld [vmem:[%s0 + $0x200] sm:$0xff]
    %v481 = vld [vmem:[%s0 + $0x208] sm:$0xff]
    %v482 = vld [vmem:[%s0 + $0x210] sm:$0xff]
    %v483 = vld [vmem:[%s0 + $0x218] sm:$0xff]
    %v484 = vld [vmem:[%s0 + $0x220] sm:$0xff]
    %v485 = vld [vmem:[%s0 + $0x228] sm:$0xff]
    %v486 = vld [vmem:[%s0 + $0x230] sm:$0xff]
    %v487 = vld [vmem:[%s0 + $0x238] sm:$0xff]
    %v488 = vld [vmem:[%s1] sm:$0x7]
    %490 = vset.pattern.permute.xlu0 0
    %491 = vperm.xlu0 %490, 0.0
    %v492 = vpop.permute.xlu0 %491
    %495 = vset.pattern.permute.xlu0 0
    %496 = vperm.xlu0 %495, %v416
    %v497 = vpop.permute.xlu0 %496
    %500 = vset.pattern.permute.xlu0 0
    %501 = vperm.xlu0 %500, %v417
    %v502 = vpop.permute.xlu0 %501
    %505 = vset.pattern.permute.xlu0 0
    %506 = vperm.xlu0 %505, %v418
    %v507 = vpop.permute.xlu0 %506
    %510 = vset.pattern.permute.xlu0 0
    %511 = vperm.xlu0 %510, %v419
    %v512 = vpop.permute.xlu0 %511
    %515 = vset.pattern.permute.xlu0 0
    %516 = vperm.xlu0 %515, %v420
    %v517 = vpop.permute.xlu0 %516
    %520 = vset.pattern.permute.xlu0 0
    %521 = vperm.xlu0 %520, %v421
    %v522 = vpop.permute.xlu0 %521
    %525 = vset.pattern.permute.xlu0 0
    %526 = vperm.xlu0 %525, %v422
    %v527 = vpop.permute.xlu0 %526
    %530 = vset.pattern.permute.xlu0 0
    %531 = vperm.xlu0 %530, %v423
    %v532 = vpop.permute.xlu0 %531
    %535 = vset.pattern.permute.xlu0 0
    %536 = vperm.xlu0 %535, %v424
    %v537 = vpop.permute.xlu0 %536
    %540 = vset.pattern.permute.xlu0 0
    %541 = vperm.xlu0 %540, %v425
    %v542 = vpop.permute.xlu0 %541
    %545 = vset.pattern.permute.xlu0 0
    %546 = vperm.xlu0 %545, %v426
    %v547 = vpop.permute.xlu0 %546
    %550 = vset.pattern.permute.xlu0 0
    %551 = vperm.xlu0 %550, %v427
    %v552 = vpop.permute.xlu0 %551
    %555 = vset.pattern.permute.xlu0 0
    %556 = vperm.xlu0 %555, %v428
    %v557 = vpop.permute.xlu0 %556
    %560 = vset.pattern.permute.xlu0 0
    %561 = vperm.xlu0 %560, %v429
    %v562 = vpop.permute.xlu0 %561
    %565 = vset.pattern.permute.xlu0 0
    %566 = vperm.xlu0 %565, %v430
    %v567 = vpop.permute.xlu0 %566
    %570 = vset.pattern.permute.xlu0 0
    %571 = vperm.xlu0 %570, %v431
    %v572 = vpop.permute.xlu0 %571
    %575 = vset.pattern.permute.xlu0 0
    %576 = vperm.xlu0 %575, %v432
    %v577 = vpop.permute.xlu0 %576
    %580 = vset.pattern.permute.xlu0 0
    %581 = vperm.xlu0 %580, %v433
    %v582 = vpop.permute.xlu0 %581
    %585 = vset.pattern.permute.xlu0 0
    %586 = vperm.xlu0 %585, %v434
    %v587 = vpop.permute.xlu0 %586
    %590 = vset.pattern.permute.xlu0 0
    %591 = vperm.xlu0 %590, %v435
    %v592 = vpop.permute.xlu0 %591
    %595 = vset.pattern.permute.xlu0 0
    %596 = vperm.xlu0 %595, %v436
    %v597 = vpop.permute.xlu0 %596
    %600 = vset.pattern.permute.xlu0 0
    %601 = vperm.xlu0 %600, %v437
    %v602 = vpop.permute.xlu0 %601
    %605 = vset.pattern.permute.xlu0 0
    %606 = vperm.xlu0 %605, %v438
    %v607 = vpop.permute.xlu0 %606
    %610 = vset.pattern.permute.xlu0 0
    %611 = vperm.xlu0 %610, %v439
    %v612 = vpop.permute.xlu0 %611
    %615 = vset.pattern.permute.xlu0 0
    %616 = vperm.xlu0 %615, %v440
    %v617 = vpop.permute.xlu0 %616
    %620 = vset.pattern.permute.xlu0 0
    %621 = vperm.xlu0 %620, %v441
    %v622 = vpop.permute.xlu0 %621
    %625 = vset.pattern.permute.xlu0 0
    %626 = vperm.xlu0 %625, %v442
    %v627 = vpop.permute.xlu0 %626
    %630 = vset.pattern.permute.xlu0 0
    %631 = vperm.xlu0 %630, %v443
    %v632 = vpop.permute.xlu0 %631
    %635 = vset.pattern.permute.xlu0 0
    %636 = vperm.xlu0 %635, %v444
    %v637 = vpop.permute.xlu0 %636
    %640 = vset.pattern.permute.xlu0 0
    %641 = vperm.xlu0 %640, %v445
    %v642 = vpop.permute.xlu0 %641
    %645 = vset.pattern.permute.xlu0 0
    %646 = vperm.xlu0 %645, %v446
    %v647 = vpop.permute.xlu0 %646
    %650 = vset.pattern.permute.xlu0 0
    %651 = vperm.xlu0 %650, %v447
    %v652 = vpop.permute.xlu0 %651
    %655 = vset.pattern.permute.xlu0 0
    %656 = vperm.xlu0 %655, %v448
    %v657 = vpop.permute.xlu0 %656
    %660 = vset.pattern.permute.xlu0 0
    %661 = vperm.xlu0 %660, %v449
    %v662 = vpop.permute.xlu0 %661
    %665 = vset.pattern.permute.xlu0 0
    %666 = vperm.xlu0 %665, %v450
    %v667 = vpop.permute.xlu0 %666
    %670 = vset.pattern.permute.xlu0 0
    %671 = vperm.xlu0 %670, %v451
    %v672 = vpop.permute.xlu0 %671
    %675 = vset.pattern.permute.xlu0 0
    %676 = vperm.xlu0 %675, %v452
    %v677 = vpop.permute.xlu0 %676
    %680 = vset.pattern.permute.xlu0 0
    %681 = vperm.xlu0 %680, %v453
    %v682 = vpop.permute.xlu0 %681
    %685 = vset.pattern.permute.xlu0 0
    %686 = vperm.xlu0 %685, %v454
    %v687 = vpop.permute.xlu0 %686
    %690 = vset.pattern.permute.xlu0 0
    %691 = vperm.xlu0 %690, %v455
    %v692 = vpop.permute.xlu0 %691
    %695 = vset.pattern.permute.xlu0 0
    %696 = vperm.xlu0 %695, %v456
    %v697 = vpop.permute.xlu0 %696
    %700 = vset.pattern.permute.xlu0 0
    %701 = vperm.xlu0 %700, %v457
    %v702 = vpop.permute.xlu0 %701
    %705 = vset.pattern.permute.xlu0 0
    %706 = vperm.xlu0 %705, %v458
    %v707 = vpop.permute.xlu0 %706
    %710 = vset.pattern.permute.xlu0 0
    %711 = vperm.xlu0 %710, %v459
    %v712 = vpop.permute.xlu0 %711
    %715 = vset.pattern.permute.xlu0 0
    %716 = vperm.xlu0 %715, %v460
    %v717 = vpop.permute.xlu0 %716
    %720 = vset.pattern.permute.xlu0 0
    %721 = vperm.xlu0 %720, %v461
    %v722 = vpop.permute.xlu0 %721
    %725 = vset.pattern.permute.xlu0 0
    %726 = vperm.xlu0 %725, %v462
    %v727 = vpop.permute.xlu0 %726
    %730 = vset.pattern.permute.xlu0 0
    %731 = vperm.xlu0 %730, %v463
    %v732 = vpop.permute.xlu0 %731
    %735 = vset.pattern.permute.xlu0 0
    %736 = vperm.xlu0 %735, %v464
    %v737 = vpop.permute.xlu0 %736
    %740 = vset.pattern.permute.xlu0 0
    %741 = vperm.xlu0 %740, %v465
    %v742 = vpop.permute.xlu0 %741
    %745 = vset.pattern.permute.xlu0 0
    %746 = vperm.xlu0 %745, %v466
    %v747 = vpop.permute.xlu0 %746
    %750 = vset.pattern.permute.xlu0 0
    %751 = vperm.xlu0 %750, %v467
    %v752 = vpop.permute.xlu0 %751
    %755 = vset.pattern.permute.xlu0 0
    %756 = vperm.xlu0 %755, %v468
    %v757 = vpop.permute.xlu0 %756
    %760 = vset.pattern.permute.xlu0 0
    %761 = vperm.xlu0 %760, %v469
    %v762 = vpop.permute.xlu0 %761
    %765 = vset.pattern.permute.xlu0 0
    %766 = vperm.xlu0 %765, %v470
    %v767 = vpop.permute.xlu0 %766
    %770 = vset.pattern.permute.xlu0 0
    %771 = vperm.xlu0 %770, %v471
    %v772 = vpop.permute.xlu0 %771
    %775 = vset.pattern.permute.xlu0 0
    %776 = vperm.xlu0 %775, %v472
    %v777 = vpop.permute.xlu0 %776
    %780 = vset.pattern.permute.xlu0 0
    %781 = vperm.xlu0 %780, %v473
    %v782 = vpop.permute.xlu0 %781
    %785 = vset.pattern.permute.xlu0 0
    %786 = vperm.xlu0 %785, %v474
    %v787 = vpop.permute.xlu0 %786
    %790 = vset.pattern.permute.xlu0 0
    %791 = vperm.xlu0 %790, %v475
    %v792 = vpop.permute.xlu0 %791
    %795 = vset.pattern.permute.xlu0 0
    %796 = vperm.xlu0 %795, %v476
    %v797 = vpop.permute.xlu0 %796
    %800 = vset.pattern.permute.xlu0 0
    %801 = vperm.xlu0 %800, %v477
    %v802 = vpop.permute.xlu0 %801
    %805 = vset.pattern.permute.xlu0 0
    %806 = vperm.xlu0 %805, %v478
    %v807 = vpop.permute.xlu0 %806
    %810 = vset.pattern.permute.xlu0 0
    %811 = vperm.xlu0 %810, %v479
    %v812 = vpop.permute.xlu0 %811
    %815 = vset.pattern.permute.xlu0 0
    %816 = vperm.xlu0 %815, %v480
    %v817 = vpop.permute.xlu0 %816
    %820 = vset.pattern.permute.xlu0 0
    %821 = vperm.xlu0 %820, %v481
    %v822 = vpop.permute.xlu0 %821
    %825 = vset.pattern.permute.xlu0 0
    %826 = vperm.xlu0 %825, %v482
    %v827 = vpop.permute.xlu0 %826
    %830 = vset.pattern.permute.xlu0 0
    %831 = vperm.xlu0 %830, %v483
    %v832 = vpop.permute.xlu0 %831
    %835 = vset.pattern.permute.xlu0 0
    %836 = vperm.xlu0 %835, %v484
    %v837 = vpop.permute.xlu0 %836
    %840 = vset.pattern.permute.xlu0 0
    %841 = vperm.xlu0 %840, %v485
    %v842 = vpop.permute.xlu0 %841
    %845 = vset.pattern.permute.xlu0 0
    %846 = vperm.xlu0 %845, %v486
    %v847 = vpop.permute.xlu0 %846
    %v849 = vperm.slane %v488, 0
    %v850 = vmul.f32 %v492, %v849
    %v851 = vmul.f32 %v497, %v849
    %v852 = vmul.f32 %v502, %v849
    %v853 = vmul.f32 %v507, %v849
    %v854 = vmul.f32 %v512, %v849
    %v855 = vmul.f32 %v517, %v849
    %v856 = vmul.f32 %v522, %v849
    %v857 = vmul.f32 %v527, %v849
    %v858 = vmul.f32 %v532, %v849
    %v859 = vmul.f32 %v537, %v849
    %v860 = vmul.f32 %v542, %v849
    %v861 = vmul.f32 %v547, %v849
    %v862 = vmul.f32 %v552, %v849
    %v863 = vmul.f32 %v557, %v849
    %v864 = vmul.f32 %v562, %v849
    %v865 = vmul.f32 %v567, %v849
    %v866 = vmul.f32 %v572, %v849
    %v867 = vmul.f32 %v577, %v849
    %v868 = vmul.f32 %v582, %v849
    %v869 = vmul.f32 %v587, %v849
    %v870 = vmul.f32 %v592, %v849
    %v871 = vmul.f32 %v597, %v849
    %v872 = vmul.f32 %v602, %v849
    %v873 = vmul.f32 %v607, %v849
    %v874 = vmul.f32 %v612, %v849
    %v875 = vmul.f32 %v617, %v849
    %v876 = vmul.f32 %v622, %v849
    %v877 = vmul.f32 %v627, %v849
    %v878 = vmul.f32 %v632, %v849
    %v879 = vmul.f32 %v637, %v849
    %v880 = vmul.f32 %v642, %v849
    %v881 = vmul.f32 %v647, %v849
    %v882 = vmul.f32 %v652, %v849
    %v883 = vmul.f32 %v657, %v849
    %v884 = vmul.f32 %v662, %v849
    %v885 = vmul.f32 %v667, %v849
    %v886 = vmul.f32 %v672, %v849
    %v887 = vmul.f32 %v677, %v849
    %v888 = vmul.f32 %v682, %v849
    %v889 = vmul.f32 %v687, %v849
    %v890 = vmul.f32 %v692, %v849
    %v891 = vmul.f32 %v697, %v849
    %v892 = vmul.f32 %v702, %v849
    %v893 = vmul.f32 %v707, %v849
    %v894 = vmul.f32 %v712, %v849
    %v895 = vmul.f32 %v717, %v849
    %v896 = vmul.f32 %v722, %v849
    %v897 = vmul.f32 %v727, %v849
    %v898 = vmul.f32 %v732, %v849
    %v899 = vmul.f32 %v737, %v849
    %v900 = vmul.f32 %v742, %v849
    %v901 = vmul.f32 %v747, %v849
    %v902 = vmul.f32 %v752, %v849
    %v903 = vmul.f32 %v757, %v849
    %v904 = vmul.f32 %v762, %v849
    %v905 = vmul.f32 %v767, %v849
    %v906 = vmul.f32 %v772, %v849
    %v907 = vmul.f32 %v777, %v849
    %v908 = vmul.f32 %v782, %v849
    %v909 = vmul.f32 %v787, %v849
    %v910 = vmul.f32 %v792, %v849
    %v911 = vmul.f32 %v797, %v849
    %v912 = vmul.f32 %v802, %v849
    %v913 = vmul.f32 %v807, %v849
    %v914 = vmul.f32 %v812, %v849
    %v915 = vmul.f32 %v817, %v849
    %v916 = vmul.f32 %v822, %v849
    %v917 = vmul.f32 %v827, %v849
    %v918 = vmul.f32 %v832, %v849
    %v919 = vmul.f32 %v837, %v849
    %v920 = vmul.f32 %v842, %v849
    %v921 = vmul.f32 %v847, %v849
    %923 = vset.pattern.permute.xlu0 0
    %924 = vperm.xlu0 %923, %v487
    %v925 = vpop.permute.xlu0 %924
    %v927 = vperm.slane %v488, 1
    %v928 = vmul.f32 %v497, %v927
    %v929 = vmul.f32 %v502, %v927
    %v930 = vmul.f32 %v507, %v927
    %v931 = vmul.f32 %v512, %v927
    %v932 = vmul.f32 %v517, %v927
    %v933 = vmul.f32 %v522, %v927
    %v934 = vmul.f32 %v527, %v927
    %v935 = vmul.f32 %v532, %v927
    %v936 = vmul.f32 %v537, %v927
    %v937 = vmul.f32 %v542, %v927
    %v938 = vmul.f32 %v547, %v927
    %v939 = vmul.f32 %v552, %v927
    %v940 = vmul.f32 %v557, %v927
    %v941 = vmul.f32 %v562, %v927
    %v942 = vmul.f32 %v567, %v927
    %v943 = vmul.f32 %v572, %v927
    %v944 = vmul.f32 %v577, %v927
    %v945 = vmul.f32 %v582, %v927
    %v946 = vmul.f32 %v587, %v927
    %v947 = vmul.f32 %v592, %v927
    %v948 = vmul.f32 %v597, %v927
    %v949 = vmul.f32 %v602, %v927
    %v950 = vmul.f32 %v607, %v927
    %v951 = vmul.f32 %v612, %v927
    %v952 = vmul.f32 %v617, %v927
    %v953 = vmul.f32 %v622, %v927
    %v954 = vmul.f32 %v627, %v927
    %v955 = vmul.f32 %v632, %v927
    %v956 = vmul.f32 %v637, %v927
    %v957 = vmul.f32 %v642, %v927
    %v958 = vmul.f32 %v647, %v927
    %v959 = vmul.f32 %v652, %v927
    %v960 = vmul.f32 %v657, %v927
    %v961 = vmul.f32 %v662, %v927
    %v962 = vmul.f32 %v667, %v927
    %v963 = vmul.f32 %v672, %v927
    %v964 = vmul.f32 %v677, %v927
    %v965 = vmul.f32 %v682, %v927
    %v966 = vmul.f32 %v687, %v927
    %v967 = vmul.f32 %v692, %v927
    %v968 = vmul.f32 %v697, %v927
    %v969 = vmul.f32 %v702, %v927
    %v970 = vmul.f32 %v707, %v927
    %v971 = vmul.f32 %v712, %v927
    %v972 = vmul.f32 %v717, %v927
    %v973 = vmul.f32 %v722, %v927
    %v974 = vmul.f32 %v727, %v927
    %v975 = vmul.f32 %v732, %v927
    %v976 = vmul.f32 %v737, %v927
    %v977 = vmul.f32 %v742, %v927
    %v978 = vmul.f32 %v747, %v927
    %v979 = vmul.f32 %v752, %v927
    %v980 = vmul.f32 %v757, %v927
    %v981 = vmul.f32 %v762, %v927
    %v982 = vmul.f32 %v767, %v927
    %v983 = vmul.f32 %v772, %v927
    %v984 = vmul.f32 %v777, %v927
    %v985 = vmul.f32 %v782, %v927
    %v986 = vmul.f32 %v787, %v927
    %v987 = vmul.f32 %v792, %v927
    %v988 = vmul.f32 %v797, %v927
    %v989 = vmul.f32 %v802, %v927
    %v990 = vmul.f32 %v807, %v927
    %v991 = vmul.f32 %v812, %v927
    %v992 = vmul.f32 %v817, %v927
    %v993 = vmul.f32 %v822, %v927
    %v994 = vmul.f32 %v827, %v927
    %v995 = vmul.f32 %v832, %v927
    %v996 = vmul.f32 %v837, %v927
    %v997 = vmul.f32 %v842, %v927
    %v998 = vmul.f32 %v847, %v927
    %v999 = vmul.f32 %v925, %v927
    %v1000 = vadd.f32 %v850, %v928
    %v1001 = vadd.f32 %v851, %v929
    %v1002 = vadd.f32 %v852, %v930
    %v1003 = vadd.f32 %v853, %v931
    %v1004 = vadd.f32 %v854, %v932
    %v1005 = vadd.f32 %v855, %v933
    %v1006 = vadd.f32 %v856, %v934
    %v1007 = vadd.f32 %v857, %v935
    %v1008 = vadd.f32 %v858, %v936
    %v1009 = vadd.f32 %v859, %v937
    %v1010 = vadd.f32 %v860, %v938
    %v1011 = vadd.f32 %v861, %v939
    %v1012 = vadd.f32 %v862, %v940
    %v1013 = vadd.f32 %v863, %v941
    %v1014 = vadd.f32 %v864, %v942
    %v1015 = vadd.f32 %v865, %v943
    %v1016 = vadd.f32 %v866, %v944
    %v1017 = vadd.f32 %v867, %v945
    %v1018 = vadd.f32 %v868, %v946
    %v1019 = vadd.f32 %v869, %v947
    %v1020 = vadd.f32 %v870, %v948
    %v1021 = vadd.f32 %v871, %v949
    %v1022 = vadd.f32 %v872, %v950
    %v1023 = vadd.f32 %v873, %v951
    %v1024 = vadd.f32 %v874, %v952
    %v1025 = vadd.f32 %v875, %v953
    %v1026 = vadd.f32 %v876, %v954
    %v1027 = vadd.f32 %v877, %v955
    %v1028 = vadd.f32 %v878, %v956
    %v1029 = vadd.f32 %v879, %v957
    %v1030 = vadd.f32 %v880, %v958
    %v1031 = vadd.f32 %v881, %v959
    %v1032 = vadd.f32 %v882, %v960
    %v1033 = vadd.f32 %v883, %v961
    %v1034 = vadd.f32 %v884, %v962
    %v1035 = vadd.f32 %v885, %v963
    %v1036 = vadd.f32 %v886, %v964
    %v1037 = vadd.f32 %v887, %v965
    %v1038 = vadd.f32 %v888, %v966
    %v1039 = vadd.f32 %v889, %v967
    %v1040 = vadd.f32 %v890, %v968
    %v1041 = vadd.f32 %v891, %v969
    %v1042 = vadd.f32 %v892, %v970
    %v1043 = vadd.f32 %v893, %v971
    %v1044 = vadd.f32 %v894, %v972
    %v1045 = vadd.f32 %v895, %v973
    %v1046 = vadd.f32 %v896, %v974
    %v1047 = vadd.f32 %v897, %v975
    %v1048 = vadd.f32 %v898, %v976
    %v1049 = vadd.f32 %v899, %v977
    %v1050 = vadd.f32 %v900, %v978
    %v1051 = vadd.f32 %v901, %v979
    %v1052 = vadd.f32 %v902, %v980
    %v1053 = vadd.f32 %v903, %v981
    %v1054 = vadd.f32 %v904, %v982
    %v1055 = vadd.f32 %v905, %v983
    %v1056 = vadd.f32 %v906, %v984
    %v1057 = vadd.f32 %v907, %v985
    %v1058 = vadd.f32 %v908, %v986
    %v1059 = vadd.f32 %v909, %v987
    %v1060 = vadd.f32 %v910, %v988
    %v1061 = vadd.f32 %v911, %v989
    %v1062 = vadd.f32 %v912, %v990
    %v1063 = vadd.f32 %v913, %v991
    %v1064 = vadd.f32 %v914, %v992
    %v1065 = vadd.f32 %v915, %v993
    %v1066 = vadd.f32 %v916, %v994
    %v1067 = vadd.f32 %v917, %v995
    %v1068 = vadd.f32 %v918, %v996
    %v1069 = vadd.f32 %v919, %v997
    %v1070 = vadd.f32 %v920, %v998
    %v1071 = vadd.f32 %v921, %v999
    %v1072 = vperm.slane %v488, 2
    %v1073 = vmul.f32 %v502, %v1072
    %v1074 = vmul.f32 %v507, %v1072
    %v1075 = vmul.f32 %v512, %v1072
    %v1076 = vmul.f32 %v517, %v1072
    %v1077 = vmul.f32 %v522, %v1072
    %v1078 = vmul.f32 %v527, %v1072
    %v1079 = vmul.f32 %v532, %v1072
    %v1080 = vmul.f32 %v537, %v1072
    %v1081 = vmul.f32 %v542, %v1072
    %v1082 = vmul.f32 %v547, %v1072
    %v1083 = vmul.f32 %v552, %v1072
    %v1084 = vmul.f32 %v557, %v1072
    %v1085 = vmul.f32 %v562, %v1072
    %v1086 = vmul.f32 %v567, %v1072
    %v1087 = vmul.f32 %v572, %v1072
    %v1088 = vmul.f32 %v577, %v1072
    %v1089 = vmul.f32 %v582, %v1072
    %v1090 = vmul.f32 %v587, %v1072
    %v1091 = vmul.f32 %v592, %v1072
    %v1092 = vmul.f32 %v597, %v1072
    %v1093 = vmul.f32 %v602, %v1072
    %v1094 = vmul.f32 %v607, %v1072
    %v1095 = vmul.f32 %v612, %v1072
    %v1096 = vmul.f32 %v617, %v1072
    %v1097 = vmul.f32 %v622, %v1072
    %v1098 = vmul.f32 %v627, %v1072
    %v1099 = vmul.f32 %v632, %v1072
    %v1100 = vmul.f32 %v637, %v1072
    %v1101 = vmul.f32 %v642, %v1072
    %v1102 = vmul.f32 %v647, %v1072
    %v1103 = vmul.f32 %v652, %v1072
    %v1104 = vmul.f32 %v657, %v1072
    %v1105 = vmul.f32 %v662, %v1072
    %v1106 = vmul.f32 %v667, %v1072
    %v1107 = vmul.f32 %v672, %v1072
    %v1108 = vmul.f32 %v677, %v1072
    %v1109 = vmul.f32 %v682, %v1072
    %v1110 = vmul.f32 %v687, %v1072
    %v1111 = vmul.f32 %v692, %v1072
    %v1112 = vmul.f32 %v697, %v1072
    %v1113 = vmul.f32 %v702, %v1072
    %v1114 = vmul.f32 %v707, %v1072
    %v1115 = vmul.f32 %v712, %v1072
    %v1116 = vmul.f32 %v717, %v1072
    %v1117 = vmul.f32 %v722, %v1072
    %v1118 = vmul.f32 %v727, %v1072
    %v1119 = vmul.f32 %v732, %v1072
    %v1120 = vmul.f32 %v737, %v1072
    %v1121 = vmul.f32 %v742, %v1072
    %v1122 = vmul.f32 %v747, %v1072
    %v1123 = vmul.f32 %v752, %v1072
    %v1124 = vmul.f32 %v757, %v1072
    %v1125 = vmul.f32 %v762, %v1072
    %v1126 = vmul.f32 %v767, %v1072
    %v1127 = vmul.f32 %v772, %v1072
    %v1128 = vmul.f32 %v777, %v1072
    %v1129 = vmul.f32 %v782, %v1072
    %v1130 = vmul.f32 %v787, %v1072
    %v1131 = vmul.f32 %v792, %v1072
    %v1132 = vmul.f32 %v797, %v1072
    %v1133 = vmul.f32 %v802, %v1072
    %v1134 = vmul.f32 %v807, %v1072
    %v1135 = vmul.f32 %v812, %v1072
    %v1136 = vmul.f32 %v817, %v1072
    %v1137 = vmul.f32 %v822, %v1072
    %v1138 = vmul.f32 %v827, %v1072
    %v1139 = vmul.f32 %v832, %v1072
    %v1140 = vmul.f32 %v837, %v1072
    %v1141 = vmul.f32 %v842, %v1072
    %v1142 = vmul.f32 %v847, %v1072
    %v1143 = vmul.f32 %v925, %v1072
    %v1144 = vmul.f32 %v492, %v1072
    %v1145 = vadd.f32 %v1000, %v1073
    %v1146 = vadd.f32 %v1001, %v1074
    %v1147 = vadd.f32 %v1002, %v1075
    %v1148 = vadd.f32 %v1003, %v1076
    %v1149 = vadd.f32 %v1004, %v1077
    %v1150 = vadd.f32 %v1005, %v1078
    %v1151 = vadd.f32 %v1006, %v1079
    %v1152 = vadd.f32 %v1007, %v1080
    %v1153 = vadd.f32 %v1008, %v1081
    %v1154 = vadd.f32 %v1009, %v1082
    %v1155 = vadd.f32 %v1010, %v1083
    %v1156 = vadd.f32 %v1011, %v1084
    %v1157 = vadd.f32 %v1012, %v1085
    %v1158 = vadd.f32 %v1013, %v1086
    %v1159 = vadd.f32 %v1014, %v1087
    %v1160 = vadd.f32 %v1015, %v1088
    %v1161 = vadd.f32 %v1016, %v1089
    %v1162 = vadd.f32 %v1017, %v1090
    %v1163 = vadd.f32 %v1018, %v1091
    %v1164 = vadd.f32 %v1019, %v1092
    %v1165 = vadd.f32 %v1020, %v1093
    %v1166 = vadd.f32 %v1021, %v1094
    %v1167 = vadd.f32 %v1022, %v1095
    %v1168 = vadd.f32 %v1023, %v1096
    %v1169 = vadd.f32 %v1024, %v1097
    %v1170 = vadd.f32 %v1025, %v1098
    %v1171 = vadd.f32 %v1026, %v1099
    %v1172 = vadd.f32 %v1027, %v1100
    %v1173 = vadd.f32 %v1028, %v1101
    %v1174 = vadd.f32 %v1029, %v1102
    %v1175 = vadd.f32 %v1030, %v1103
    %v1176 = vadd.f32 %v1031, %v1104
    %v1177 = vadd.f32 %v1032, %v1105
    %v1178 = vadd.f32 %v1033, %v1106
    %v1179 = vadd.f32 %v1034, %v1107
    %v1180 = vadd.f32 %v1035, %v1108
    %v1181 = vadd.f32 %v1036, %v1109
    %v1182 = vadd.f32 %v1037, %v1110
    %v1183 = vadd.f32 %v1038, %v1111
    %v1184 = vadd.f32 %v1039, %v1112
    %v1185 = vadd.f32 %v1040, %v1113
    %v1186 = vadd.f32 %v1041, %v1114
    %v1187 = vadd.f32 %v1042, %v1115
    %v1188 = vadd.f32 %v1043, %v1116
    %v1189 = vadd.f32 %v1044, %v1117
    %v1190 = vadd.f32 %v1045, %v1118
    %v1191 = vadd.f32 %v1046, %v1119
    %v1192 = vadd.f32 %v1047, %v1120
    %v1193 = vadd.f32 %v1048, %v1121
    %v1194 = vadd.f32 %v1049, %v1122
    %v1195 = vadd.f32 %v1050, %v1123
    %v1196 = vadd.f32 %v1051, %v1124
    %v1197 = vadd.f32 %v1052, %v1125
    %v1198 = vadd.f32 %v1053, %v1126
    %v1199 = vadd.f32 %v1054, %v1127
    %v1200 = vadd.f32 %v1055, %v1128
    %v1201 = vadd.f32 %v1056, %v1129
    %v1202 = vadd.f32 %v1057, %v1130
    %v1203 = vadd.f32 %v1058, %v1131
    %v1204 = vadd.f32 %v1059, %v1132
    %v1205 = vadd.f32 %v1060, %v1133
    %v1206 = vadd.f32 %v1061, %v1134
    %v1207 = vadd.f32 %v1062, %v1135
    %v1208 = vadd.f32 %v1063, %v1136
    %v1209 = vadd.f32 %v1064, %v1137
    %v1210 = vadd.f32 %v1065, %v1138
    %v1211 = vadd.f32 %v1066, %v1139
    %v1212 = vadd.f32 %v1067, %v1140
    %v1213 = vadd.f32 %v1068, %v1141
    %v1214 = vadd.f32 %v1069, %v1142
    %v1215 = vadd.f32 %v1070, %v1143
    %v1216 = vadd.f32 %v1071, %v1144
    %v1217 = vld [vmem:[%s2] sm:$0x1]
    %v1219 = vperm.slane %v1217, 0
    %v1221 = vadd.f32 %v1145, %v1219
    %v1222 = vadd.f32 %v1146, %v1219
    %v1223 = vadd.f32 %v1147, %v1219
    %v1224 = vadd.f32 %v1148, %v1219
    %v1225 = vadd.f32 %v1149, %v1219
    %v1226 = vadd.f32 %v1150, %v1219
    %v1227 = vadd.f32 %v1151, %v1219
    %v1228 = vadd.f32 %v1152, %v1219
    %v1229 = vadd.f32 %v1153, %v1219
    %v1230 = vadd.f32 %v1154, %v1219
    %v1231 = vadd.f32 %v1155, %v1219
    %v1232 = vadd.f32 %v1156, %v1219
    %v1233 = vadd.f32 %v1157, %v1219
    %v1234 = vadd.f32 %v1158, %v1219
    %v1235 = vadd.f32 %v1159, %v1219
    %v1236 = vadd.f32 %v1160, %v1219
    %v1237 = vadd.f32 %v1161, %v1219
    %v1238 = vadd.f32 %v1162, %v1219
    %v1239 = vadd.f32 %v1163, %v1219
    %v1240 = vadd.f32 %v1164, %v1219
    %v1241 = vadd.f32 %v1165, %v1219
    %v1242 = vadd.f32 %v1166, %v1219
    %v1243 = vadd.f32 %v1167, %v1219
    %v1244 = vadd.f32 %v1168, %v1219
    %v1245 = vadd.f32 %v1169, %v1219
    %v1246 = vadd.f32 %v1170, %v1219
    %v1247 = vadd.f32 %v1171, %v1219
    %v1248 = vadd.f32 %v1172, %v1219
    %v1249 = vadd.f32 %v1173, %v1219
    %v1250 = vadd.f32 %v1174, %v1219
    %v1251 = vadd.f32 %v1175, %v1219
    %v1252 = vadd.f32 %v1176, %v1219
    %v1253 = vadd.f32 %v1177, %v1219
    %v1254 = vadd.f32 %v1178, %v1219
    %v1255 = vadd.f32 %v1179, %v1219
    %v1256 = vadd.f32 %v1180, %v1219
    %v1257 = vadd.f32 %v1181, %v1219
    %v1258 = vadd.f32 %v1182, %v1219
    %v1259 = vadd.f32 %v1183, %v1219
    %v1260 = vadd.f32 %v1184, %v1219
    %v1261 = vadd.f32 %v1185, %v1219
    %v1262 = vadd.f32 %v1186, %v1219
    %v1263 = vadd.f32 %v1187, %v1219
    %v1264 = vadd.f32 %v1188, %v1219
    %v1265 = vadd.f32 %v1189, %v1219
    %v1266 = vadd.f32 %v1190, %v1219
    %v1267 = vadd.f32 %v1191, %v1219
    %v1268 = vadd.f32 %v1192, %v1219
    %v1269 = vadd.f32 %v1193, %v1219
    %v1270 = vadd.f32 %v1194, %v1219
    %v1271 = vadd.f32 %v1195, %v1219
    %v1272 = vadd.f32 %v1196, %v1219
    %v1273 = vadd.f32 %v1197, %v1219
    %v1274 = vadd.f32 %v1198, %v1219
    %v1275 = vadd.f32 %v1199, %v1219
    %v1276 = vadd.f32 %v1200, %v1219
    %v1277 = vadd.f32 %v1201, %v1219
    %v1278 = vadd.f32 %v1202, %v1219
    %v1279 = vadd.f32 %v1203, %v1219
    %v1280 = vadd.f32 %v1204, %v1219
    %v1281 = vadd.f32 %v1205, %v1219
    %v1282 = vadd.f32 %v1206, %v1219
    %v1283 = vadd.f32 %v1207, %v1219
    %v1284 = vadd.f32 %v1208, %v1219
    %v1285 = vadd.f32 %v1209, %v1219
    %v1286 = vadd.f32 %v1210, %v1219
    %v1287 = vadd.f32 %v1211, %v1219
    %v1288 = vadd.f32 %v1212, %v1219
    %v1289 = vadd.f32 %v1213, %v1219
    %v1290 = vadd.f32 %v1214, %v1219
    %v1291 = vadd.f32 %v1215, %v1219
    %v1292 = vadd.f32 %v1216, %v1219
    %v1293 = vmax.f32 %v1221, 0.0
    %v1294 = vmax.f32 %v1222, 0.0
    %v1295 = vmax.f32 %v1223, 0.0
    %v1296 = vmax.f32 %v1224, 0.0
    %v1297 = vmax.f32 %v1225, 0.0
    %v1298 = vmax.f32 %v1226, 0.0
    %v1299 = vmax.f32 %v1227, 0.0
    %v1300 = vmax.f32 %v1228, 0.0
    %v1301 = vmax.f32 %v1229, 0.0
    %v1302 = vmax.f32 %v1230, 0.0
    %v1303 = vmax.f32 %v1231, 0.0
    %v1304 = vmax.f32 %v1232, 0.0
    %v1305 = vmax.f32 %v1233, 0.0
    %v1306 = vmax.f32 %v1234, 0.0
    %v1307 = vmax.f32 %v1235, 0.0
    %v1308 = vmax.f32 %v1236, 0.0
    %v1309 = vmax.f32 %v1237, 0.0
    %v1310 = vmax.f32 %v1238, 0.0
    %v1311 = vmax.f32 %v1239, 0.0
    %v1312 = vmax.f32 %v1240, 0.0
    %v1313 = vmax.f32 %v1241, 0.0
    %v1314 = vmax.f32 %v1242, 0.0
    %v1315 = vmax.f32 %v1243, 0.0
    %v1316 = vmax.f32 %v1244, 0.0
    %v1317 = vmax.f32 %v1245, 0.0
    %v1318 = vmax.f32 %v1246, 0.0
    %v1319 = vmax.f32 %v1247, 0.0
    %v1320 = vmax.f32 %v1248, 0.0
    %v1321 = vmax.f32 %v1249, 0.0
    %v1322 = vmax.f32 %v1250, 0.0
    %v1323 = vmax.f32 %v1251, 0.0
    %v1324 = vmax.f32 %v1252, 0.0
    %v1325 = vmax.f32 %v1253, 0.0
    %v1326 = vmax.f32 %v1254, 0.0
    %v1327 = vmax.f32 %v1255, 0.0
    %v1328 = vmax.f32 %v1256, 0.0
    %v1329 = vmax.f32 %v1257, 0.0
    %v1330 = vmax.f32 %v1258, 0.0
    %v1331 = vmax.f32 %v1259, 0.0
    %v1332 = vmax.f32 %v1260, 0.0
    %v1333 = vmax.f32 %v1261, 0.0
    %v1334 = vmax.f32 %v1262, 0.0
    %v1335 = vmax.f32 %v1263, 0.0
    %v1336 = vmax.f32 %v1264, 0.0
    %v1337 = vmax.f32 %v1265, 0.0
    %v1338 = vmax.f32 %v1266, 0.0
    %v1339 = vmax.f32 %v1267, 0.0
    %v1340 = vmax.f32 %v1268, 0.0
    %v1341 = vmax.f32 %v1269, 0.0
    %v1342 = vmax.f32 %v1270, 0.0
    %v1343 = vmax.f32 %v1271, 0.0
    %v1344 = vmax.f32 %v1272, 0.0
    %v1345 = vmax.f32 %v1273, 0.0
    %v1346 = vmax.f32 %v1274, 0.0
    %v1347 = vmax.f32 %v1275, 0.0
    %v1348 = vmax.f32 %v1276, 0.0
    %v1349 = vmax.f32 %v1277, 0.0
    %v1350 = vmax.f32 %v1278, 0.0
    %v1351 = vmax.f32 %v1279, 0.0
    %v1352 = vmax.f32 %v1280, 0.0
    %v1353 = vmax.f32 %v1281, 0.0
    %v1354 = vmax.f32 %v1282, 0.0
    %v1355 = vmax.f32 %v1283, 0.0
    %v1356 = vmax.f32 %v1284, 0.0
    %v1357 = vmax.f32 %v1285, 0.0
    %v1358 = vmax.f32 %v1286, 0.0
    %v1359 = vmax.f32 %v1287, 0.0
    %v1360 = vmax.f32 %v1288, 0.0
    %v1361 = vmax.f32 %v1289, 0.0
    %v1362 = vmax.f32 %v1290, 0.0
    %v1363 = vmax.f32 %v1291, 0.0
    %v1364 = vmax.f32 %v1292, 0.0
    %v1365 = vmax.f32 %v1293, %v1294
    %v1366 = vmax.f32 %v1295, %v1296
    %v1367 = vmax.f32 %v1297, %v1298
    %v1368 = vmax.f32 %v1299, %v1300
    %v1369 = vmax.f32 %v1301, %v1302
    %v1370 = vmax.f32 %v1303, %v1304
    %v1371 = vmax.f32 %v1305, %v1306
    %v1372 = vmax.f32 %v1307, %v1308
    %v1373 = vmax.f32 %v1309, %v1310
    %v1374 = vmax.f32 %v1311, %v1312
    %v1375 = vmax.f32 %v1313, %v1314
    %v1376 = vmax.f32 %v1315, %v1316
    %v1377 = vmax.f32 %v1317, %v1318
    %v1378 = vmax.f32 %v1319, %v1320
    %v1379 = vmax.f32 %v1321, %v1322
    %v1380 = vmax.f32 %v1323, %v1324
    %v1381 = vmax.f32 %v1325, %v1326
    %v1382 = vmax.f32 %v1327, %v1328
    %v1383 = vmax.f32 %v1329, %v1330
    %v1384 = vmax.f32 %v1331, %v1332
    %v1385 = vmax.f32 %v1333, %v1334
    %v1386 = vmax.f32 %v1335, %v1336
    %v1387 = vmax.f32 %v1337, %v1338
    %v1388 = vmax.f32 %v1339, %v1340
    %v1389 = vmax.f32 %v1341, %v1342
    %v1390 = vmax.f32 %v1343, %v1344
    %v1391 = vmax.f32 %v1345, %v1346
    %v1392 = vmax.f32 %v1347, %v1348
    %v1393 = vmax.f32 %v1349, %v1350
    %v1394 = vmax.f32 %v1351, %v1352
    %v1395 = vmax.f32 %v1353, %v1354
    %v1396 = vmax.f32 %v1355, %v1356
    %v1397 = vmax.f32 %v1357, %v1358
    %v1398 = vmax.f32 %v1359, %v1360
    %v1399 = vmax.f32 %v1361, %v1362
    %v1400 = vmax.f32 %v1363, %v1364
    %1437 = vrot.lane.b32.xlu0 %v1365, 32
    %v1438 = vpop.permute.xlu0 %1437
    %1439 = vrot.lane.b32.xlu0 %v1366, 32
    %v1440 = vpop.permute.xlu0 %1439
    %1441 = vrot.lane.b32.xlu0 %v1367, 32
    %v1442 = vpop.permute.xlu0 %1441
    %1443 = vrot.lane.b32.xlu0 %v1368, 32
    %v1444 = vpop.permute.xlu0 %1443
    %1445 = vrot.lane.b32.xlu0 %v1369, 32
    %v1446 = vpop.permute.xlu0 %1445
    %1447 = vrot.lane.b32.xlu0 %v1370, 32
    %v1448 = vpop.permute.xlu0 %1447
    %1449 = vrot.lane.b32.xlu0 %v1371, 32
    %v1450 = vpop.permute.xlu0 %1449
    %1451 = vrot.lane.b32.xlu0 %v1372, 32
    %v1452 = vpop.permute.xlu0 %1451
    %1453 = vrot.lane.b32.xlu0 %v1373, 32
    %v1454 = vpop.permute.xlu0 %1453
    %1455 = vrot.lane.b32.xlu0 %v1374, 32
    %v1456 = vpop.permute.xlu0 %1455
    %1457 = vrot.lane.b32.xlu0 %v1375, 32
    %v1458 = vpop.permute.xlu0 %1457
    %1459 = vrot.lane.b32.xlu0 %v1376, 32
    %v1460 = vpop.permute.xlu0 %1459
    %1461 = vrot.lane.b32.xlu0 %v1377, 32
    %v1462 = vpop.permute.xlu0 %1461
    %1463 = vrot.lane.b32.xlu0 %v1378, 32
    %v1464 = vpop.permute.xlu0 %1463
    %1465 = vrot.lane.b32.xlu0 %v1379, 32
    %v1466 = vpop.permute.xlu0 %1465
    %1467 = vrot.lane.b32.xlu0 %v1380, 32
    %v1468 = vpop.permute.xlu0 %1467
    %1469 = vrot.lane.b32.xlu0 %v1381, 32
    %v1470 = vpop.permute.xlu0 %1469
    %1471 = vrot.lane.b32.xlu0 %v1382, 32
    %v1472 = vpop.permute.xlu0 %1471
    %1473 = vrot.lane.b32.xlu0 %v1383, 32
    %v1474 = vpop.permute.xlu0 %1473
    %1475 = vrot.lane.b32.xlu0 %v1384, 32
    %v1476 = vpop.permute.xlu0 %1475
    %1477 = vrot.lane.b32.xlu0 %v1385, 32
    %v1478 = vpop.permute.xlu0 %1477
    %1479 = vrot.lane.b32.xlu0 %v1386, 32
    %v1480 = vpop.permute.xlu0 %1479
    %1481 = vrot.lane.b32.xlu0 %v1387, 32
    %v1482 = vpop.permute.xlu0 %1481
    %1483 = vrot.lane.b32.xlu0 %v1388, 32
    %v1484 = vpop.permute.xlu0 %1483
    %1485 = vrot.lane.b32.xlu0 %v1389, 32
    %v1486 = vpop.permute.xlu0 %1485
    %1487 = vrot.lane.b32.xlu0 %v1390, 32
    %v1488 = vpop.permute.xlu0 %1487
    %1489 = vrot.lane.b32.xlu0 %v1391, 32
    %v1490 = vpop.permute.xlu0 %1489
    %1491 = vrot.lane.b32.xlu0 %v1392, 32
    %v1492 = vpop.permute.xlu0 %1491
    %1493 = vrot.lane.b32.xlu0 %v1393, 32
    %v1494 = vpop.permute.xlu0 %1493
    %1495 = vrot.lane.b32.xlu0 %v1394, 32
    %v1496 = vpop.permute.xlu0 %1495
    %1497 = vrot.lane.b32.xlu0 %v1395, 32
    %v1498 = vpop.permute.xlu0 %1497
    %1499 = vrot.lane.b32.xlu0 %v1396, 32
    %v1500 = vpop.permute.xlu0 %1499
    %1501 = vrot.lane.b32.xlu0 %v1397, 32
    %v1502 = vpop.permute.xlu0 %1501
    %1503 = vrot.lane.b32.xlu0 %v1398, 32
    %v1504 = vpop.permute.xlu0 %1503
    %1505 = vrot.lane.b32.xlu0 %v1399, 32
    %v1506 = vpop.permute.xlu0 %1505
    %1507 = vrot.lane.b32.xlu0 %v1400, 32
    %v1508 = vpop.permute.xlu0 %1507
    %1545 = vrot.lane.b32.xlu0 %v1366, 64
    %v1546 = vpop.permute.xlu0 %1545
    %1547 = vrot.lane.b32.xlu0 %v1367, 64
    %v1548 = vpop.permute.xlu0 %1547
    %1549 = vrot.lane.b32.xlu0 %v1368, 64
    %v1550 = vpop.permute.xlu0 %1549
    %1551 = vrot.lane.b32.xlu0 %v1369, 64
    %v1552 = vpop.permute.xlu0 %1551
    %1553 = vrot.lane.b32.xlu0 %v1370, 64
    %v1554 = vpop.permute.xlu0 %1553
    %1555 = vrot.lane.b32.xlu0 %v1371, 64
    %v1556 = vpop.permute.xlu0 %1555
    %1557 = vrot.lane.b32.xlu0 %v1372, 64
    %v1558 = vpop.permute.xlu0 %1557
    %1559 = vrot.lane.b32.xlu0 %v1373, 64
    %v1560 = vpop.permute.xlu0 %1559
    %1561 = vrot.lane.b32.xlu0 %v1374, 64
    %v1562 = vpop.permute.xlu0 %1561
    %1563 = vrot.lane.b32.xlu0 %v1375, 64
    %v1564 = vpop.permute.xlu0 %1563
    %1565 = vrot.lane.b32.xlu0 %v1376, 64
    %v1566 = vpop.permute.xlu0 %1565
    %1567 = vrot.lane.b32.xlu0 %v1377, 64
    %v1568 = vpop.permute.xlu0 %1567
    %1569 = vrot.lane.b32.xlu0 %v1378, 64
    %v1570 = vpop.permute.xlu0 %1569
    %1571 = vrot.lane.b32.xlu0 %v1379, 64
    %v1572 = vpop.permute.xlu0 %1571
    %1573 = vrot.lane.b32.xlu0 %v1380, 64
    %v1574 = vpop.permute.xlu0 %1573
    %1575 = vrot.lane.b32.xlu0 %v1381, 64
    %v1576 = vpop.permute.xlu0 %1575
    %1577 = vrot.lane.b32.xlu0 %v1382, 64
    %v1578 = vpop.permute.xlu0 %1577
    %1579 = vrot.lane.b32.xlu0 %v1383, 64
    %v1580 = vpop.permute.xlu0 %1579
    %1581 = vrot.lane.b32.xlu0 %v1384, 64
    %v1582 = vpop.permute.xlu0 %1581
    %1583 = vrot.lane.b32.xlu0 %v1385, 64
    %v1584 = vpop.permute.xlu0 %1583
    %1585 = vrot.lane.b32.xlu0 %v1386, 64
    %v1586 = vpop.permute.xlu0 %1585
    %1587 = vrot.lane.b32.xlu0 %v1387, 64
    %v1588 = vpop.permute.xlu0 %1587
    %1589 = vrot.lane.b32.xlu0 %v1388, 64
    %v1590 = vpop.permute.xlu0 %1589
    %1591 = vrot.lane.b32.xlu0 %v1389, 64
    %v1592 = vpop.permute.xlu0 %1591
    %1593 = vrot.lane.b32.xlu0 %v1390, 64
    %v1594 = vpop.permute.xlu0 %1593
    %1595 = vrot.lane.b32.xlu0 %v1391, 64
    %v1596 = vpop.permute.xlu0 %1595
    %1597 = vrot.lane.b32.xlu0 %v1392, 64
    %v1598 = vpop.permute.xlu0 %1597
    %1599 = vrot.lane.b32.xlu0 %v1393, 64
    %v1600 = vpop.permute.xlu0 %1599
    %1601 = vrot.lane.b32.xlu0 %v1394, 64
    %v1602 = vpop.permute.xlu0 %1601
    %1603 = vrot.lane.b32.xlu0 %v1395, 64
    %v1604 = vpop.permute.xlu0 %1603
    %1605 = vrot.lane.b32.xlu0 %v1396, 64
    %v1606 = vpop.permute.xlu0 %1605
    %1607 = vrot.lane.b32.xlu0 %v1397, 64
    %v1608 = vpop.permute.xlu0 %1607
    %1609 = vrot.lane.b32.xlu0 %v1398, 64
    %v1610 = vpop.permute.xlu0 %1609
    %1611 = vrot.lane.b32.xlu0 %v1399, 64
    %v1612 = vpop.permute.xlu0 %1611
    %1613 = vrot.lane.b32.xlu0 %v1400, 64
    %v1614 = vpop.permute.xlu0 %1613
    %1615 = vrot.lane.b32.xlu0 0.0, 64
    %v1616 = vpop.permute.xlu0 %1615
    %vm1653 = vcmask 261120
    %v1654 = vsel %vm1653, 0.0, %v1438
    %v1655 = vsel %vm1653, %v1365, %v1440
    %v1656 = vsel %vm1653, %v1366, %v1442
    %v1657 = vsel %vm1653, %v1367, %v1444
    %v1658 = vsel %vm1653, %v1368, %v1446
    %v1659 = vsel %vm1653, %v1369, %v1448
    %v1660 = vsel %vm1653, %v1370, %v1450
    %v1661 = vsel %vm1653, %v1371, %v1452
    %v1662 = vsel %vm1653, %v1372, %v1454
    %v1663 = vsel %vm1653, %v1373, %v1456
    %v1664 = vsel %vm1653, %v1374, %v1458
    %v1665 = vsel %vm1653, %v1375, %v1460
    %v1666 = vsel %vm1653, %v1376, %v1462
    %v1667 = vsel %vm1653, %v1377, %v1464
    %v1668 = vsel %vm1653, %v1378, %v1466
    %v1669 = vsel %vm1653, %v1379, %v1468
    %v1670 = vsel %vm1653, %v1380, %v1470
    %v1671 = vsel %vm1653, %v1381, %v1472
    %v1672 = vsel %vm1653, %v1382, %v1474
    %v1673 = vsel %vm1653, %v1383, %v1476
    %v1674 = vsel %vm1653, %v1384, %v1478
    %v1675 = vsel %vm1653, %v1385, %v1480
    %v1676 = vsel %vm1653, %v1386, %v1482
    %v1677 = vsel %vm1653, %v1387, %v1484
    %v1678 = vsel %vm1653, %v1388, %v1486
    %v1679 = vsel %vm1653, %v1389, %v1488
    %v1680 = vsel %vm1653, %v1390, %v1490
    %v1681 = vsel %vm1653, %v1391, %v1492
    %v1682 = vsel %vm1653, %v1392, %v1494
    %v1683 = vsel %vm1653, %v1393, %v1496
    %v1684 = vsel %vm1653, %v1394, %v1498
    %v1685 = vsel %vm1653, %v1395, %v1500
    %v1686 = vsel %vm1653, %v1396, %v1502
    %v1687 = vsel %vm1653, %v1397, %v1504
    %v1688 = vsel %vm1653, %v1398, %v1506
    %v1689 = vsel %vm1653, %v1399, %v1508
    %vm1690 = vcmask 523264
    %v1691 = vsel %vm1690, %v1654, %v1546
    %v1692 = vsel %vm1690, %v1655, %v1548
    %v1693 = vsel %vm1690, %v1656, %v1550
    %v1694 = vsel %vm1690, %v1657, %v1552
    %v1695 = vsel %vm1690, %v1658, %v1554
    %v1696 = vsel %vm1690, %v1659, %v1556
    %v1697 = vsel %vm1690, %v1660, %v1558
    %v1698 = vsel %vm1690, %v1661, %v1560
    %v1699 = vsel %vm1690, %v1662, %v1562
    %v1700 = vsel %vm1690, %v1663, %v1564
    %v1701 = vsel %vm1690, %v1664, %v1566
    %v1702 = vsel %vm1690, %v1665, %v1568
    %v1703 = vsel %vm1690, %v1666, %v1570
    %v1704 = vsel %vm1690, %v1667, %v1572
    %v1705 = vsel %vm1690, %v1668, %v1574
    %v1706 = vsel %vm1690, %v1669, %v1576
    %v1707 = vsel %vm1690, %v1670, %v1578
    %v1708 = vsel %vm1690, %v1671, %v1580
    %v1709 = vsel %vm1690, %v1672, %v1582
    %v1710 = vsel %vm1690, %v1673, %v1584
    %v1711 = vsel %vm1690, %v1674, %v1586
    %v1712 = vsel %vm1690, %v1675, %v1588
    %v1713 = vsel %vm1690, %v1676, %v1590
    %v1714 = vsel %vm1690, %v1677, %v1592
    %v1715 = vsel %vm1690, %v1678, %v1594
    %v1716 = vsel %vm1690, %v1679, %v1596
    %v1717 = vsel %vm1690, %v1680, %v1598
    %v1718 = vsel %vm1690, %v1681, %v1600
    %v1719 = vsel %vm1690, %v1682, %v1602
    %v1720 = vsel %vm1690, %v1683, %v1604
    %v1721 = vsel %vm1690, %v1684, %v1606
    %v1722 = vsel %vm1690, %v1685, %v1608
    %v1723 = vsel %vm1690, %v1686, %v1610
    %v1724 = vsel %vm1690, %v1687, %v1612
    %v1725 = vsel %vm1690, %v1688, %v1614
    %v1726 = vsel %vm1690, %v1689, %v1616
    %v1727 = vld [vmem:[%s3] sm:$0xff]
    %v1728 = vld [vmem:[%s3 + $0x8] sm:$0xff]
    %v1729 = vld [vmem:[%s3 + $0x10] sm:$0xff]
    %v1730 = vld [vmem:[%s3 + $0x18] sm:$0xff]
    %v1731 = vld [vmem:[%s3 + $0x20] sm:$0xff]
    %v1732 = vld [vmem:[%s3 + $0x28] sm:$0xff]
    %v1733 = vld [vmem:[%s3 + $0x30] sm:$0xff]
    %v1734 = vld [vmem:[%s3 + $0x38] sm:$0xff]
    %v1735 = vld [vmem:[%s3 + $0x40] sm:$0xff]
    %v1736 = vld [vmem:[%s3 + $0x48] sm:$0xff]
    %v1737 = vld [vmem:[%s3 + $0x50] sm:$0xff]
    %v1738 = vld [vmem:[%s3 + $0x58] sm:$0xff]
    %v1739 = vld [vmem:[#allocation4] sm:$0x1]
    %v1741 = vperm.slane %v1739, 0
    %vm1743 = vcmask 785408
    %v1745 = vsel %vm1743, %v1691, 0
    %v1748 = vsel %vm1743, %v1692, 0
    %v1751 = vsel %vm1743, %v1693, 0
    %v1754 = vsel %vm1743, %v1694, 0
    %v1757 = vsel %vm1743, %v1695, 0
    %v1760 = vsel %vm1743, %v1696, 0
    %v1763 = vsel %vm1743, %v1697, 0
    %v1766 = vsel %vm1743, %v1698, 0
    %v1769 = vsel %vm1743, %v1699, 0
    %v1772 = vsel %vm1743, %v1700, 0
    %v1775 = vsel %vm1743, %v1701, 0
    %v1778 = vsel %vm1743, %v1702, 0
    %v1781 = vsel %vm1743, %v1703, 0
    %v1784 = vsel %vm1743, %v1704, 0
    %v1787 = vsel %vm1743, %v1705, 0
    %v1790 = vsel %vm1743, %v1706, 0
    %v1793 = vsel %vm1743, %v1707, 0
    %v1796 = vsel %vm1743, %v1708, 0
    %v1799 = vsel %vm1743, %v1709, 0
    %v1802 = vsel %vm1743, %v1710, 0
    %v1805 = vsel %vm1743, %v1711, 0
    %v1808 = vsel %vm1743, %v1712, 0
    %v1811 = vsel %vm1743, %v1713, 0
    %v1814 = vsel %vm1743, %v1714, 0
    %v1817 = vsel %vm1743, %v1715, 0
    %v1820 = vsel %vm1743, %v1716, 0
    %v1823 = vsel %vm1743, %v1717, 0
    %v1826 = vsel %vm1743, %v1718, 0
    %v1829 = vsel %vm1743, %v1719, 0
    %v1832 = vsel %vm1743, %v1720, 0
    %v1835 = vsel %vm1743, %v1721, 0
    %v1838 = vsel %vm1743, %v1722, 0
    %v1841 = vsel %vm1743, %v1723, 0
    %v1844 = vsel %vm1743, %v1724, 0
    %v1847 = vsel %vm1743, %v1725, 0
    %v1850 = vsel %vm1743, %v1726, 0
    %1852 = vmatpush.msra.mxu0 0.0
    %1853 = vmatpush.msra.mxu0 0.0
    %1854 = vmatpush.msra.mxu0 0.0
    %1855 = vmatpush.msra.mxu0 0.0
    %1856 = vmatpush.msra.mxu0 %v1738
    %1857 = vmatpush.msra.mxu0 %v1737
    %1858 = vmatpush.msra.mxu0 %v1736
    %1859 = vmatpush.msra.mxu0 %v1735
    %1860 = vmatpush.msra.mxu0 %v1734
    %1861 = vmatpush.msra.mxu0 %v1733
    %1862 = vmatpush.msra.mxu0 %v1732
    %1863 = vmatpush.msra.mxu0 %v1731
    %1864 = vmatpush.msra.mxu0 %v1730
    %1865 = vmatpush.msra.mxu0 %v1729
    %1866 = vmatpush.msra.mxu0 %v1728
    %1867 = vmatpush.msra.mxu0 %v1727
    %1868 = vmatmul.f32.gmra.mxu0 %v1745
    %v1869 = vpop.f32.mrf.mxu0
    %v1870 = vadd.f32 %v1741, %v1869
    %1871 = vmatmul.f32.gmra.mxu0 %v1748
    %v1872 = vpop.f32.mrf.mxu0
    %v1873 = vadd.f32 %v1741, %v1872
    %1874 = vmatmul.f32.gmra.mxu0 %v1751
    %v1875 = vpop.f32.mrf.mxu0
    %v1876 = vadd.f32 %v1741, %v1875
    %1877 = vmatmul.f32.gmra.mxu0 %v1754
    %v1878 = vpop.f32.mrf.mxu0
    %v1879 = vadd.f32 %v1741, %v1878
    %1880 = vmatmul.f32.gmra.mxu0 %v1757
    %v1881 = vpop.f32.mrf.mxu0
    %v1882 = vadd.f32 %v1741, %v1881
    %1883 = vmatmul.f32.gmra.mxu0 %v1760
    %v1884 = vpop.f32.mrf.mxu0
    %v1885 = vadd.f32 %v1741, %v1884
    %1886 = vmatmul.f32.gmra.mxu0 %v1763
    %v1887 = vpop.f32.mrf.mxu0
    %v1888 = vadd.f32 %v1741, %v1887
    %1889 = vmatmul.f32.gmra.mxu0 %v1766
    %v1890 = vpop.f32.mrf.mxu0
    %v1891 = vadd.f32 %v1741, %v1890
    %1892 = vmatmul.f32.gmra.mxu0 %v1769
    %v1893 = vpop.f32.mrf.mxu0
    %v1894 = vadd.f32 %v1741, %v1893
    %1895 = vmatmul.f32.gmra.mxu0 %v1772
    %v1896 = vpop.f32.mrf.mxu0
    %v1897 = vadd.f32 %v1741, %v1896
    %1898 = vmatmul.f32.gmra.mxu0 %v1775
    %v1899 = vpop.f32.mrf.mxu0
    %v1900 = vadd.f32 %v1741, %v1899
    %1901 = vmatmul.f32.gmra.mxu0 %v1778
    %v1902 = vpop.f32.mrf.mxu0
    %v1903 = vadd.f32 %v1741, %v1902
    %1904 = vmatmul.f32.gmra.mxu0 %v1781
    %v1905 = vpop.f32.mrf.mxu0
    %v1906 = vadd.f32 %v1741, %v1905
    %1907 = vmatmul.f32.gmra.mxu0 %v1784
    %v1908 = vpop.f32.mrf.mxu0
    %v1909 = vadd.f32 %v1741, %v1908
    %1910 = vmatmul.f32.gmra.mxu0 %v1787
    %v1911 = vpop.f32.mrf.mxu0
    %v1912 = vadd.f32 %v1741, %v1911
    %1913 = vmatmul.f32.gmra.mxu0 %v1790
    %v1914 = vpop.f32.mrf.mxu0
    %v1915 = vadd.f32 %v1741, %v1914
    %1916 = vmatmul.f32.gmra.mxu0 %v1793
    %v1917 = vpop.f32.mrf.mxu0
    %v1918 = vadd.f32 %v1741, %v1917
    %1919 = vmatmul.f32.gmra.mxu0 %v1796
    %v1920 = vpop.f32.mrf.mxu0
    %v1921 = vadd.f32 %v1741, %v1920
    %1922 = vmatmul.f32.gmra.mxu0 %v1799
    %v1923 = vpop.f32.mrf.mxu0
    %v1924 = vadd.f32 %v1741, %v1923
    %1925 = vmatmul.f32.gmra.mxu0 %v1802
    %v1926 = vpop.f32.mrf.mxu0
    %v1927 = vadd.f32 %v1741, %v1926
    %1928 = vmatmul.f32.gmra.mxu0 %v1805
    %v1929 = vpop.f32.mrf.mxu0
    %v1930 = vadd.f32 %v1741, %v1929
    %1931 = vmatmul.f32.gmra.mxu0 %v1808
    %v1932 = vpop.f32.mrf.mxu0
    %v1933 = vadd.f32 %v1741, %v1932
    %1934 = vmatmul.f32.gmra.mxu0 %v1811
    %v1935 = vpop.f32.mrf.mxu0
    %v1936 = vadd.f32 %v1741, %v1935
    %1937 = vmatmul.f32.gmra.mxu0 %v1814
    %v1938 = vpop.f32.mrf.mxu0
    %v1939 = vadd.f32 %v1741, %v1938
    %1940 = vmatmul.f32.gmra.mxu0 %v1817
    %v1941 = vpop.f32.mrf.mxu0
    %v1942 = vadd.f32 %v1741, %v1941
    %1943 = vmatmul.f32.gmra.mxu0 %v1820
    %v1944 = vpop.f32.mrf.mxu0
    %v1945 = vadd.f32 %v1741, %v1944
    %1946 = vmatmul.f32.gmra.mxu0 %v1823
    %v1947 = vpop.f32.mrf.mxu0
    %v1948 = vadd.f32 %v1741, %v1947
    %1949 = vmatmul.f32.gmra.mxu0 %v1826
    %v1950 = vpop.f32.mrf.mxu0
    %v1951 = vadd.f32 %v1741, %v1950
    %1952 = vmatmul.f32.gmra.mxu0 %v1829
    %v1953 = vpop.f32.mrf.mxu0
    %v1954 = vadd.f32 %v1741, %v1953
    %1955 = vmatmul.f32.gmra.mxu0 %v1832
    %v1956 = vpop.f32.mrf.mxu0
    %v1957 = vadd.f32 %v1741, %v1956
    %1958 = vmatmul.f32.gmra.mxu0 %v1835
    %v1959 = vpop.f32.mrf.mxu0
    %v1960 = vadd.f32 %v1741, %v1959
    %1961 = vmatmul.f32.gmra.mxu0 %v1838
    %v1962 = vpop.f32.mrf.mxu0
    %v1963 = vadd.f32 %v1741, %v1962
    %1964 = vmatmul.f32.gmra.mxu0 %v1841
    %v1965 = vpop.f32.mrf.mxu0
    %v1966 = vadd.f32 %v1741, %v1965
    %1967 = vmatmul.f32.gmra.mxu0 %v1844
    %v1968 = vpop.f32.mrf.mxu0
    %v1969 = vadd.f32 %v1741, %v1968
    %1970 = vmatmul.f32.gmra.mxu0 %v1847
    %v1971 = vpop.f32.mrf.mxu0
    %v1972 = vadd.f32 %v1741, %v1971
    %1973 = vmatmul.f32.gmra.mxu0 %v1850
    %v1974 = vpop.f32.mrf.mxu0
    %v1975 = vadd.f32 %v1741, %v1974
    %1976 = vdwg.mxu0
    %v1977 = vmax.f32 %v1870, 0.0
    %v1978 = vmax.f32 %v1873, 0.0
    %v1979 = vmax.f32 %v1876, 0.0
    %v1980 = vmax.f32 %v1879, 0.0
    %v1981 = vmax.f32 %v1882, 0.0
    %v1982 = vmax.f32 %v1885, 0.0
    %v1983 = vmax.f32 %v1888, 0.0
    %v1984 = vmax.f32 %v1891, 0.0
    %v1985 = vmax.f32 %v1894, 0.0
    %v1986 = vmax.f32 %v1897, 0.0
    %v1987 = vmax.f32 %v1900, 0.0
    %v1988 = vmax.f32 %v1903, 0.0
    %v1989 = vmax.f32 %v1906, 0.0
    %v1990 = vmax.f32 %v1909, 0.0
    %v1991 = vmax.f32 %v1912, 0.0
    %v1992 = vmax.f32 %v1915, 0.0
    %v1993 = vmax.f32 %v1918, 0.0
    %v1994 = vmax.f32 %v1921, 0.0
    %v1995 = vmax.f32 %v1924, 0.0
    %v1996 = vmax.f32 %v1927, 0.0
    %v1997 = vmax.f32 %v1930, 0.0
    %v1998 = vmax.f32 %v1933, 0.0
    %v1999 = vmax.f32 %v1936, 0.0
    %v2000 = vmax.f32 %v1939, 0.0
    %v2001 = vmax.f32 %v1942, 0.0
    %v2002 = vmax.f32 %v1945, 0.0
    %v2003 = vmax.f32 %v1948, 0.0
    %v2004 = vmax.f32 %v1951, 0.0
    %v2005 = vmax.f32 %v1954, 0.0
    %v2006 = vmax.f32 %v1957, 0.0
    %v2007 = vmax.f32 %v1960, 0.0
    %v2008 = vmax.f32 %v1963, 0.0
    %v2009 = vmax.f32 %v1966, 0.0
    %v2010 = vmax.f32 %v1969, 0.0
    %v2011 = vmax.f32 %v1972, 0.0
    %v2012 = vmax.f32 %v1975, 0.0
    %v2013 = vmax.f32 %v1977, %v1978
    %v2014 = vmax.f32 %v1979, %v1980
    %v2015 = vmax.f32 %v1981, %v1982
    %v2016 = vmax.f32 %v1983, %v1984
    %v2017 = vmax.f32 %v1985, %v1986
    %v2018 = vmax.f32 %v1987, %v1988
    %v2019 = vmax.f32 %v1989, %v1990
    %v2020 = vmax.f32 %v1991, %v1992
    %v2021 = vmax.f32 %v1993, %v1994
    %v2022 = vmax.f32 %v1995, %v1996
    %v2023 = vmax.f32 %v1997, %v1998
    %v2024 = vmax.f32 %v1999, %v2000
    %v2025 = vmax.f32 %v2001, %v2002
    %v2026 = vmax.f32 %v2003, %v2004
    %v2027 = vmax.f32 %v2005, %v2006
    %v2028 = vmax.f32 %v2007, %v2008
    %v2029 = vmax.f32 %v2009, %v2010
    %v2030 = vmax.f32 %v2011, %v2012
    %2049 = vrot.lane.b32.xlu0 %v2013, 64
    %v2050 = vpop.permute.xlu0 %2049
    %2051 = vrot.lane.b32.xlu0 %v2014, 64
    %v2052 = vpop.permute.xlu0 %2051
    %2053 = vrot.lane.b32.xlu0 %v2015, 64
    %v2054 = vpop.permute.xlu0 %2053
    %2055 = vrot.lane.b32.xlu0 %v2016, 64
    %v2056 = vpop.permute.xlu0 %2055
    %2057 = vrot.lane.b32.xlu0 %v2017, 64
    %v2058 = vpop.permute.xlu0 %2057
    %2059 = vrot.lane.b32.xlu0 %v2018, 64
    %v2060 = vpop.permute.xlu0 %2059
    %2061 = vrot.lane.b32.xlu0 %v2019, 64
    %v2062 = vpop.permute.xlu0 %2061
    %2063 = vrot.lane.b32.xlu0 %v2020, 64
    %v2064 = vpop.permute.xlu0 %2063
    %2065 = vrot.lane.b32.xlu0 %v2021, 64
    %v2066 = vpop.permute.xlu0 %2065
    %2067 = vrot.lane.b32.xlu0 %v2022, 64
    %v2068 = vpop.permute.xlu0 %2067
    %2069 = vrot.lane.b32.xlu0 %v2023, 64
    %v2070 = vpop.permute.xlu0 %2069
    %2071 = vrot.lane.b32.xlu0 %v2024, 64
    %v2072 = vpop.permute.xlu0 %2071
    %2073 = vrot.lane.b32.xlu0 %v2025, 64
    %v2074 = vpop.permute.xlu0 %2073
    %2075 = vrot.lane.b32.xlu0 %v2026, 64
    %v2076 = vpop.permute.xlu0 %2075
    %2077 = vrot.lane.b32.xlu0 %v2027, 64
    %v2078 = vpop.permute.xlu0 %2077
    %2079 = vrot.lane.b32.xlu0 %v2028, 64
    %v2080 = vpop.permute.xlu0 %2079
    %2081 = vrot.lane.b32.xlu0 %v2029, 64
    %v2082 = vpop.permute.xlu0 %2081
    %2083 = vrot.lane.b32.xlu0 %v2030, 64
    %v2084 = vpop.permute.xlu0 %2083
    %v2103 = vsel %vm1690, 0.0, %v2050
    %v2104 = vsel %vm1690, %v2013, %v2052
    %v2105 = vsel %vm1690, %v2014, %v2054
    %v2106 = vsel %vm1690, %v2015, %v2056
    %v2107 = vsel %vm1690, %v2016, %v2058
    %v2108 = vsel %vm1690, %v2017, %v2060
    %v2109 = vsel %vm1690, %v2018, %v2062
    %v2110 = vsel %vm1690, %v2019, %v2064
    %v2111 = vsel %vm1690, %v2020, %v2066
    %v2112 = vsel %vm1690, %v2021, %v2068
    %v2113 = vsel %vm1690, %v2022, %v2070
    %v2114 = vsel %vm1690, %v2023, %v2072
    %v2115 = vsel %vm1690, %v2024, %v2074
    %v2116 = vsel %vm1690, %v2025, %v2076
    %v2117 = vsel %vm1690, %v2026, %v2078
    %v2118 = vsel %vm1690, %v2027, %v2080
    %v2119 = vsel %vm1690, %v2028, %v2082
    %v2120 = vsel %vm1690, %v2029, %v2084
    %v2121 = vld [vmem:[#allocation6] sm:$0xff]
    %v2122 = vld [vmem:[#allocation6 + $0x8] sm:$0xff]
    %v2123 = vld [vmem:[#allocation6 + $0x10] sm:$0xff]
    %v2124 = vld [vmem:[#allocation6 + $0x18] sm:$0xff]
    %v2125 = vld [vmem:[#allocation6 + $0x20] sm:$0xff]
    %v2126 = vld [vmem:[#allocation6 + $0x28] sm:$0xff]
    %v2127 = vld [vmem:[#allocation6 + $0x30] sm:$0xff]
    %v2128 = vld [vmem:[#allocation6 + $0x38] sm:$0xff]
    %v2129 = vld [vmem:[#allocation6 + $0x40] sm:$0xff]
    %v2130 = vld [vmem:[#allocation6 + $0x48] sm:$0xff]
    %v2131 = vld [vmem:[#allocation6 + $0x50] sm:$0xff]
    %v2132 = vld [vmem:[#allocation6 + $0x58] sm:$0xff]
    %v2133 = vld [vmem:[#allocation6 + $0x60] sm:$0xff]
    %v2134 = vld [vmem:[#allocation6 + $0x68] sm:$0xff]
    %v2135 = vld [vmem:[#allocation6 + $0x70] sm:$0xff]
    %v2136 = vld [vmem:[#allocation6 + $0x78] sm:$0xff]
    %v2137 = vld [vmem:[#allocation6 + $0x80] sm:$0xff]
    %v2138 = vld [vmem:[#allocation6 + $0x88] sm:$0xff]
    %v2139 = vld [vmem:[#allocation6 + $0x90] sm:$0xff]
    %v2140 = vld [vmem:[#allocation6 + $0x98] sm:$0xff]
    %v2141 = vld [vmem:[#allocation6 + $0xa0] sm:$0xff]
    %v2142 = vld [vmem:[#allocation6 + $0xa8] sm:$0xff]
    %v2143 = vld [vmem:[#allocation6 + $0xb0] sm:$0xff]
    %v2144 = vld [vmem:[#allocation6 + $0xb8] sm:$0xff]
    %v2145 = vld [vmem:[#allocation8] sm:$0x1]
    %v2147 = vperm.slane %v2145, 0
    %v2149 = vsel %vm1690, %v2014, 0
    %v2151 = vsel %vm1690, %v2015, 0
    %v2153 = vsel %vm1690, %v2016, 0
    %v2155 = vsel %vm1690, %v2017, 0
    %v2157 = vsel %vm1690, %v2018, 0
    %v2159 = vsel %vm1690, %v2019, 0
    %v2161 = vsel %vm1690, %v2020, 0
    %v2163 = vsel %vm1690, %v2021, 0
    %v2165 = vsel %vm1690, %v2022, 0
    %v2167 = vsel %vm1690, %v2023, 0
    %v2169 = vsel %vm1690, %v2024, 0
    %v2171 = vsel %vm1690, %v2025, 0
    %v2173 = vsel %vm1690, %v2026, 0
    %v2175 = vsel %vm1690, %v2027, 0
    %v2177 = vsel %vm1690, %v2028, 0
    %v2179 = vsel %vm1690, %v2029, 0
    %v2181 = vsel %vm1690, %v2030, 0
    %v2183 = vsel %vm1690, 0.0, 0
    %2185 = vmatpush.msra.mxu0 %v2136
    %2186 = vmatpush.msra.mxu0 %v2135
    %2187 = vmatpush.msra.mxu0 %v2134
    %2188 = vmatpush.msra.mxu0 %v2133
    %2189 = vmatpush.msra.mxu0 %v2132
    %2190 = vmatpush.msra.mxu0 %v2131
    %2191 = vmatpush.msra.mxu0 %v2130
    %2192 = vmatpush.msra.mxu0 %v2129
    %2193 = vmatpush.msra.mxu0 %v2128
    %2194 = vmatpush.msra.mxu0 %v2127
    %2195 = vmatpush.msra.mxu0 %v2126
    %2196 = vmatpush.msra.mxu0 %v2125
    %2197 = vmatpush.msra.mxu0 %v2124
    %2198 = vmatpush.msra.mxu0 %v2123
    %2199 = vmatpush.msra.mxu0 %v2122
    %2200 = vmatpush.msra.mxu0 %v2121
    %2201 = vmatmul.f32.gmra.mxu0 %v2103
    %v2202 = vpop.f32.mrf.mxu0
    %v2203 = vadd.f32 %v2147, %v2202
    %2204 = vmatmul.f32.gmra.mxu0 %v2104
    %v2205 = vpop.f32.mrf.mxu0
    %v2206 = vadd.f32 %v2147, %v2205
    %2207 = vmatmul.f32.gmra.mxu0 %v2105
    %v2208 = vpop.f32.mrf.mxu0
    %v2209 = vadd.f32 %v2147, %v2208
    %2210 = vmatmul.f32.gmra.mxu0 %v2106
    %v2211 = vpop.f32.mrf.mxu0
    %v2212 = vadd.f32 %v2147, %v2211
    %2213 = vmatmul.f32.gmra.mxu0 %v2107
    %v2214 = vpop.f32.mrf.mxu0
    %v2215 = vadd.f32 %v2147, %v2214
    %2216 = vmatmul.f32.gmra.mxu0 %v2108
    %v2217 = vpop.f32.mrf.mxu0
    %v2218 = vadd.f32 %v2147, %v2217
    %2219 = vmatmul.f32.gmra.mxu0 %v2109
    %v2220 = vpop.f32.mrf.mxu0
    %v2221 = vadd.f32 %v2147, %v2220
    %2222 = vmatmul.f32.gmra.mxu0 %v2110
    %v2223 = vpop.f32.mrf.mxu0
    %v2224 = vadd.f32 %v2147, %v2223
    %2225 = vmatmul.f32.gmra.mxu0 %v2111
    %v2226 = vpop.f32.mrf.mxu0
    %v2227 = vadd.f32 %v2147, %v2226
    %2228 = vmatmul.f32.gmra.mxu0 %v2112
    %v2229 = vpop.f32.mrf.mxu0
    %v2230 = vadd.f32 %v2147, %v2229
    %2231 = vmatmul.f32.gmra.mxu0 %v2113
    %v2232 = vpop.f32.mrf.mxu0
    %v2233 = vadd.f32 %v2147, %v2232
    %2234 = vmatmul.f32.gmra.mxu0 %v2114
    %v2235 = vpop.f32.mrf.mxu0
    %v2236 = vadd.f32 %v2147, %v2235
    %2237 = vmatmul.f32.gmra.mxu0 %v2115
    %v2238 = vpop.f32.mrf.mxu0
    %v2239 = vadd.f32 %v2147, %v2238
    %2240 = vmatmul.f32.gmra.mxu0 %v2116
    %v2241 = vpop.f32.mrf.mxu0
    %v2242 = vadd.f32 %v2147, %v2241
    %2243 = vmatmul.f32.gmra.mxu0 %v2117
    %v2244 = vpop.f32.mrf.mxu0
    %v2245 = vadd.f32 %v2147, %v2244
    %2246 = vmatmul.f32.gmra.mxu0 %v2118
    %v2247 = vpop.f32.mrf.mxu0
    %v2248 = vadd.f32 %v2147, %v2247
    %2249 = vmatmul.f32.gmra.mxu0 %v2119
    %v2250 = vpop.f32.mrf.mxu0
    %v2251 = vadd.f32 %v2147, %v2250
    %2252 = vmatmul.f32.gmra.mxu0 %v2120
    %v2253 = vpop.f32.mrf.mxu0
    %v2254 = vadd.f32 %v2147, %v2253
    %2255 = vdwg.mxu0
    %2256 = vmatpush.msra.mxu0 0.0
    %2257 = vmatpush.msra.mxu0 0.0
    %2258 = vmatpush.msra.mxu0 0.0
    %2259 = vmatpush.msra.mxu0 0.0
    %2260 = vmatpush.msra.mxu0 0.0
    %2261 = vmatpush.msra.mxu0 0.0
    %2262 = vmatpush.msra.mxu0 0.0
    %2263 = vmatpush.msra.mxu0 0.0
    %2264 = vmatpush.msra.mxu0 %v2144
    %2265 = vmatpush.msra.mxu0 %v2143
    %2266 = vmatpush.msra.mxu0 %v2142
    %2267 = vmatpush.msra.mxu0 %v2141
    %2268 = vmatpush.msra.mxu0 %v2140
    %2269 = vmatpush.msra.mxu0 %v2139
    %2270 = vmatpush.msra.mxu0 %v2138
    %2271 = vmatpush.msra.mxu0 %v2137
    %2272 = vmatmul.f32.gmra.mxu0 %v2149
    %v2273 = vpop.f32.mrf.mxu0
    %v2274 = vadd.f32 %v2203, %v2273
    %2275 = vmatmul.f32.gmra.mxu0 %v2151
    %v2276 = vpop.f32.mrf.mxu0
    %v2277 = vadd.f32 %v2206, %v2276
    %2278 = vmatmul.f32.gmra.mxu0 %v2153
    %v2279 = vpop.f32.mrf.mxu0
    %v2280 = vadd.f32 %v2209, %v2279
    %2281 = vmatmul.f32.gmra.mxu0 %v2155
    %v2282 = vpop.f32.mrf.mxu0
    %v2283 = vadd.f32 %v2212, %v2282
    %2284 = vmatmul.f32.gmra.mxu0 %v2157
    %v2285 = vpop.f32.mrf.mxu0
    %v2286 = vadd.f32 %v2215, %v2285
    %2287 = vmatmul.f32.gmra.mxu0 %v2159
    %v2288 = vpop.f32.mrf.mxu0
    %v2289 = vadd.f32 %v2218, %v2288
    %2290 = vmatmul.f32.gmra.mxu0 %v2161
    %v2291 = vpop.f32.mrf.mxu0
    %v2292 = vadd.f32 %v2221, %v2291
    %2293 = vmatmul.f32.gmra.mxu0 %v2163
    %v2294 = vpop.f32.mrf.mxu0
    %v2295 = vadd.f32 %v2224, %v2294
    %2296 = vmatmul.f32.gmra.mxu0 %v2165
    %v2297 = vpop.f32.mrf.mxu0
    %v2298 = vadd.f32 %v2227, %v2297
    %2299 = vmatmul.f32.gmra.mxu0 %v2167
    %v2300 = vpop.f32.mrf.mxu0
    %v2301 = vadd.f32 %v2230, %v2300
    %2302 = vmatmul.f32.gmra.mxu0 %v2169
    %v2303 = vpop.f32.mrf.mxu0
    %v2304 = vadd.f32 %v2233, %v2303
    %2305 = vmatmul.f32.gmra.mxu0 %v2171
    %v2306 = vpop.f32.mrf.mxu0
    %v2307 = vadd.f32 %v2236, %v2306
    %2308 = vmatmul.f32.gmra.mxu0 %v2173
    %v2309 = vpop.f32.mrf.mxu0
    %v2310 = vadd.f32 %v2239, %v2309
    %2311 = vmatmul.f32.gmra.mxu0 %v2175
    %v2312 = vpop.f32.mrf.mxu0
    %v2313 = vadd.f32 %v2242, %v2312
    %2314 = vmatmul.f32.gmra.mxu0 %v2177
    %v2315 = vpop.f32.mrf.mxu0
    %v2316 = vadd.f32 %v2245, %v2315
    %2317 = vmatmul.f32.gmra.mxu0 %v2179
    %v2318 = vpop.f32.mrf.mxu0
    %v2319 = vadd.f32 %v2248, %v2318
    %2320 = vmatmul.f32.gmra.mxu0 %v2181
    %v2321 = vpop.f32.mrf.mxu0
    %v2322 = vadd.f32 %v2251, %v2321
    %2323 = vmatmul.f32.gmra.mxu0 %v2183
    %v2324 = vpop.f32.mrf.mxu0
    %v2325 = vadd.f32 %v2254, %v2324
    %2326 = vdwg.mxu0
    %v2327 = vmax.f32 %v2274, 0.0
    %v2328 = vmax.f32 %v2277, 0.0
    %v2329 = vmax.f32 %v2280, 0.0
    %v2330 = vmax.f32 %v2283, 0.0
    %v2331 = vmax.f32 %v2286, 0.0
    %v2332 = vmax.f32 %v2289, 0.0
    %v2333 = vmax.f32 %v2292, 0.0
    %v2334 = vmax.f32 %v2295, 0.0
    %v2335 = vmax.f32 %v2298, 0.0
    %v2336 = vmax.f32 %v2301, 0.0
    %v2337 = vmax.f32 %v2304, 0.0
    %v2338 = vmax.f32 %v2307, 0.0
    %v2339 = vmax.f32 %v2310, 0.0
    %v2340 = vmax.f32 %v2313, 0.0
    %v2341 = vmax.f32 %v2316, 0.0
    %v2342 = vmax.f32 %v2319, 0.0
    %v2343 = vmax.f32 %v2322, 0.0
    %v2344 = vmax.f32 %v2325, 0.0
    %v2345 = vmax.f32 %v2327, %v2328
    %v2346 = vmax.f32 %v2329, %v2330
    %v2347 = vmax.f32 %v2331, %v2332
    %v2348 = vmax.f32 %v2333, %v2334
    %v2349 = vmax.f32 %v2335, %v2336
    %v2350 = vmax.f32 %v2337, %v2338
    %v2351 = vmax.f32 %v2339, %v2340
    %v2352 = vmax.f32 %v2341, %v2342
    %v2353 = vmax.f32 %v2343, %v2344
    %s2354 = smul.u32 4, 144
    %s2355 = smul.u32 %s2354, 2
    %s2356 = sshll.u32 %s2355, 4
    %2357 = dma.done [#allocation3], %s2356
    %v2358 = vpack.c.bf16 %v2345, %v2345
    %v2359 = vpack.c.bf16 %v2346, %v2346
    %v2360 = vpack.c.bf16 %v2347, %v2347
    %v2361 = vpack.c.bf16 %v2348, %v2348
    %v2362 = vpack.c.bf16 %v2349, %v2349
    %v2363 = vpack.c.bf16 %v2350, %v2350
    %v2364 = vpack.c.bf16 %v2351, %v2351
    %v2365 = vpack.c.bf16 %v2352, %v2352
    %v2366 = vpack.c.bf16 %v2353, %v2353
    %v2367 = vld [vmem:[#allocation2] sm:$0xff]
    %v2368 = vld [vmem:[#allocation2 + $0x8] sm:$0xff]
    %v2369 = vld [vmem:[#allocation2 + $0x10] sm:$0xff]
    %v2370 = vld [vmem:[#allocation2 + $0x18] sm:$0xff]
    %v2371 = vld [vmem:[#allocation2 + $0x20] sm:$0xff]
    %v2372 = vld [vmem:[#allocation2 + $0x28] sm:$0xff]
    %v2373 = vld [vmem:[#allocation2 + $0x30] sm:$0xff]
    %v2374 = vld [vmem:[#allocation2 + $0x38] sm:$0xff]
    %v2375 = vld [vmem:[#allocation2 + $0x40] sm:$0xff]
    %v2376 = vld [vmem:[#allocation2 + $0x48] sm:$0xff]
    %v2377 = vld [vmem:[#allocation2 + $0x50] sm:$0xff]
    %v2378 = vld [vmem:[#allocation2 + $0x58] sm:$0xff]
    %v2379 = vld [vmem:[#allocation2 + $0x60] sm:$0xff]
    %v2380 = vld [vmem:[#allocation2 + $0x68] sm:$0xff]
    %v2381 = vld [vmem:[#allocation2 + $0x70] sm:$0xff]
    %v2382 = vld [vmem:[#allocation2 + $0x78] sm:$0xff]
    %v2383 = vld [vmem:[#allocation2 + $0x80] sm:$0xff]
    %v2384 = vld [vmem:[#allocation2 + $0x88] sm:$0xff]
    %v2385 = vld [vmem:[#allocation2 + $0x90] sm:$0xff]
    %v2386 = vld [vmem:[#allocation2 + $0x98] sm:$0xff]
    %v2387 = vld [vmem:[#allocation2 + $0xa0] sm:$0xff]
    %v2388 = vld [vmem:[#allocation2 + $0xa8] sm:$0xff]
    %v2389 = vld [vmem:[#allocation2 + $0xb0] sm:$0xff]
    %v2390 = vld [vmem:[#allocation2 + $0xb8] sm:$0xff]
    %v2391 = vld [vmem:[#allocation2 + $0xc0] sm:$0xff]
    %v2392 = vld [vmem:[#allocation2 + $0xc8] sm:$0xff]
    %v2393 = vld [vmem:[#allocation2 + $0xd0] sm:$0xff]
    %v2394 = vld [vmem:[#allocation2 + $0xd8] sm:$0xff]
    %v2395 = vld [vmem:[#allocation2 + $0xe0] sm:$0xff]
    %v2396 = vld [vmem:[#allocation2 + $0xe8] sm:$0xff]
    %v2397 = vld [vmem:[#allocation2 + $0xf0] sm:$0xff]
    %v2398 = vld [vmem:[#allocation2 + $0xf8] sm:$0xff]
    %v2399 = vld [vmem:[#allocation2 + $0x100] sm:$0xff]
    %v2400 = vld [vmem:[#allocation2 + $0x108] sm:$0xff]
    %v2401 = vld [vmem:[#allocation2 + $0x110] sm:$0xff]
    %v2402 = vld [vmem:[#allocation2 + $0x118] sm:$0xff]
    %v2403 = vld [vmem:[#allocation2 + $0x120] sm:$0xff]
    %v2404 = vld [vmem:[#allocation2 + $0x128] sm:$0xff]
    %v2405 = vld [vmem:[#allocation2 + $0x130] sm:$0xff]
    %v2406 = vld [vmem:[#allocation2 + $0x138] sm:$0xff]
    %v2407 = vld [vmem:[#allocation2 + $0x140] sm:$0xff]
    %v2408 = vld [vmem:[#allocation2 + $0x148] sm:$0xff]
    %v2409 = vld [vmem:[#allocation2 + $0x150] sm:$0xff]
    %v2410 = vld [vmem:[#allocation2 + $0x158] sm:$0xff]
    %v2411 = vld [vmem:[#allocation2 + $0x160] sm:$0xff]
    %v2412 = vld [vmem:[#allocation2 + $0x168] sm:$0xff]
    %v2413 = vld [vmem:[#allocation2 + $0x170] sm:$0xff]
    %v2414 = vld [vmem:[#allocation2 + $0x178] sm:$0xff]
    %v2415 = vld [vmem:[#allocation2 + $0x180] sm:$0xff]
    %v2416 = vld [vmem:[#allocation2 + $0x188] sm:$0xff]
    %v2417 = vld [vmem:[#allocation2 + $0x190] sm:$0xff]
    %v2418 = vld [vmem:[#allocation2 + $0x198] sm:$0xff]
    %v2419 = vld [vmem:[#allocation2 + $0x1a0] sm:$0xff]
    %v2420 = vld [vmem:[#allocation2 + $0x1a8] sm:$0xff]
    %v2421 = vld [vmem:[#allocation2 + $0x1b0] sm:$0xff]
    %v2422 = vld [vmem:[#allocation2 + $0x1b8] sm:$0xff]
    %v2423 = vld [vmem:[#allocation2 + $0x1c0] sm:$0xff]
    %v2424 = vld [vmem:[#allocation2 + $0x1c8] sm:$0xff]
    %v2425 = vld [vmem:[#allocation2 + $0x1d0] sm:$0xff]
    %v2426 = vld [vmem:[#allocation2 + $0x1d8] sm:$0xff]
    %v2427 = vld [vmem:[#allocation2 + $0x1e0] sm:$0xff]
    %v2428 = vld [vmem:[#allocation2 + $0x1e8] sm:$0xff]
    %v2429 = vld [vmem:[#allocation2 + $0x1f0] sm:$0xff]
    %v2430 = vld [vmem:[#allocation2 + $0x1f8] sm:$0xff]
    %v2431 = vld [vmem:[#allocation2 + $0x200] sm:$0xff]
    %v2432 = vld [vmem:[#allocation2 + $0x208] sm:$0xff]
    %v2433 = vld [vmem:[#allocation2 + $0x210] sm:$0xff]
    %v2434 = vld [vmem:[#allocation2 + $0x218] sm:$0xff]
    %v2435 = vld [vmem:[#allocation2 + $0x220] sm:$0xff]
    %v2436 = vld [vmem:[#allocation2 + $0x228] sm:$0xff]
    %v2437 = vld [vmem:[#allocation2 + $0x230] sm:$0xff]
    %v2438 = vld [vmem:[#allocation2 + $0x238] sm:$0xff]
    %v2439 = vld [vmem:[#allocation2 + $0x240] sm:$0xff]
    %v2440 = vld [vmem:[#allocation2 + $0x248] sm:$0xff]
    %v2441 = vld [vmem:[#allocation2 + $0x250] sm:$0xff]
    %v2442 = vld [vmem:[#allocation2 + $0x258] sm:$0xff]
    %v2443 = vld [vmem:[#allocation2 + $0x260] sm:$0xff]
    %v2444 = vld [vmem:[#allocation2 + $0x268] sm:$0xff]
    %v2445 = vld [vmem:[#allocation2 + $0x270] sm:$0xff]
    %v2446 = vld [vmem:[#allocation2 + $0x278] sm:$0xff]
    %v2447 = vld [vmem:[#allocation2 + $0x280] sm:$0xff]
    %v2448 = vld [vmem:[#allocation2 + $0x288] sm:$0xff]
    %v2449 = vld [vmem:[#allocation2 + $0x290] sm:$0xff]
    %v2450 = vld [vmem:[#allocation2 + $0x298] sm:$0xff]
    %v2451 = vld [vmem:[#allocation2 + $0x2a0] sm:$0xff]
    %v2452 = vld [vmem:[#allocation2 + $0x2a8] sm:$0xff]
    %v2453 = vld [vmem:[#allocation2 + $0x2b0] sm:$0xff]
    %v2454 = vld [vmem:[#allocation2 + $0x2b8] sm:$0xff]
    %v2455 = vld [vmem:[#allocation2 + $0x2c0] sm:$0xff]
    %v2456 = vld [vmem:[#allocation2 + $0x2c8] sm:$0xff]
    %v2457 = vld [vmem:[#allocation2 + $0x2d0] sm:$0xff]
    %v2458 = vld [vmem:[#allocation2 + $0x2d8] sm:$0xff]
    %v2459 = vld [vmem:[#allocation2 + $0x2e0] sm:$0xff]
    %v2460 = vld [vmem:[#allocation2 + $0x2e8] sm:$0xff]
    %v2461 = vld [vmem:[#allocation2 + $0x2f0] sm:$0xff]
    %v2462 = vld [vmem:[#allocation2 + $0x2f8] sm:$0xff]
    %v2463 = vld [vmem:[#allocation2 + $0x300] sm:$0xff]
    %v2464 = vld [vmem:[#allocation2 + $0x308] sm:$0xff]
    %v2465 = vld [vmem:[#allocation2 + $0x310] sm:$0xff]
    %v2466 = vld [vmem:[#allocation2 + $0x318] sm:$0xff]
    %v2467 = vld [vmem:[#allocation2 + $0x320] sm:$0xff]
    %v2468 = vld [vmem:[#allocation2 + $0x328] sm:$0xff]
    %v2469 = vld [vmem:[#allocation2 + $0x330] sm:$0xff]
    %v2470 = vld [vmem:[#allocation2 + $0x338] sm:$0xff]
    %v2471 = vld [vmem:[#allocation2 + $0x340] sm:$0xff]
    %v2472 = vld [vmem:[#allocation2 + $0x348] sm:$0xff]
    %v2473 = vld [vmem:[#allocation2 + $0x350] sm:$0xff]
    %v2474 = vld [vmem:[#allocation2 + $0x358] sm:$0xff]
    %v2475 = vld [vmem:[#allocation2 + $0x360] sm:$0xff]
    %v2476 = vld [vmem:[#allocation2 + $0x368] sm:$0xff]
    %v2477 = vld [vmem:[#allocation2 + $0x370] sm:$0xff]
    %v2478 = vld [vmem:[#allocation2 + $0x378] sm:$0xff]
    %v2479 = vld [vmem:[#allocation2 + $0x380] sm:$0xff]
    %v2480 = vld [vmem:[#allocation2 + $0x388] sm:$0xff]
    %v2481 = vld [vmem:[#allocation2 + $0x390] sm:$0xff]
    %v2482 = vld [vmem:[#allocation2 + $0x398] sm:$0xff]
    %v2483 = vld [vmem:[#allocation2 + $0x3a0] sm:$0xff]
    %v2484 = vld [vmem:[#allocation2 + $0x3a8] sm:$0xff]
    %v2485 = vld [vmem:[#allocation2 + $0x3b0] sm:$0xff]
    %v2486 = vld [vmem:[#allocation2 + $0x3b8] sm:$0xff]
    %v2487 = vld [vmem:[#allocation2 + $0x3c0] sm:$0xff]
    %v2488 = vld [vmem:[#allocation2 + $0x3c8] sm:$0xff]
    %v2489 = vld [vmem:[#allocation2 + $0x3d0] sm:$0xff]
    %v2490 = vld [vmem:[#allocation2 + $0x3d8] sm:$0xff]
    %v2491 = vld [vmem:[#allocation2 + $0x3e0] sm:$0xff]
    %v2492 = vld [vmem:[#allocation2 + $0x3e8] sm:$0xff]
    %v2493 = vld [vmem:[#allocation2 + $0x3f0] sm:$0xff]
    %v2494 = vld [vmem:[#allocation2 + $0x3f8] sm:$0xff]
    %v2495 = vld [vmem:[#allocation2 + $0x400] sm:$0xff]
    %v2496 = vld [vmem:[#allocation2 + $0x408] sm:$0xff]
    %v2497 = vld [vmem:[#allocation2 + $0x410] sm:$0xff]
    %v2498 = vld [vmem:[#allocation2 + $0x418] sm:$0xff]
    %v2499 = vld [vmem:[#allocation2 + $0x420] sm:$0xff]
    %v2500 = vld [vmem:[#allocation2 + $0x428] sm:$0xff]
    %v2501 = vld [vmem:[#allocation2 + $0x430] sm:$0xff]
    %v2502 = vld [vmem:[#allocation2 + $0x438] sm:$0xff]
    %v2503 = vld [vmem:[#allocation2 + $0x440] sm:$0xff]
    %v2504 = vld [vmem:[#allocation2 + $0x448] sm:$0xff]
    %v2505 = vld [vmem:[#allocation2 + $0x450] sm:$0xff]
    %v2506 = vld [vmem:[#allocation2 + $0x458] sm:$0xff]
    %v2507 = vld [vmem:[#allocation2 + $0x460] sm:$0xff]
    %v2508 = vld [vmem:[#allocation2 + $0x468] sm:$0xff]
    %v2509 = vld [vmem:[#allocation2 + $0x470] sm:$0xff]
    %v2510 = vld [vmem:[#allocation2 + $0x478] sm:$0xff]
    %v2511 = vld [vmem:[%s8] sm:$0x3]
    %v2513 = vperm.slane %v2511, 0
    %v2514 = vperm.slane %v2511, 1
    %v2661 = vunpack.c.l.b16 %v2367
    %v2662 = vunpack.c.h.b16 %v2367
    %v2663 = vunpack.c.l.b16 %v2368
    %v2664 = vunpack.c.h.b16 %v2368
    %v2665 = vunpack.c.l.b16 %v2369
    %v2666 = vunpack.c.h.b16 %v2369
    %v2667 = vunpack.c.l.b16 %v2370
    %v2668 = vunpack.c.h.b16 %v2370
    %v2669 = vunpack.c.l.b16 %v2371
    %v2670 = vunpack.c.h.b16 %v2371
    %v2671 = vunpack.c.l.b16 %v2372
    %v2672 = vunpack.c.h.b16 %v2372
    %v2673 = vunpack.c.l.b16 %v2373
    %v2674 = vunpack.c.h.b16 %v2373
    %v2675 = vunpack.c.l.b16 %v2374
    %v2676 = vunpack.c.h.b16 %v2374
    %v2677 = vunpack.c.l.b16 %v2375
    %v2678 = vunpack.c.h.b16 %v2375
    %v2679 = vunpack.c.l.b16 %v2376
    %v2680 = vunpack.c.h.b16 %v2376
    %v2681 = vunpack.c.l.b16 %v2377
    %v2682 = vunpack.c.h.b16 %v2377
    %v2683 = vunpack.c.l.b16 %v2378
    %v2684 = vunpack.c.h.b16 %v2378
    %v2685 = vunpack.c.l.b16 %v2379
    %v2686 = vunpack.c.h.b16 %v2379
    %v2687 = vunpack.c.l.b16 %v2380
    %v2688 = vunpack.c.h.b16 %v2380
    %v2689 = vunpack.c.l.b16 %v2381
    %v2690 = vunpack.c.h.b16 %v2381
    %v2691 = vunpack.c.l.b16 %v2382
    %v2692 = vunpack.c.h.b16 %v2382
    %v2693 = vunpack.c.l.b16 %v2383
    %v2694 = vunpack.c.h.b16 %v2383
    %v2695 = vunpack.c.l.b16 %v2384
    %v2696 = vunpack.c.h.b16 %v2384
    %v2697 = vunpack.c.l.b16 %v2385
    %v2698 = vunpack.c.h.b16 %v2385
    %v2699 = vunpack.c.l.b16 %v2386
    %v2700 = vunpack.c.h.b16 %v2386
    %v2701 = vunpack.c.l.b16 %v2387
    %v2702 = vunpack.c.h.b16 %v2387
    %v2703 = vunpack.c.l.b16 %v2388
    %v2704 = vunpack.c.h.b16 %v2388
    %v2705 = vunpack.c.l.b16 %v2389
    %v2706 = vunpack.c.h.b16 %v2389
    %v2707 = vunpack.c.l.b16 %v2390
    %v2708 = vunpack.c.h.b16 %v2390
    %v2709 = vunpack.c.l.b16 %v2391
    %v2710 = vunpack.c.h.b16 %v2391
    %v2711 = vunpack.c.l.b16 %v2392
    %v2712 = vunpack.c.h.b16 %v2392
    %v2713 = vunpack.c.l.b16 %v2393
    %v2714 = vunpack.c.h.b16 %v2393
    %v2715 = vunpack.c.l.b16 %v2394
    %v2716 = vunpack.c.h.b16 %v2394
    %v2717 = vunpack.c.l.b16 %v2395
    %v2718 = vunpack.c.h.b16 %v2395
    %v2719 = vunpack.c.l.b16 %v2396
    %v2720 = vunpack.c.h.b16 %v2396
    %v2721 = vunpack.c.l.b16 %v2397
    %v2722 = vunpack.c.h.b16 %v2397
    %v2723 = vunpack.c.l.b16 %v2398
    %v2724 = vunpack.c.h.b16 %v2398
    %v2725 = vunpack.c.l.b16 %v2399
    %v2726 = vunpack.c.h.b16 %v2399
    %v2727 = vunpack.c.l.b16 %v2400
    %v2728 = vunpack.c.h.b16 %v2400
    %v2729 = vunpack.c.l.b16 %v2401
    %v2730 = vunpack.c.h.b16 %v2401
    %v2731 = vunpack.c.l.b16 %v2402
    %v2732 = vunpack.c.h.b16 %v2402
    %v2733 = vunpack.c.l.b16 %v2403
    %v2734 = vunpack.c.h.b16 %v2403
    %v2735 = vunpack.c.l.b16 %v2404
    %v2736 = vunpack.c.h.b16 %v2404
    %v2737 = vunpack.c.l.b16 %v2405
    %v2738 = vunpack.c.h.b16 %v2405
    %v2739 = vunpack.c.l.b16 %v2406
    %v2740 = vunpack.c.h.b16 %v2406
    %v2741 = vunpack.c.l.b16 %v2407
    %v2742 = vunpack.c.h.b16 %v2407
    %v2743 = vunpack.c.l.b16 %v2408
    %v2744 = vunpack.c.h.b16 %v2408
    %v2745 = vunpack.c.l.b16 %v2409
    %v2746 = vunpack.c.h.b16 %v2409
    %v2747 = vunpack.c.l.b16 %v2410
    %v2748 = vunpack.c.h.b16 %v2410
    %v2749 = vunpack.c.l.b16 %v2411
    %v2750 = vunpack.c.h.b16 %v2411
    %v2751 = vunpack.c.l.b16 %v2412
    %v2752 = vunpack.c.h.b16 %v2412
    %v2753 = vunpack.c.l.b16 %v2413
    %v2754 = vunpack.c.h.b16 %v2413
    %v2755 = vunpack.c.l.b16 %v2414
    %v2756 = vunpack.c.h.b16 %v2414
    %v2757 = vunpack.c.l.b16 %v2415
    %v2758 = vunpack.c.h.b16 %v2415
    %v2759 = vunpack.c.l.b16 %v2416
    %v2760 = vunpack.c.h.b16 %v2416
    %v2761 = vunpack.c.l.b16 %v2417
    %v2762 = vunpack.c.h.b16 %v2417
    %v2763 = vunpack.c.l.b16 %v2418
    %v2764 = vunpack.c.h.b16 %v2418
    %v2765 = vunpack.c.l.b16 %v2419
    %v2766 = vunpack.c.h.b16 %v2419
    %v2767 = vunpack.c.l.b16 %v2420
    %v2768 = vunpack.c.h.b16 %v2420
    %v2769 = vunpack.c.l.b16 %v2421
    %v2770 = vunpack.c.h.b16 %v2421
    %v2771 = vunpack.c.l.b16 %v2422
    %v2772 = vunpack.c.h.b16 %v2422
    %v2773 = vunpack.c.l.b16 %v2423
    %v2774 = vunpack.c.h.b16 %v2423
    %v2775 = vunpack.c.l.b16 %v2424
    %v2776 = vunpack.c.h.b16 %v2424
    %v2777 = vunpack.c.l.b16 %v2425
    %v2778 = vunpack.c.h.b16 %v2425
    %v2779 = vunpack.c.l.b16 %v2426
    %v2780 = vunpack.c.h.b16 %v2426
    %v2781 = vunpack.c.l.b16 %v2427
    %v2782 = vunpack.c.h.b16 %v2427
    %v2783 = vunpack.c.l.b16 %v2428
    %v2784 = vunpack.c.h.b16 %v2428
    %v2785 = vunpack.c.l.b16 %v2429
    %v2786 = vunpack.c.h.b16 %v2429
    %v2787 = vunpack.c.l.b16 %v2430
    %v2788 = vunpack.c.h.b16 %v2430
    %v2789 = vunpack.c.l.b16 %v2431
    %v2790 = vunpack.c.h.b16 %v2431
    %v2791 = vunpack.c.l.b16 %v2432
    %v2792 = vunpack.c.h.b16 %v2432
    %v2793 = vunpack.c.l.b16 %v2433
    %v2794 = vunpack.c.h.b16 %v2433
    %v2795 = vunpack.c.l.b16 %v2434
    %v2796 = vunpack.c.h.b16 %v2434
    %v2797 = vunpack.c.l.b16 %v2435
    %v2798 = vunpack.c.h.b16 %v2435
    %v2799 = vunpack.c.l.b16 %v2436
    %v2800 = vunpack.c.h.b16 %v2436
    %v2801 = vunpack.c.l.b16 %v2437
    %v2802 = vunpack.c.h.b16 %v2437
    %v2803 = vunpack.c.l.b16 %v2438
    %v2804 = vunpack.c.h.b16 %v2438
    %v2805 = vunpack.c.l.b16 %v2439
    %v2806 = vunpack.c.h.b16 %v2439
    %v2807 = vunpack.c.l.b16 %v2440
    %v2808 = vunpack.c.h.b16 %v2440
    %v2809 = vunpack.c.l.b16 %v2441
    %v2810 = vunpack.c.h.b16 %v2441
    %v2811 = vunpack.c.l.b16 %v2442
    %v2812 = vunpack.c.h.b16 %v2442
    %v2813 = vunpack.c.l.b16 %v2443
    %v2814 = vunpack.c.h.b16 %v2443
    %v2815 = vunpack.c.l.b16 %v2444
    %v2816 = vunpack.c.h.b16 %v2444
    %v2817 = vunpack.c.l.b16 %v2445
    %v2818 = vunpack.c.h.b16 %v2445
    %v2819 = vunpack.c.l.b16 %v2446
    %v2820 = vunpack.c.h.b16 %v2446
    %v2821 = vunpack.c.l.b16 %v2447
    %v2822 = vunpack.c.h.b16 %v2447
    %v2823 = vunpack.c.l.b16 %v2448
    %v2824 = vunpack.c.h.b16 %v2448
    %v2825 = vunpack.c.l.b16 %v2449
    %v2826 = vunpack.c.h.b16 %v2449
    %v2827 = vunpack.c.l.b16 %v2450
    %v2828 = vunpack.c.h.b16 %v2450
    %v2829 = vunpack.c.l.b16 %v2451
    %v2830 = vunpack.c.h.b16 %v2451
    %v2831 = vunpack.c.l.b16 %v2452
    %v2832 = vunpack.c.h.b16 %v2452
    %v2833 = vunpack.c.l.b16 %v2453
    %v2834 = vunpack.c.h.b16 %v2453
    %v2835 = vunpack.c.l.b16 %v2454
    %v2836 = vunpack.c.h.b16 %v2454
    %v2837 = vunpack.c.l.b16 %v2455
    %v2838 = vunpack.c.h.b16 %v2455
    %v2839 = vunpack.c.l.b16 %v2456
    %v2840 = vunpack.c.h.b16 %v2456
    %v2841 = vunpack.c.l.b16 %v2457
    %v2842 = vunpack.c.h.b16 %v2457
    %v2843 = vunpack.c.l.b16 %v2458
    %v2844 = vunpack.c.h.b16 %v2458
    %v2845 = vunpack.c.l.b16 %v2459
    %v2846 = vunpack.c.h.b16 %v2459
    %v2847 = vunpack.c.l.b16 %v2460
    %v2848 = vunpack.c.h.b16 %v2460
    %v2849 = vunpack.c.l.b16 %v2461
    %v2850 = vunpack.c.h.b16 %v2461
    %v2851 = vunpack.c.l.b16 %v2462
    %v2852 = vunpack.c.h.b16 %v2462
    %v2853 = vunpack.c.l.b16 %v2463
    %v2854 = vunpack.c.h.b16 %v2463
    %v2855 = vunpack.c.l.b16 %v2464
    %v2856 = vunpack.c.h.b16 %v2464
    %v2857 = vunpack.c.l.b16 %v2465
    %v2858 = vunpack.c.h.b16 %v2465
    %v2859 = vunpack.c.l.b16 %v2466
    %v2860 = vunpack.c.h.b16 %v2466
    %v2861 = vunpack.c.l.b16 %v2467
    %v2862 = vunpack.c.h.b16 %v2467
    %v2863 = vunpack.c.l.b16 %v2468
    %v2864 = vunpack.c.h.b16 %v2468
    %v2865 = vunpack.c.l.b16 %v2469
    %v2866 = vunpack.c.h.b16 %v2469
    %v2867 = vunpack.c.l.b16 %v2470
    %v2868 = vunpack.c.h.b16 %v2470
    %v2869 = vunpack.c.l.b16 %v2471
    %v2870 = vunpack.c.h.b16 %v2471
    %v2871 = vunpack.c.l.b16 %v2472
    %v2872 = vunpack.c.h.b16 %v2472
    %v2873 = vunpack.c.l.b16 %v2473
    %v2874 = vunpack.c.h.b16 %v2473
    %v2875 = vunpack.c.l.b16 %v2474
    %v2876 = vunpack.c.h.b16 %v2474
    %v2877 = vunpack.c.l.b16 %v2475
    %v2878 = vunpack.c.h.b16 %v2475
    %v2879 = vunpack.c.l.b16 %v2476
    %v2880 = vunpack.c.h.b16 %v2476
    %v2881 = vunpack.c.l.b16 %v2477
    %v2882 = vunpack.c.h.b16 %v2477
    %v2883 = vunpack.c.l.b16 %v2478
    %v2884 = vunpack.c.h.b16 %v2478
    %v2885 = vunpack.c.l.b16 %v2479
    %v2886 = vunpack.c.h.b16 %v2479
    %v2887 = vunpack.c.l.b16 %v2480
    %v2888 = vunpack.c.h.b16 %v2480
    %v2889 = vunpack.c.l.b16 %v2481
    %v2890 = vunpack.c.h.b16 %v2481
    %v2891 = vunpack.c.l.b16 %v2482
    %v2892 = vunpack.c.h.b16 %v2482
    %v2893 = vunpack.c.l.b16 %v2483
    %v2894 = vunpack.c.h.b16 %v2483
    %v2895 = vunpack.c.l.b16 %v2484
    %v2896 = vunpack.c.h.b16 %v2484
    %v2897 = vunpack.c.l.b16 %v2485
    %v2898 = vunpack.c.h.b16 %v2485
    %v2899 = vunpack.c.l.b16 %v2486
    %v2900 = vunpack.c.h.b16 %v2486
    %v2901 = vunpack.c.l.b16 %v2487
    %v2902 = vunpack.c.h.b16 %v2487
    %v2903 = vunpack.c.l.b16 %v2488
    %v2904 = vunpack.c.h.b16 %v2488
    %v2905 = vunpack.c.l.b16 %v2489
    %v2906 = vunpack.c.h.b16 %v2489
    %v2907 = vunpack.c.l.b16 %v2490
    %v2908 = vunpack.c.h.b16 %v2490
    %v2909 = vunpack.c.l.b16 %v2491
    %v2910 = vunpack.c.h.b16 %v2491
    %v2911 = vunpack.c.l.b16 %v2492
    %v2912 = vunpack.c.h.b16 %v2492
    %v2913 = vunpack.c.l.b16 %v2493
    %v2914 = vunpack.c.h.b16 %v2493
    %v2915 = vunpack.c.l.b16 %v2494
    %v2916 = vunpack.c.h.b16 %v2494
    %v2917 = vunpack.c.l.b16 %v2495
    %v2918 = vunpack.c.h.b16 %v2495
    %v2919 = vunpack.c.l.b16 %v2496
    %v2920 = vunpack.c.h.b16 %v2496
    %v2921 = vunpack.c.l.b16 %v2497
    %v2922 = vunpack.c.h.b16 %v2497
    %v2923 = vunpack.c.l.b16 %v2498
    %v2924 = vunpack.c.h.b16 %v2498
    %v2925 = vunpack.c.l.b16 %v2499
    %v2926 = vunpack.c.h.b16 %v2499
    %v2927 = vunpack.c.l.b16 %v2500
    %v2928 = vunpack.c.h.b16 %v2500
    %v2929 = vunpack.c.l.b16 %v2501
    %v2930 = vunpack.c.h.b16 %v2501
    %v2931 = vunpack.c.l.b16 %v2502
    %v2932 = vunpack.c.h.b16 %v2502
    %v2933 = vunpack.c.l.b16 %v2503
    %v2934 = vunpack.c.h.b16 %v2503
    %v2935 = vunpack.c.l.b16 %v2504
    %v2936 = vunpack.c.h.b16 %v2504
    %v2937 = vunpack.c.l.b16 %v2505
    %v2938 = vunpack.c.h.b16 %v2505
    %v2939 = vunpack.c.l.b16 %v2506
    %v2940 = vunpack.c.h.b16 %v2506
    %v2941 = vunpack.c.l.b16 %v2507
    %v2942 = vunpack.c.h.b16 %v2507
    %v2943 = vunpack.c.l.b16 %v2508
    %v2944 = vunpack.c.h.b16 %v2508
    %v2945 = vunpack.c.l.b16 %v2509
    %v2946 = vunpack.c.h.b16 %v2509
    %v2947 = vunpack.c.l.b16 %v2510
    %v2948 = vunpack.c.h.b16 %v2510
    %v2949 = vpack.c.b16 %v2663, %v2661
    %v2950 = vpack.c.b16 %v2664, %v2662
    %v2951 = vpack.c.b16 %v2667, %v2665
    %v2952 = vpack.c.b16 %v2668, %v2666
    %v2953 = vpack.c.b16 %v2671, %v2669
    %v2954 = vpack.c.b16 %v2672, %v2670
    %v2955 = vpack.c.b16 %v2675, %v2673
    %v2956 = vpack.c.b16 %v2676, %v2674
    %v2957 = vpack.c.b16 %v2679, %v2677
    %v2958 = vpack.c.b16 %v2680, %v2678
    %v2959 = vpack.c.b16 %v2683, %v2681
    %v2960 = vpack.c.b16 %v2684, %v2682
    %v2961 = vpack.c.b16 %v2687, %v2685
    %v2962 = vpack.c.b16 %v2688, %v2686
    %v2963 = vpack.c.b16 %v2691, %v2689
    %v2964 = vpack.c.b16 %v2692, %v2690
    %v2965 = vpack.c.b16 %v2695, %v2693
    %v2966 = vpack.c.b16 %v2696, %v2694
    %v2967 = vpack.c.b16 %v2699, %v2697
    %v2968 = vpack.c.b16 %v2700, %v2698
    %v2969 = vpack.c.b16 %v2703, %v2701
    %v2970 = vpack.c.b16 %v2704, %v2702
    %v2971 = vpack.c.b16 %v2707, %v2705
    %v2972 = vpack.c.b16 %v2708, %v2706
    %v2973 = vpack.c.b16 %v2711, %v2709
    %v2974 = vpack.c.b16 %v2712, %v2710
    %v2975 = vpack.c.b16 %v2715, %v2713
    %v2976 = vpack.c.b16 %v2716, %v2714
    %v2977 = vpack.c.b16 %v2719, %v2717
    %v2978 = vpack.c.b16 %v2720, %v2718
    %v2979 = vpack.c.b16 %v2723, %v2721
    %v2980 = vpack.c.b16 %v2724, %v2722
    %v2981 = vpack.c.b16 %v2727, %v2725
    %v2982 = vpack.c.b16 %v2728, %v2726
    %v2983 = vpack.c.b16 %v2731, %v2729
    %v2984 = vpack.c.b16 %v2732, %v2730
    %v2985 = vpack.c.b16 %v2735, %v2733
    %v2986 = vpack.c.b16 %v2736, %v2734
    %v2987 = vpack.c.b16 %v2739, %v2737
    %v2988 = vpack.c.b16 %v2740, %v2738
    %v2989 = vpack.c.b16 %v2743, %v2741
    %v2990 = vpack.c.b16 %v2744, %v2742
    %v2991 = vpack.c.b16 %v2747, %v2745
    %v2992 = vpack.c.b16 %v2748, %v2746
    %v2993 = vpack.c.b16 %v2751, %v2749
    %v2994 = vpack.c.b16 %v2752, %v2750
    %v2995 = vpack.c.b16 %v2755, %v2753
    %v2996 = vpack.c.b16 %v2756, %v2754
    %v2997 = vpack.c.b16 %v2759, %v2757
    %v2998 = vpack.c.b16 %v2760, %v2758
    %v2999 = vpack.c.b16 %v2763, %v2761
    %v3000 = vpack.c.b16 %v2764, %v2762
    %v3001 = vpack.c.b16 %v2767, %v2765
    %v3002 = vpack.c.b16 %v2768, %v2766
    %v3003 = vpack.c.b16 %v2771, %v2769
    %v3004 = vpack.c.b16 %v2772, %v2770
    %v3005 = vpack.c.b16 %v2775, %v2773
    %v3006 = vpack.c.b16 %v2776, %v2774
    %v3007 = vpack.c.b16 %v2779, %v2777
    %v3008 = vpack.c.b16 %v2780, %v2778
    %v3009 = vpack.c.b16 %v2783, %v2781
    %v3010 = vpack.c.b16 %v2784, %v2782
    %v3011 = vpack.c.b16 %v2787, %v2785
    %v3012 = vpack.c.b16 %v2788, %v2786
    %v3013 = vpack.c.b16 %v2791, %v2789
    %v3014 = vpack.c.b16 %v2792, %v2790
    %v3015 = vpack.c.b16 %v2795, %v2793
    %v3016 = vpack.c.b16 %v2796, %v2794
    %v3017 = vpack.c.b16 %v2799, %v2797
    %v3018 = vpack.c.b16 %v2800, %v2798
    %v3019 = vpack.c.b16 %v2803, %v2801
    %v3020 = vpack.c.b16 %v2804, %v2802
    %v3021 = vpack.c.b16 %v2807, %v2805
    %v3022 = vpack.c.b16 %v2808, %v2806
    %v3023 = vpack.c.b16 %v2811, %v2809
    %v3024 = vpack.c.b16 %v2812, %v2810
    %v3025 = vpack.c.b16 %v2815, %v2813
    %v3026 = vpack.c.b16 %v2816, %v2814
    %v3027 = vpack.c.b16 %v2819, %v2817
    %v3028 = vpack.c.b16 %v2820, %v2818
    %v3029 = vpack.c.b16 %v2823, %v2821
    %v3030 = vpack.c.b16 %v2824, %v2822
    %v3031 = vpack.c.b16 %v2827, %v2825
    %v3032 = vpack.c.b16 %v2828, %v2826
    %v3033 = vpack.c.b16 %v2831, %v2829
    %v3034 = vpack.c.b16 %v2832, %v2830
    %v3035 = vpack.c.b16 %v2835, %v2833
    %v3036 = vpack.c.b16 %v2836, %v2834
    %v3037 = vpack.c.b16 %v2839, %v2837
    %v3038 = vpack.c.b16 %v2840, %v2838
    %v3039 = vpack.c.b16 %v2843, %v2841
    %v3040 = vpack.c.b16 %v2844, %v2842
    %v3041 = vpack.c.b16 %v2847, %v2845
    %v3042 = vpack.c.b16 %v2848, %v2846
    %v3043 = vpack.c.b16 %v2851, %v2849
    %v3044 = vpack.c.b16 %v2852, %v2850
    %v3045 = vpack.c.b16 %v2855, %v2853
    %v3046 = vpack.c.b16 %v2856, %v2854
    %v3047 = vpack.c.b16 %v2859, %v2857
    %v3048 = vpack.c.b16 %v2860, %v2858
    %v3049 = vpack.c.b16 %v2863, %v2861
    %v3050 = vpack.c.b16 %v2864, %v2862
    %v3051 = vpack.c.b16 %v2867, %v2865
    %v3052 = vpack.c.b16 %v2868, %v2866
    %v3053 = vpack.c.b16 %v2871, %v2869
    %v3054 = vpack.c.b16 %v2872, %v2870
    %v3055 = vpack.c.b16 %v2875, %v2873
    %v3056 = vpack.c.b16 %v2876, %v2874
    %v3057 = vpack.c.b16 %v2879, %v2877
    %v3058 = vpack.c.b16 %v2880, %v2878
    %v3059 = vpack.c.b16 %v2883, %v2881
    %v3060 = vpack.c.b16 %v2884, %v2882
    %v3061 = vpack.c.b16 %v2887, %v2885
    %v3062 = vpack.c.b16 %v2888, %v2886
    %v3063 = vpack.c.b16 %v2891, %v2889
    %v3064 = vpack.c.b16 %v2892, %v2890
    %v3065 = vpack.c.b16 %v2895, %v2893
    %v3066 = vpack.c.b16 %v2896, %v2894
    %v3067 = vpack.c.b16 %v2899, %v2897
    %v3068 = vpack.c.b16 %v2900, %v2898
    %v3069 = vpack.c.b16 %v2903, %v2901
    %v3070 = vpack.c.b16 %v2904, %v2902
    %v3071 = vpack.c.b16 %v2907, %v2905
    %v3072 = vpack.c.b16 %v2908, %v2906
    %v3073 = vpack.c.b16 %v2911, %v2909
    %v3074 = vpack.c.b16 %v2912, %v2910
    %v3075 = vpack.c.b16 %v2915, %v2913
    %v3076 = vpack.c.b16 %v2916, %v2914
    %v3077 = vpack.c.b16 %v2919, %v2917
    %v3078 = vpack.c.b16 %v2920, %v2918
    %v3079 = vpack.c.b16 %v2923, %v2921
    %v3080 = vpack.c.b16 %v2924, %v2922
    %v3081 = vpack.c.b16 %v2927, %v2925
    %v3082 = vpack.c.b16 %v2928, %v2926
    %v3083 = vpack.c.b16 %v2931, %v2929
    %v3084 = vpack.c.b16 %v2932, %v2930
    %v3085 = vpack.c.b16 %v2935, %v2933
    %v3086 = vpack.c.b16 %v2936, %v2934
    %v3087 = vpack.c.b16 %v2939, %v2937
    %v3088 = vpack.c.b16 %v2940, %v2938
    %v3089 = vpack.c.b16 %v2943, %v2941
    %v3090 = vpack.c.b16 %v2944, %v2942
    %v3091 = vpack.c.b16 %v2947, %v2945
    %v3092 = vpack.c.b16 %v2948, %v2946
    %3237 = vmatpush.bf16.msra.mxu0 %v2963
    %3238 = vmatpush.bf16.msra.mxu0 %v2961
    %3239 = vmatpush.bf16.msra.mxu0 %v2959
    %3240 = vmatpush.bf16.msra.mxu0 %v2957
    %3241 = vmatpush.bf16.msra.mxu0 %v2955
    %3242 = vmatpush.bf16.msra.mxu0 %v2953
    %3243 = vmatpush.bf16.msra.mxu0 %v2951
    %3244 = vmatpush.bf16.msra.mxu0 %v2949
    %3245 = vmatmul.bf16.gmra.mxu0 %v2358
    %v3246 = vpop.f32.mrf.mxu0
    %v3247 = vadd.f32 %v2513, %v3246
    %v3248 = vpop.f32.mrf.mxu0
    %3249 = vdwg.mxu0
    %3250 = vmatpush.bf16.msra.mxu0 %v2979
    %3251 = vmatpush.bf16.msra.mxu0 %v2977
    %3252 = vmatpush.bf16.msra.mxu0 %v2975
    %3253 = vmatpush.bf16.msra.mxu0 %v2973
    %3254 = vmatpush.bf16.msra.mxu0 %v2971
    %3255 = vmatpush.bf16.msra.mxu0 %v2969
    %3256 = vmatpush.bf16.msra.mxu0 %v2967
    %3257 = vmatpush.bf16.msra.mxu0 %v2965
    %3258 = vmatmul.bf16.gmra.mxu0 %v2359
    %v3259 = vpop.f32.mrf.mxu0
    %v3260 = vadd.f32 %v3247, %v3259
    %v3261 = vpop.f32.mrf.mxu0
    %3262 = vdwg.mxu0
    %3263 = vmatpush.bf16.msra.mxu0 %v2995
    %3264 = vmatpush.bf16.msra.mxu0 %v2993
    %3265 = vmatpush.bf16.msra.mxu0 %v2991
    %3266 = vmatpush.bf16.msra.mxu0 %v2989
    %3267 = vmatpush.bf16.msra.mxu0 %v2987
    %3268 = vmatpush.bf16.msra.mxu0 %v2985
    %3269 = vmatpush.bf16.msra.mxu0 %v2983
    %3270 = vmatpush.bf16.msra.mxu0 %v2981
    %3271 = vmatmul.bf16.gmra.mxu0 %v2360
    %v3272 = vpop.f32.mrf.mxu0
    %v3273 = vadd.f32 %v3260, %v3272
    %v3274 = vpop.f32.mrf.mxu0
    %3275 = vdwg.mxu0
    %3276 = vmatpush.bf16.msra.mxu0 %v3011
    %3277 = vmatpush.bf16.msra.mxu0 %v3009
    %3278 = vmatpush.bf16.msra.mxu0 %v3007
    %3279 = vmatpush.bf16.msra.mxu0 %v3005
    %3280 = vmatpush.bf16.msra.mxu0 %v3003
    %3281 = vmatpush.bf16.msra.mxu0 %v3001
    %3282 = vmatpush.bf16.msra.mxu0 %v2999
    %3283 = vmatpush.bf16.msra.mxu0 %v2997
    %3284 = vmatmul.bf16.gmra.mxu0 %v2361
    %v3285 = vpop.f32.mrf.mxu0
    %v3286 = vadd.f32 %v3273, %v3285
    %v3287 = vpop.f32.mrf.mxu0
    %3288 = vdwg.mxu0
    %3289 = vmatpush.bf16.msra.mxu0 %v3027
    %3290 = vmatpush.bf16.msra.mxu0 %v3025
    %3291 = vmatpush.bf16.msra.mxu0 %v3023
    %3292 = vmatpush.bf16.msra.mxu0 %v3021
    %3293 = vmatpush.bf16.msra.mxu0 %v3019
    %3294 = vmatpush.bf16.msra.mxu0 %v3017
    %3295 = vmatpush.bf16.msra.mxu0 %v3015
    %3296 = vmatpush.bf16.msra.mxu0 %v3013
    %3297 = vmatmul.bf16.gmra.mxu0 %v2362
    %v3298 = vpop.f32.mrf.mxu0
    %v3299 = vadd.f32 %v3286, %v3298
    %v3300 = vpop.f32.mrf.mxu0
    %3301 = vdwg.mxu0
    %3302 = vmatpush.bf16.msra.mxu0 %v3043
    %3303 = vmatpush.bf16.msra.mxu0 %v3041
    %3304 = vmatpush.bf16.msra.mxu0 %v3039
    %3305 = vmatpush.bf16.msra.mxu0 %v3037
    %3306 = vmatpush.bf16.msra.mxu0 %v3035
    %3307 = vmatpush.bf16.msra.mxu0 %v3033
    %3308 = vmatpush.bf16.msra.mxu0 %v3031
    %3309 = vmatpush.bf16.msra.mxu0 %v3029
    %3310 = vmatmul.bf16.gmra.mxu0 %v2363
    %v3311 = vpop.f32.mrf.mxu0
    %v3312 = vadd.f32 %v3299, %v3311
    %v3313 = vpop.f32.mrf.mxu0
    %3314 = vdwg.mxu0
    %3315 = vmatpush.bf16.msra.mxu0 %v3059
    %3316 = vmatpush.bf16.msra.mxu0 %v3057
    %3317 = vmatpush.bf16.msra.mxu0 %v3055
    %3318 = vmatpush.bf16.msra.mxu0 %v3053
    %3319 = vmatpush.bf16.msra.mxu0 %v3051
    %3320 = vmatpush.bf16.msra.mxu0 %v3049
    %3321 = vmatpush.bf16.msra.mxu0 %v3047
    %3322 = vmatpush.bf16.msra.mxu0 %v3045
    %3323 = vmatmul.bf16.gmra.mxu0 %v2364
    %v3324 = vpop.f32.mrf.mxu0
    %v3325 = vadd.f32 %v3312, %v3324
    %v3326 = vpop.f32.mrf.mxu0
    %3327 = vdwg.mxu0
    %3328 = vmatpush.bf16.msra.mxu0 %v3075
    %3329 = vmatpush.bf16.msra.mxu0 %v3073
    %3330 = vmatpush.bf16.msra.mxu0 %v3071
    %3331 = vmatpush.bf16.msra.mxu0 %v3069
    %3332 = vmatpush.bf16.msra.mxu0 %v3067
    %3333 = vmatpush.bf16.msra.mxu0 %v3065
    %3334 = vmatpush.bf16.msra.mxu0 %v3063
    %3335 = vmatpush.bf16.msra.mxu0 %v3061
    %3336 = vmatmul.bf16.gmra.mxu0 %v2365
    %v3337 = vpop.f32.mrf.mxu0
    %v3338 = vadd.f32 %v3325, %v3337
    %v3339 = vpop.f32.mrf.mxu0
    %3340 = vdwg.mxu0
    %3341 = vmatpush.bf16.msra.mxu0 %v3091
    %3342 = vmatpush.bf16.msra.mxu0 %v3089
    %3343 = vmatpush.bf16.msra.mxu0 %v3087
    %3344 = vmatpush.bf16.msra.mxu0 %v3085
    %3345 = vmatpush.bf16.msra.mxu0 %v3083
    %3346 = vmatpush.bf16.msra.mxu0 %v3081
    %3347 = vmatpush.bf16.msra.mxu0 %v3079
    %3348 = vmatpush.bf16.msra.mxu0 %v3077
    %3349 = vmatmul.bf16.gmra.mxu0 %v2366
    %v3350 = vpop.f32.mrf.mxu0
    %v3351 = vadd.f32 %v3338, %v3350
    %v3352 = vpop.f32.mrf.mxu0
    %3353 = vdwg.mxu0
    %3354 = vmatpush.bf16.msra.mxu0 %v2964
    %3355 = vmatpush.bf16.msra.mxu0 %v2962
    %3356 = vmatpush.bf16.msra.mxu0 %v2960
    %3357 = vmatpush.bf16.msra.mxu0 %v2958
    %3358 = vmatpush.bf16.msra.mxu0 %v2956
    %3359 = vmatpush.bf16.msra.mxu0 %v2954
    %3360 = vmatpush.bf16.msra.mxu0 %v2952
    %3361 = vmatpush.bf16.msra.mxu0 %v2950
    %3362 = vmatmul.bf16.gmra.mxu0 %v2358
    %v3363 = vpop.f32.mrf.mxu0
    %v3364 = vadd.f32 %v2514, %v3363
    %v3365 = vpop.f32.mrf.mxu0
    %3366 = vdwg.mxu0
    %3367 = vmatpush.bf16.msra.mxu0 %v2980
    %3368 = vmatpush.bf16.msra.mxu0 %v2978
    %3369 = vmatpush.bf16.msra.mxu0 %v2976
    %3370 = vmatpush.bf16.msra.mxu0 %v2974
    %3371 = vmatpush.bf16.msra.mxu0 %v2972
    %3372 = vmatpush.bf16.msra.mxu0 %v2970
    %3373 = vmatpush.bf16.msra.mxu0 %v2968
    %3374 = vmatpush.bf16.msra.mxu0 %v2966
    %3375 = vmatmul.bf16.gmra.mxu0 %v2359
    %v3376 = vpop.f32.mrf.mxu0
    %v3377 = vadd.f32 %v3364, %v3376
    %v3378 = vpop.f32.mrf.mxu0
    %3379 = vdwg.mxu0
    %3380 = vmatpush.bf16.msra.mxu0 %v2996
    %3381 = vmatpush.bf16.msra.mxu0 %v2994
    %3382 = vmatpush.bf16.msra.mxu0 %v2992
    %3383 = vmatpush.bf16.msra.mxu0 %v2990
    %3384 = vmatpush.bf16.msra.mxu0 %v2988
    %3385 = vmatpush.bf16.msra.mxu0 %v2986
    %3386 = vmatpush.bf16.msra.mxu0 %v2984
    %3387 = vmatpush.bf16.msra.mxu0 %v2982
    %3388 = vmatmul.bf16.gmra.mxu0 %v2360
    %v3389 = vpop.f32.mrf.mxu0
    %v3390 = vadd.f32 %v3377, %v3389
    %v3391 = vpop.f32.mrf.mxu0
    %3392 = vdwg.mxu0
    %3393 = vmatpush.bf16.msra.mxu0 %v3012
    %3394 = vmatpush.bf16.msra.mxu0 %v3010
    %3395 = vmatpush.bf16.msra.mxu0 %v3008
    %3396 = vmatpush.bf16.msra.mxu0 %v3006
    %3397 = vmatpush.bf16.msra.mxu0 %v3004
    %3398 = vmatpush.bf16.msra.mxu0 %v3002
    %3399 = vmatpush.bf16.msra.mxu0 %v3000
    %3400 = vmatpush.bf16.msra.mxu0 %v2998
    %3401 = vmatmul.bf16.gmra.mxu0 %v2361
    %v3402 = vpop.f32.mrf.mxu0
    %v3403 = vadd.f32 %v3390, %v3402
    %v3404 = vpop.f32.mrf.mxu0
    %3405 = vdwg.mxu0
    %3406 = vmatpush.bf16.msra.mxu0 %v3028
    %3407 = vmatpush.bf16.msra.mxu0 %v3026
    %3408 = vmatpush.bf16.msra.mxu0 %v3024
    %3409 = vmatpush.bf16.msra.mxu0 %v3022
    %3410 = vmatpush.bf16.msra.mxu0 %v3020
    %3411 = vmatpush.bf16.msra.mxu0 %v3018
    %3412 = vmatpush.bf16.msra.mxu0 %v3016
    %3413 = vmatpush.bf16.msra.mxu0 %v3014
    %3414 = vmatmul.bf16.gmra.mxu0 %v2362
    %v3415 = vpop.f32.mrf.mxu0
    %v3416 = vadd.f32 %v3403, %v3415
    %v3417 = vpop.f32.mrf.mxu0
    %3418 = vdwg.mxu0
    %3419 = vmatpush.bf16.msra.mxu0 %v3044
    %3420 = vmatpush.bf16.msra.mxu0 %v3042
    %3421 = vmatpush.bf16.msra.mxu0 %v3040
    %3422 = vmatpush.bf16.msra.mxu0 %v3038
    %3423 = vmatpush.bf16.msra.mxu0 %v3036
    %3424 = vmatpush.bf16.msra.mxu0 %v3034
    %3425 = vmatpush.bf16.msra.mxu0 %v3032
    %3426 = vmatpush.bf16.msra.mxu0 %v3030
    %3427 = vmatmul.bf16.gmra.mxu0 %v2363
    %v3428 = vpop.f32.mrf.mxu0
    %v3429 = vadd.f32 %v3416, %v3428
    %v3430 = vpop.f32.mrf.mxu0
    %3431 = vdwg.mxu0
    %3432 = vmatpush.bf16.msra.mxu0 %v3060
    %3433 = vmatpush.bf16.msra.mxu0 %v3058
    %3434 = vmatpush.bf16.msra.mxu0 %v3056
    %3435 = vmatpush.bf16.msra.mxu0 %v3054
    %3436 = vmatpush.bf16.msra.mxu0 %v3052
    %3437 = vmatpush.bf16.msra.mxu0 %v3050
    %3438 = vmatpush.bf16.msra.mxu0 %v3048
    %3439 = vmatpush.bf16.msra.mxu0 %v3046
    %3440 = vmatmul.bf16.gmra.mxu0 %v2364
    %v3441 = vpop.f32.mrf.mxu0
    %v3442 = vadd.f32 %v3429, %v3441
    %v3443 = vpop.f32.mrf.mxu0
    %3444 = vdwg.mxu0
    %3445 = vmatpush.bf16.msra.mxu0 %v3076
    %3446 = vmatpush.bf16.msra.mxu0 %v3074
    %3447 = vmatpush.bf16.msra.mxu0 %v3072
    %3448 = vmatpush.bf16.msra.mxu0 %v3070
    %3449 = vmatpush.bf16.msra.mxu0 %v3068
    %3450 = vmatpush.bf16.msra.mxu0 %v3066
    %3451 = vmatpush.bf16.msra.mxu0 %v3064
    %3452 = vmatpush.bf16.msra.mxu0 %v3062
    %3453 = vmatmul.bf16.gmra.mxu0 %v2365
    %v3454 = vpop.f32.mrf.mxu0
    %v3455 = vadd.f32 %v3442, %v3454
    %v3456 = vpop.f32.mrf.mxu0
    %3457 = vdwg.mxu0
    %3458 = vmatpush.bf16.msra.mxu0 %v3092
    %3459 = vmatpush.bf16.msra.mxu0 %v3090
    %3460 = vmatpush.bf16.msra.mxu0 %v3088
    %3461 = vmatpush.bf16.msra.mxu0 %v3086
    %3462 = vmatpush.bf16.msra.mxu0 %v3084
    %3463 = vmatpush.bf16.msra.mxu0 %v3082
    %3464 = vmatpush.bf16.msra.mxu0 %v3080
    %3465 = vmatpush.bf16.msra.mxu0 %v3078
    %3466 = vmatmul.bf16.gmra.mxu0 %v2366
    %v3467 = vpop.f32.mrf.mxu0
    %v3468 = vadd.f32 %v3455, %v3467
    %v3469 = vpop.f32.mrf.mxu0
    %3470 = vdwg.mxu0
    %v3471 = vmax.f32 %v3351, 0.0
    %v3472 = vmax.f32 %v3468, 0.0
    %v3473 = vpack.c.bf16 %v3471, %v3471
    %v3474 = vpack.c.bf16 %v3472, %v3472
    %v3475 = vld [vmem:[%s9] sm:$0xf]
    %v3476 = vld [vmem:[%s9 + $0x4] sm:$0xf]
    %v3477 = vld [vmem:[%s9 + $0x8] sm:$0xf]
    %v3478 = vld [vmem:[%s9 + $0xc] sm:$0xf]
    %v3479 = vld [vmem:[%s9 + $0x10] sm:$0xf]
    %v3480 = vld [vmem:[%s9 + $0x14] sm:$0xf]
    %v3481 = vld [vmem:[%s9 + $0x18] sm:$0xf]
    %v3482 = vld [vmem:[%s9 + $0x1c] sm:$0xf]
    %v3483 = vld [vmem:[%s9 + $0x20] sm:$0xf]
    %v3484 = vld [vmem:[%s9 + $0x24] sm:$0xf]
    %v3485 = vld [vmem:[%s9 + $0x28] sm:$0xf]
    %v3486 = vld [vmem:[%s9 + $0x2c] sm:$0xf]
    %v3487 = vld [vmem:[%s9 + $0x30] sm:$0xf]
    %v3488 = vld [vmem:[%s9 + $0x34] sm:$0xf]
    %v3489 = vld [vmem:[%s9 + $0x38] sm:$0xf]
    %v3490 = vld [vmem:[%s9 + $0x3c] sm:$0xf]
    %v3491 = vld [vmem:[%s9 + $0x40] sm:$0xf]
    %v3492 = vld [vmem:[%s9 + $0x44] sm:$0xf]
    %v3493 = vld [vmem:[%s9 + $0x48] sm:$0xf]
    %v3494 = vld [vmem:[%s9 + $0x4c] sm:$0xf]
    %v3495 = vld [vmem:[%s9 + $0x50] sm:$0xf]
    %v3496 = vld [vmem:[%s9 + $0x54] sm:$0xf]
    %v3497 = vld [vmem:[%s9 + $0x58] sm:$0xf]
    %v3498 = vld [vmem:[%s9 + $0x5c] sm:$0xf]
    %v3499 = vld [vmem:[%s9 + $0x60] sm:$0xf]
    %v3500 = vld [vmem:[%s9 + $0x64] sm:$0xf]
    %v3501 = vld [vmem:[%s9 + $0x68] sm:$0xf]
    %v3502 = vld [vmem:[%s9 + $0x6c] sm:$0xf]
    %v3503 = vld [vmem:[%s9 + $0x70] sm:$0xf]
    %v3504 = vld [vmem:[%s9 + $0x74] sm:$0xf]
    %v3505 = vld [vmem:[%s9 + $0x78] sm:$0xf]
    %v3506 = vld [vmem:[%s9 + $0x7c] sm:$0xf]
    %v3507 = vld [vmem:[#allocation9] sm:$0x1]
    %v3509 = vperm.slane %v3507, 0
    %v3543 = vunpack.c.l.b16 %v3475
    %v3544 = vunpack.c.l.b16 %v3476
    %v3545 = vunpack.c.l.b16 %v3477
    %v3546 = vunpack.c.l.b16 %v3478
    %v3547 = vunpack.c.l.b16 %v3479
    %v3548 = vunpack.c.l.b16 %v3480
    %v3549 = vunpack.c.l.b16 %v3481
    %v3550 = vunpack.c.l.b16 %v3482
    %v3551 = vunpack.c.l.b16 %v3483
    %v3552 = vunpack.c.l.b16 %v3484
    %v3553 = vunpack.c.l.b16 %v3485
    %v3554 = vunpack.c.l.b16 %v3486
    %v3555 = vunpack.c.l.b16 %v3487
    %v3556 = vunpack.c.l.b16 %v3488
    %v3557 = vunpack.c.l.b16 %v3489
    %v3558 = vunpack.c.l.b16 %v3490
    %v3559 = vunpack.c.l.b16 %v3491
    %v3560 = vunpack.c.l.b16 %v3492
    %v3561 = vunpack.c.l.b16 %v3493
    %v3562 = vunpack.c.l.b16 %v3494
    %v3563 = vunpack.c.l.b16 %v3495
    %v3564 = vunpack.c.l.b16 %v3496
    %v3565 = vunpack.c.l.b16 %v3497
    %v3566 = vunpack.c.l.b16 %v3498
    %v3567 = vunpack.c.l.b16 %v3499
    %v3568 = vunpack.c.l.b16 %v3500
    %v3569 = vunpack.c.l.b16 %v3501
    %v3570 = vunpack.c.l.b16 %v3502
    %v3571 = vunpack.c.l.b16 %v3503
    %v3572 = vunpack.c.l.b16 %v3504
    %v3573 = vunpack.c.l.b16 %v3505
    %v3574 = vunpack.c.l.b16 %v3506
    %v3575 = vpack.c.b16 %v3544, %v3543
    %v3576 = vpack.c.b16 %v3546, %v3545
    %v3577 = vpack.c.b16 %v3548, %v3547
    %v3578 = vpack.c.b16 %v3550, %v3549
    %v3579 = vpack.c.b16 %v3552, %v3551
    %v3580 = vpack.c.b16 %v3554, %v3553
    %v3581 = vpack.c.b16 %v3556, %v3555
    %v3582 = vpack.c.b16 %v3558, %v3557
    %v3583 = vpack.c.b16 %v3560, %v3559
    %v3584 = vpack.c.b16 %v3562, %v3561
    %v3585 = vpack.c.b16 %v3564, %v3563
    %v3586 = vpack.c.b16 %v3566, %v3565
    %v3587 = vpack.c.b16 %v3568, %v3567
    %v3588 = vpack.c.b16 %v3570, %v3569
    %v3589 = vpack.c.b16 %v3572, %v3571
    %v3590 = vpack.c.b16 %v3574, %v3573
    %3607 = vmatpush.bf16.msra.mxu0 %v3582
    %3608 = vmatpush.bf16.msra.mxu0 %v3581
    %3609 = vmatpush.bf16.msra.mxu0 %v3580
    %3610 = vmatpush.bf16.msra.mxu0 %v3579
    %3611 = vmatpush.bf16.msra.mxu0 %v3578
    %3612 = vmatpush.bf16.msra.mxu0 %v3577
    %3613 = vmatpush.bf16.msra.mxu0 %v3576
    %3614 = vmatpush.bf16.msra.mxu0 %v3575
    %3615 = vmatmul.bf16.gmra.mxu0 %v3473
    %v3616 = vpop.f32.mrf.mxu0
    %v3617 = vadd.f32 %v3509, %v3616
    %v3618 = vpop.f32.mrf.mxu0
    %3619 = vdwg.mxu0
    %3620 = vmatpush.bf16.msra.mxu0 %v3590
    %3621 = vmatpush.bf16.msra.mxu0 %v3589
    %3622 = vmatpush.bf16.msra.mxu0 %v3588
    %3623 = vmatpush.bf16.msra.mxu0 %v3587
    %3624 = vmatpush.bf16.msra.mxu0 %v3586
    %3625 = vmatpush.bf16.msra.mxu0 %v3585
    %3626 = vmatpush.bf16.msra.mxu0 %v3584
    %3627 = vmatpush.bf16.msra.mxu0 %v3583
    %3628 = vmatmul.bf16.gmra.mxu0 %v3474
    %v3629 = vpop.f32.mrf.mxu0
    %v3630 = vadd.f32 %v3617, %v3629
    %v3631 = vpop.f32.mrf.mxu0
    %3632 = vdwg.mxu0
    %v3633 = vmax.f32 %v3630, 0.0
    %v3634 = vld [vmem:[%s11] sm:$0xff]
    %v3635 = vld [vmem:[%s11 + $0x8] sm:$0xff]
    %v3636 = vld [vmem:[%s11 + $0x10] sm:$0xff]
    %v3637 = vld [vmem:[%s11 + $0x18] sm:$0xff]
    %v3638 = vld [vmem:[%s11 + $0x20] sm:$0xff]
    %v3639 = vld [vmem:[%s11 + $0x28] sm:$0xff]
    %v3640 = vld [vmem:[%s11 + $0x30] sm:$0xff]
    %v3641 = vld [vmem:[%s11 + $0x38] sm:$0xff]
    %v3642 = vld [vmem:[#allocation11] sm:$0x1]
    %v3644 = vperm.slane %v3642, 0
    %v3647 = vsel %vm1690, %v3633, 0
    %3649 = vmatpush.msra.mxu0 0.0
    %3650 = vmatpush.msra.mxu0 0.0
    %3651 = vmatpush.msra.mxu0 0.0
    %3652 = vmatpush.msra.mxu0 0.0
    %3653 = vmatpush.msra.mxu0 0.0
    %3654 = vmatpush.msra.mxu0 0.0
    %3655 = vmatpush.msra.mxu0 0.0
    %3656 = vmatpush.msra.mxu0 0.0
    %3657 = vmatpush.msra.mxu0 %v3641
    %3658 = vmatpush.msra.mxu0 %v3640
    %3659 = vmatpush.msra.mxu0 %v3639
    %3660 = vmatpush.msra.mxu0 %v3638
    %3661 = vmatpush.msra.mxu0 %v3637
    %3662 = vmatpush.msra.mxu0 %v3636
    %3663 = vmatpush.msra.mxu0 %v3635
    %3664 = vmatpush.msra.mxu0 %v3634
    %3665 = vmatmul.f32.gmra.mxu0 %v3647
    %v3666 = vpop.f32.mrf.mxu0
    %v3667 = vadd.f32 %v3644, %v3666
    %3668 = vdwg.mxu0
    %vm3669 = vcmask 11264
    %3670 = vst.msk [vmem:[%s13] sm:$0xf] %vm3669, %v3667
    // Predicated region
    $region89: #{net_forward.1} parent=1 // pred_check
      _
    $region90: #{net_forward.1} parent=1 // pred_check_branch
      %3672 = sbr.rel (0) target = $region92
    $region91: #{net_forward.1} parent=1 // pred_region
      _
    $region92: #{net_forward.1} parent=1 // pred_fallthru
      _
    // Predicated region
    $region93: #{net_forward.1} parent=1 // pred_check
      _
    $region94: #{net_forward.1} parent=1 // pred_check_branch
      %3674 = sbr.rel (0) target = $region96
    $region95: #{net_forward.1} parent=1 // pred_region
      _
    $region96: #{net_forward.1} parent=1 // pred_fallthru
      _
    %3675 = vsyncpa [#allocation5], 1
    %3676 = vsyncpa [#allocation7], 1
    %3677 = vsyncpa [#allocation10], 1
  %3678 = vsyncmov [#allocation3]
  %s3679 = vpop.sfrf %3678
  %p3680 = scmp.eq.s32.totalorder %s3679, 0
  %p3681 = pneg %p3680
  %3683 = shalt.err (%p3681)

</llo_original>
